<compile_context>
chip_gen: v7x
topology: tpu7x:2x2x1
jax: 0.10.0
libtpu: 0.0.40
codegen_flags: <defaults>
</compile_context>

<pallas_src>
import functools
import math

import jax
import jax.numpy as jnp
from jax.experimental import pallas as pl
from jax.experimental.pallas import tpu as pltpu

LANE = 128
EXPANSION = 4


def _round_up(x, m):
    return ((x + m - 1) // m) * m


@functools.lru_cache(maxsize=None)
def _vmem_limit_bytes():
    """Generation-aware VMEM budget: 3/4 of physical per-core capacity."""
    cap = None
    try:
        info = pltpu.get_tpu_info()
        cap = int(getattr(info, "vmem_capacity_bytes", 0)) or None
    except Exception:
        cap = None
    if cap is None:
        kind = ""
        try:
            kind = jax.devices()[0].device_kind.lower()
        except Exception:
            pass
        # v7x has 64 MiB/TC; v5e/v6e have 128 MiB.
        cap = 64 * (1 << 20) if "v7" in kind else 128 * (1 << 20)
    cap = max(32 * (1 << 20), min(cap, 128 * (1 << 20)))
    return (cap * 3) // 4


def _cparams(*dim_sems):
    return pltpu.CompilerParams(dimension_semantics=tuple(dim_sems),
                                vmem_limit_bytes=_vmem_limit_bytes())


# ---------------------------------------------------------------------------
# Pallas kernels
# ---------------------------------------------------------------------------
def _matmul_bn_kernel(*refs, relu, has_residual):
    """(TM, K) @ (K, C) on the MXU, fused folded-BN affine (+ residual) + ReLU."""
    if has_residual:
        x_ref, w_ref, scale_ref, bias_ref, res_ref, o_ref = refs
    else:
        x_ref, w_ref, scale_ref, bias_ref, o_ref = refs
        res_ref = None
    acc = jnp.dot(x_ref[...], w_ref[...], preferred_element_type=jnp.float32)
    acc = acc * scale_ref[...] + bias_ref[...]
    if res_ref is not None:
        acc = acc + res_ref[...].astype(jnp.float32)
    if relu:
        acc = jnp.maximum(acc, 0.0)
    o_ref[...] = acc.astype(o_ref.dtype)


def _conv3x3_kernel(*refs, oh, ow, stride):
    """3x3 conv (pad=1) + folded BN + ReLU for one image / one Cout tile.

    The dj (column) taps are folded into the contraction axis: 3 matmuls with
    K = 3*cin, each fed by one row-band load.  For stride==2 the input arrives as
    four row/column phase planes, so only strided output positions are computed.
    """
    if stride == 1:
        x_ref, w_ref, scale_ref, bias_ref, o_ref = refs
    else:
        x00, x01, x10, x11, w_ref, scale_ref, bias_ref, o_ref = refs
        phase = ((x00, x01), (x10, x11))
    cin = refs[0].shape[-1]
    ct = o_ref.shape[-1]
    acc = jnp.zeros((oh * ow, ct), jnp.float32)
    for di in range(3):
        if stride == 1:
            band = x_ref[0, pl.ds(di, oh), :, :]                  # (oh, W+2, cin)
            parts = [band[:, dj:dj + ow, :] for dj in range(3)]
        else:
            r0 = di // 2
            prow = phase[di % 2]
            b_even = prow[0][0, pl.ds(r0, oh), :, :]              # (oh, ow+1, cin)
            b_odd = prow[1][0, pl.ds(r0, oh), :, :]
            # dj = 0, 1, 2 -> (even cols, off 0), (odd cols, off 0), (even cols, off 1)
            parts = [b_even[:, 0:ow, :], b_odd[:, 0:ow, :], b_even[:, 1:ow + 1, :]]
        patch = jnp.concatenate(parts, axis=-1).reshape(oh * ow, 3 * cin)
        acc = acc + jnp.dot(patch, w_ref[di], preferred_element_type=jnp.float32)
    acc = acc * scale_ref[...] + bias_ref[...]
    acc = jnp.maximum(acc, 0.0)
    o_ref[...] = acc.reshape(o_ref.shape).astype(o_ref.dtype)


# ---------------------------------------------------------------------------
# Pallas wrappers
# ---------------------------------------------------------------------------
def _pick_tile_m(m):
    # Prefer a TM that divides M exactly (no row padding) and leaves >= 2 grid
    # steps (dual-TC on v7x); cap scales with the VMEM budget.
    cap = 1024 if _vmem_limit_bytes() >= 80 * (1 << 20) else 512
    for tm in (1024, 512, 256, 128, 64, 32, 16, 8):
        if tm <= cap and m % tm == 0 and m // tm >= 2:
            return tm
    if m <= cap:
        return m                        # single full-extent tile, no padding
    for tm in (512, 256, 128, 64, 32, 16, 8):
        if m >= 2 * tm:
            return tm                   # padded fallback
    return max(8, _round_up(m, 8))


def _matmul_bn(x, w, scale, bias, *, relu, residual=None):
    """optional_relu((x @ w) * scale + bias [+ residual]); bf16 in, f32 accumulate."""
    m, k = x.shape
    _, c = w.shape
    tm = _pick_tile_m(m)
    mp = _round_up(m, tm)
    if mp != m:
        x = jnp.pad(x, ((0, mp - m), (0, 0)))
        if residual is not None:
            residual = jnp.pad(residual, ((0, mp - m), (0, 0)))

    in_specs = [
        pl.BlockSpec((tm, k), lambda i: (i, 0)),
        pl.BlockSpec((k, c), lambda i: (0, 0)),   # weights stay VMEM-resident
        pl.BlockSpec((1, c), lambda i: (0, 0)),
        pl.BlockSpec((1, c), lambda i: (0, 0)),
    ]
    args = [x.astype(jnp.bfloat16), w.astype(jnp.bfloat16),
            scale.astype(jnp.float32), bias.astype(jnp.float32)]
    if residual is not None:
        in_specs.append(pl.BlockSpec((tm, c), lambda i: (i, 0)))
        args.append(residual.astype(jnp.bfloat16))

    flops = 2 * mp * k * c
    bytes_accessed = (mp * k * 2 + k * c * 2 + mp * c * 2 + 2 * c * 4
                      + (mp * c * 2 if residual is not None else 0))

    out = pl.pallas_call(
        functools.partial(_matmul_bn_kernel, relu=relu,
                          has_residual=residual is not None),
        out_shape=jax.ShapeDtypeStruct((mp, c), jnp.bfloat16),
        grid=(mp // tm,),
        in_specs=in_specs,
        out_specs=pl.BlockSpec((tm, c), lambda i: (i, 0)),
        compiler_params=_cparams("parallel"),
        cost_estimate=pl.CostEstimate(flops=flops, transcendentals=0,
                                      bytes_accessed=bytes_accessed),
    )(*args)
    return out[:m] if mp != m else out


def conv1x1_bn(x_nhwc, w_mat, scale, bias, *, relu, residual=None):
    n, h, w, k = x_nhwc.shape
    _, c = w_mat.shape
    xf = x_nhwc.reshape(n * h * w, k)
    rf = residual.reshape(n * h * w, c) if residual is not None else None
    out = _matmul_bn(xf, w_mat, scale, bias, relu=relu, residual=rf)
    return out.reshape(n, h, w, c)


def conv3x3_bn_relu(x_nhwc, w_taps, scale, bias, *, stride):
    n, h, w, cin = x_nhwc.shape
    cout = w_taps.shape[-1]
    if stride not in (1, 2):
        # TODO(synk): ResNet Bottleneck only uses stride 1 or 2.
        raise NotImplementedError("conv3x3_bn_relu supports stride 1 or 2")

    # Widen the Cout tile to fill the 256-wide MXU on v6e/v7x (neutral on v5e).
    tn = 256 if cout % 256 == 0 else LANE

    xp = jnp.pad(x_nhwc, ((0, 0), (1, 1), (1, 1), (0, 0)))        # spatial pad=1

    if stride == 1:
        oh, ow = h, w
        xs_arrays = [xp]
        x_specs = [pl.BlockSpec((1, h + 2, w + 2, cin), lambda b, j: (b, 0, 0, 0))]
    else:
        oh = (h - 1) // 2 + 1
        ow = (w - 1) // 2 + 1
        # Decompose the padded image into its 2x2 row/column phases so the kernel
        # reads only what the strided output needs (no 4x compute + subsample).
        xs_arrays = []
        for p in range(2):
            for q in range(2):
                ph = xp[:, p::2, q::2, :][:, :oh + 1, :ow + 1, :]
                ph = jnp.pad(ph, ((0, 0), (0, oh + 1 - ph.shape[1]),
                                  (0, ow + 1 - ph.shape[2]), (0, 0)))
                xs_arrays.append(ph)
        x_specs = [pl.BlockSpec((1, oh + 1, ow + 1, cin), lambda b, j: (b, 0, 0, 0))
                   for _ in range(4)]

    grid = (n, cout // tn)
    flops = 2 * n * oh * ow * 9 * cin * cout
    bytes_accessed = (sum(int(a.size) for a in xs_arrays) * 2 + int(w_taps.size) * 2
                      + 2 * cout * 4 + n * oh * ow * cout * 2)

    out = pl.pallas_call(
        functools.partial(_conv3x3_kernel, oh=oh, ow=ow, stride=stride),
        out_shape=jax.ShapeDtypeStruct((n, oh * ow, cout), jnp.bfloat16),
        grid=grid,
        in_specs=x_specs + [
            pl.BlockSpec((3, 3 * cin, tn), lambda b, j: (0, 0, j)),
            pl.BlockSpec((1, tn), lambda b, j: (0, j)),
            pl.BlockSpec((1, tn), lambda b, j: (0, j)),
        ],
        out_specs=pl.BlockSpec((1, oh * ow, tn), lambda b, j: (b, 0, j)),
        compiler_params=_cparams("parallel", "parallel"),
        cost_estimate=pl.CostEstimate(flops=flops, transcendentals=0,
                                      bytes_accessed=bytes_accessed),
    )(*[a.astype(jnp.bfloat16) for a in xs_arrays],
      w_taps.astype(jnp.bfloat16), scale.astype(jnp.float32),
      bias.astype(jnp.float32))

    return out.reshape(n, oh, ow, cout)


# ---------------------------------------------------------------------------
# Parameter prep (fold BN, reorder + lane-pad weights)
# ---------------------------------------------------------------------------
def _bn_fold(bn, eps=1e-5):
    scale = bn['gamma'] / jnp.sqrt(bn['var'] + eps)
    bias = bn['beta'] - bn['mean'] * scale
    return scale, bias


def _prep_bn(bn, c_pad):
    scale, bias = _bn_fold(bn)
    c = scale.shape[0]
    scale = jnp.pad(scale, (0, c_pad - c)).reshape(1, c_pad).astype(jnp.float32)
    bias = jnp.pad(bias, (0, c_pad - c)).reshape(1, c_pad).astype(jnp.float32)
    return scale, bias


def _prep_1x1(w_oihw, cin_pad, cout_pad):
    cout, cin = w_oihw.shape[0], w_oihw.shape[1]
    m = w_oihw.reshape(cout, cin).T                               # (cin, cout)
    return jnp.pad(m, ((0, cin_pad - cin), (0, cout_pad - cout))).astype(jnp.bfloat16)


def _prep_3x3(w_oihw, cin_pad, cout_pad):
    # -> (kh, kw*cin_pad, cout_pad) with the K axis ordered (dj, ci), matching the
    # in-kernel concat of the 3 column taps along the contraction axis.
    cout, cin, kh, kw = w_oihw.shape
    m = jnp.transpose(w_oihw, (2, 3, 1, 0))                       # (kh, kw, cin, cout)
    m = jnp.pad(m, ((0, 0), (0, 0), (0, cin_pad - cin), (0, cout_pad - cout)))
    return m.reshape(kh, kw * cin_pad, cout_pad).astype(jnp.bfloat16)


# ---------------------------------------------------------------------------
# Module init (matches PyTorch Bottleneck shapes)
# ---------------------------------------------------------------------------
def _conv_init(key, cout, cin, kh, kw):
    n = kh * kw * cout
    return jax.random.normal(key, (cout, cin, kh, kw), jnp.float32) * math.sqrt(2.0 / n)


def _bn_init(c):
    return dict(gamma=jnp.ones((c,), jnp.float32), beta=jnp.zeros((c,), jnp.float32),
                mean=jnp.zeros((c,), jnp.float32), var=jnp.ones((c,), jnp.float32))


def init_bottleneck(key, in_planes, planes, stride=1):
    ks = jax.random.split(key, 4)
    p = {
        'stride': stride,
        'conv1': _conv_init(ks[0], planes, in_planes, 1, 1), 'bn1': _bn_init(planes),
        'conv2': _conv_init(ks[1], planes, planes, 3, 3), 'bn2': _bn_init(planes),
        'conv3': _conv_init(ks[2], EXPANSION * planes, planes, 1, 1),
        'bn3': _bn_init(EXPANSION * planes),
    }
    if stride != 1 or in_planes != EXPANSION * planes:
        p['downsample'] = {'conv': _conv_init(ks[3], EXPANSION * planes, in_planes, 1, 1),
                           'bn': _bn_init(EXPANSION * planes)}
    else:
        p['downsample'] = None
    return p


# ---------------------------------------------------------------------------
# Forward pass
# ---------------------------------------------------------------------------
def bottleneck_forward(params, x_nchw):
    stride = params['stride']
    planes = params['conv1'].shape[0]
    cin = params['conv1'].shape[1]
    cout = EXPANSION * planes
    cin_p = _round_up(cin, LANE)
    planes_p = _round_up(planes, LANE)
    cout_p = _round_up(cout, LANE)

    # NCHW (PyTorch) -> NHWC: cast to bf16 *before* the layout transpose (halves
    # the HBM shuffle) and fuse the channel lane-pad into the same prologue pass.
    x = jnp.transpose(x_nchw.astype(jnp.bfloat16), (0, 2, 3, 1))
    x = jnp.pad(x, ((0, 0), (0, 0), (0, 0), (0, cin_p - cin)))

    # conv1 (1x1) + bn1 + relu
    w1 = _prep_1x1(params['conv1'], cin_p, planes_p)
    s1, b1 = _prep_bn(params['bn1'], planes_p)
    out = conv1x1_bn(x, w1, s1, b1, relu=True)

    # conv2 (3x3, stride handled natively in the kernel) + bn2 + relu
    w2 = _prep_3x3(params['conv2'], planes_p, planes_p)
    s2, b2 = _prep_bn(params['bn2'], planes_p)
    out = conv3x3_bn_relu(out, w2, s2, b2, stride=stride)

    # shortcut (identity or 1x1-stride projection + BN)
    if params['downsample'] is not None:
        # TODO(synk): fold this strided subsample into the projection kernel's
        #             DMA (index_map over a dim-split view) to avoid the gather pass.
        xs = x if stride == 1 else x[:, ::stride, ::stride, :]
        wd = _prep_1x1(params['downsample']['conv'], cin_p, cout_p)
        sd, bd = _prep_bn(params['downsample']['bn'], cout_p)
        sc = conv1x1_bn(xs, wd, sd, bd, relu=False)
    else:
        assert cin_p == cout_p, "identity shortcut requires matching padded channels"
        sc = x  # identity

    # conv3 (1x1) + bn3 + residual add + relu, fused in one epilogue
    w3 = _prep_1x1(params['conv3'], planes_p, cout_p)
    s3, b3 = _prep_bn(params['bn3'], cout_p)
    out = conv1x1_bn(out, w3, s3, b3, relu=True, residual=sc)

    # strip channel padding, back to NCHW f32
    out = out[..., :cout].astype(jnp.float32)
    return jnp.transpose(out, (0, 3, 1, 2))


# ---------------------------------------------------------------------------
if __name__ == "__main__":
    key = jax.random.PRNGKey(0)
    pkey, xkey, pkey2, xkey2 = jax.random.split(key, 4)

    # Config 1: identity shortcut (in_planes == expansion*planes, stride=1)
    in_planes, planes, stride = 128, 32, 1
    params = init_bottleneck(pkey, in_planes, planes, stride)
    x = jax.random.normal(xkey, (2, in_planes, 16, 16), jnp.float32)
    out = jax.jit(functools.partial(bottleneck_forward, params))(x)
    jax.block_until_ready(out)
    assert out.shape == (2, EXPANSION * planes, 16, 16), out.shape
    assert bool(jnp.all(jnp.isfinite(out)))

    # Config 2: projection shortcut with stride=2
    params2 = init_bottleneck(pkey2, 64, 32, 2)
    x2 = jax.random.normal(xkey2, (2, 64, 16, 16), jnp.float32)
    out2 = jax.jit(functools.partial(bottleneck_forward, params2))(x2)
    jax.block_until_ready(out2)
    assert out2.shape == (2, 128, 8, 8), out2.shape
    assert bool(jnp.all(jnp.isfinite(out2)))

    print("KERNEL_OK")
</pallas_src>

<mosaic_0001>
module attributes {stable_mosaic.version = 11 : i64} {
  func.func @_matmul_bn_kernel(%arg0: i32, %arg1: memref<256x128xbf16, #tpu.memory_space<vmem>>, %arg2: memref<128x128xbf16, #tpu.memory_space<vmem>>, %arg3: memref<1x128xf32, #tpu.memory_space<vmem>>, %arg4: memref<1x128xf32, #tpu.memory_space<vmem>>, %arg5: memref<256x128xbf16, #tpu.memory_space<vmem>>) attributes {dimension_semantics = [#tpu.dimension_semantics<parallel>], iteration_bounds = array<i64: 2>, scalar_prefetch = 0 : i64, scratch_operands = 0 : i64, tpu.core_type = #tpu.core_type<tc>, window_params = [{transform_indices = @transform_0, window_bounds = array<i64: 256, 128>}, {pipeline_mode = #tpu.pipeline_mode<synchronous>, transform_indices = @transform_1, window_bounds = array<i64: 128, 128>}, {pipeline_mode = #tpu.pipeline_mode<synchronous>, transform_indices = @transform_2, window_bounds = array<i64: 1, 128>}, {pipeline_mode = #tpu.pipeline_mode<synchronous>, transform_indices = @transform_3, window_bounds = array<i64: 1, 128>}, {transform_indices = @transform_4, window_bounds = array<i64: 256, 128>}]} {
    %c0 = arith.constant 0 : index
    %c0_0 = arith.constant 0 : index
    %0 = vector.load %arg1[%c0, %c0_0] : memref<256x128xbf16, #tpu.memory_space<vmem>>, vector<256x128xbf16>
    %c0_1 = arith.constant 0 : index
    %c0_2 = arith.constant 0 : index
    %1 = vector.load %arg2[%c0_1, %c0_2] : memref<128x128xbf16, #tpu.memory_space<vmem>>, vector<128x128xbf16>
    %cst = arith.constant dense<0.000000e+00> : vector<256x128xf32>
    %2 = tpu.matmul %0, %1, %cst {dimension_numbers = #tpu.dot_dimension_numbers<[1], [0], [0], [1], [0, 0, 1, 1], [], []>} : vector<256x128xbf16>, vector<128x128xbf16>, vector<256x128xf32> -> vector<256x128xf32>
    %c0_3 = arith.constant 0 : index
    %c0_4 = arith.constant 0 : index
    %3 = vector.load %arg3[%c0_3, %c0_4] : memref<1x128xf32, #tpu.memory_space<vmem>>, vector<1x128xf32>
    %4 = vector.broadcast %3 : vector<1x128xf32> to vector<256x128xf32>
    %5 = arith.mulf %2, %4 : vector<256x128xf32>
    %c0_5 = arith.constant 0 : index
    %c0_6 = arith.constant 0 : index
    %6 = vector.load %arg4[%c0_5, %c0_6] : memref<1x128xf32, #tpu.memory_space<vmem>>, vector<1x128xf32>
    %7 = vector.broadcast %6 : vector<1x128xf32> to vector<256x128xf32>
    %8 = arith.addf %5, %7 : vector<256x128xf32>
    %cst_7 = arith.constant 0.000000e+00 : f32
    %9 = vector.broadcast %cst_7 : f32 to vector<256x128xf32>
    %10 = arith.maximumf %8, %9 : vector<256x128xf32>
    %11 = arith.truncf %10 : vector<256x128xf32> to vector<256x128xbf16>
    %c0_8 = arith.constant 0 : index
    %c0_9 = arith.constant 0 : index
    %12 = vector.load %arg5[%c0_8, %c0_9] : memref<256x128xbf16, #tpu.memory_space<vmem>>, vector<256x128xbf16>
    tpu.vector_store %arg5[%c0_8, %c0_9], %11 {strides = array<i32>} : memref<256x128xbf16, #tpu.memory_space<vmem>>, vector<256x128xbf16>,
    return
  }
  func.func @transform_0(%arg0: i32) -> (i32, i32) {
    %c0_i32 = arith.constant 0 : i32
    %c0_i32_0 = arith.constant 0 : i32
    return %arg0, %c0_i32 : i32, i32
  }
  func.func @transform_1(%arg0: i32) -> (i32, i32) {
    %c0_i32 = arith.constant 0 : i32
    %c0_i32_0 = arith.constant 0 : i32
    %c0_i32_1 = arith.constant 0 : i32
    return %c0_i32, %c0_i32_0 : i32, i32
  }
  func.func @transform_2(%arg0: i32) -> (i32, i32) {
    %c0_i32 = arith.constant 0 : i32
    %c0_i32_0 = arith.constant 0 : i32
    %c0_i32_1 = arith.constant 0 : i32
    return %c0_i32, %c0_i32_0 : i32, i32
  }
  func.func @transform_3(%arg0: i32) -> (i32, i32) {
    %c0_i32 = arith.constant 0 : i32
    %c0_i32_0 = arith.constant 0 : i32
    %c0_i32_1 = arith.constant 0 : i32
    return %c0_i32, %c0_i32_0 : i32, i32
  }
  func.func @transform_4(%arg0: i32) -> (i32, i32) {
    %c0_i32 = arith.constant 0 : i32
    %c0_i32_0 = arith.constant 0 : i32
    return %arg0, %c0_i32 : i32, i32
  }
}

module attributes {stable_mosaic.version = 11 : i64} {
  func.func @_conv3x3_kernel(%arg0: i32, %arg1: i32, %arg2: memref<1x18x18x128xbf16, #tpu.memory_space<vmem>>, %arg3: memref<3x384x128xbf16, #tpu.memory_space<vmem>>, %arg4: memref<1x128xf32, #tpu.memory_space<vmem>>, %arg5: memref<1x128xf32, #tpu.memory_space<vmem>>, %arg6: memref<1x256x128xbf16, #tpu.memory_space<vmem>>) attributes {dimension_semantics = [#tpu.dimension_semantics<parallel>, #tpu.dimension_semantics<parallel>], iteration_bounds = array<i64: 2, 1>, scalar_prefetch = 0 : i64, scratch_operands = 0 : i64, tpu.core_type = #tpu.core_type<tc>, window_params = [{transform_indices = @transform_0, window_bounds = array<i64: 1, 18, 18, 128>}, {transform_indices = @transform_1, window_bounds = array<i64: 3, 384, 128>}, {transform_indices = @transform_2, window_bounds = array<i64: 1, 128>}, {transform_indices = @transform_3, window_bounds = array<i64: 1, 128>}, {transform_indices = @transform_4, window_bounds = array<i64: 1, 256, 128>}]} {
    %cst = arith.constant 0.000000e+00 : f32
    %0 = vector.broadcast %cst : f32 to vector<256x128xf32>
    %c0 = arith.constant 0 : index
    %c0_0 = arith.constant 0 : index
    %c0_1 = arith.constant 0 : index
    %c0_2 = arith.constant 0 : index
    %1 = vector.load %arg2[%c0, %c0_0, %c0_1, %c0_2] : memref<1x18x18x128xbf16, #tpu.memory_space<vmem>>, vector<1x16x18x128xbf16>
    %2 = vector.shape_cast %1 : vector<1x16x18x128xbf16> to vector<16x18x128xbf16>
    %3 = vector.extract_strided_slice %2 {offsets = [0, 0, 0], sizes = [16, 16, 128], strides = [1, 1, 1]} : vector<16x18x128xbf16> to vector<16x16x128xbf16>
    %4 = vector.extract_strided_slice %2 {offsets = [0, 1, 0], sizes = [16, 16, 128], strides = [1, 1, 1]} : vector<16x18x128xbf16> to vector<16x16x128xbf16>
    %5 = vector.extract_strided_slice %2 {offsets = [0, 2, 0], sizes = [16, 16, 128], strides = [1, 1, 1]} : vector<16x18x128xbf16> to vector<16x16x128xbf16>
    %6 = tpu.concatenate %3, %4, %5 in 2 : vector<16x16x128xbf16>, vector<16x16x128xbf16>, vector<16x16x128xbf16> -> vector<16x16x384xbf16>
    %7 = vector.shape_cast %6 : vector<16x16x384xbf16> to vector<256x384xbf16>
    %c0_3 = arith.constant 0 : index
    %c0_4 = arith.constant 0 : index
    %c0_5 = arith.constant 0 : index
    %8 = vector.load %arg3[%c0_3, %c0_4, %c0_5] : memref<3x384x128xbf16, #tpu.memory_space<vmem>>, vector<1x384x128xbf16>
    %9 = vector.shape_cast %8 : vector<1x384x128xbf16> to vector<384x128xbf16>
    %cst_6 = arith.constant dense<0.000000e+00> : vector<256x128xf32>
    %10 = tpu.matmul %7, %9, %cst_6 {dimension_numbers = #tpu.dot_dimension_numbers<[1], [0], [0], [1], [0, 0, 1, 1], [], []>} : vector<256x384xbf16>, vector<384x128xbf16>, vector<256x128xf32> -> vector<256x128xf32>
    %11 = arith.addf %0, %10 : vector<256x128xf32>
    %c0_7 = arith.constant 0 : index
    %c1 = arith.constant 1 : index
    %c0_8 = arith.constant 0 : index
    %c0_9 = arith.constant 0 : index
    %12 = vector.load %arg2[%c0_7, %c1, %c0_8, %c0_9] : memref<1x18x18x128xbf16, #tpu.memory_space<vmem>>, vector<1x16x18x128xbf16>
    %13 = vector.shape_cast %12 : vector<1x16x18x128xbf16> to vector<16x18x128xbf16>
    %14 = vector.extract_strided_slice %13 {offsets = [0, 0, 0], sizes = [16, 16, 128], strides = [1, 1, 1]} : vector<16x18x128xbf16> to vector<16x16x128xbf16>
    %15 = vector.extract_strided_slice %13 {offsets = [0, 1, 0], sizes = [16, 16, 128], strides = [1, 1, 1]} : vector<16x18x128xbf16> to vector<16x16x128xbf16>
    %16 = vector.extract_strided_slice %13 {offsets = [0, 2, 0], sizes = [16, 16, 128], strides = [1, 1, 1]} : vector<16x18x128xbf16> to vector<16x16x128xbf16>
    %17 = tpu.concatenate %14, %15, %16 in 2 : vector<16x16x128xbf16>, vector<16x16x128xbf16>, vector<16x16x128xbf16> -> vector<16x16x384xbf16>
    %18 = vector.shape_cast %17 : vector<16x16x384xbf16> to vector<256x384xbf16>
    %c1_10 = arith.constant 1 : index
    %c0_11 = arith.constant 0 : index
    %c0_12 = arith.constant 0 : index
    %19 = vector.load %arg3[%c1_10, %c0_11, %c0_12] : memref<3x384x128xbf16, #tpu.memory_space<vmem>>, vector<1x384x128xbf16>
    %20 = vector.shape_cast %19 : vector<1x384x128xbf16> to vector<384x128xbf16>
    %cst_13 = arith.constant dense<0.000000e+00> : vector<256x128xf32>
    %21 = tpu.matmul %18, %20, %cst_13 {dimension_numbers = #tpu.dot_dimension_numbers<[1], [0], [0], [1], [0, 0, 1, 1], [], []>} : vector<256x384xbf16>, vector<384x128xbf16>, vector<256x128xf32> -> vector<256x128xf32>
    %22 = arith.addf %11, %21 : vector<256x128xf32>
    %c0_14 = arith.constant 0 : index
    %c2 = arith.constant 2 : index
    %c0_15 = arith.constant 0 : index
    %c0_16 = arith.constant 0 : index
    %23 = vector.load %arg2[%c0_14, %c2, %c0_15, %c0_16] : memref<1x18x18x128xbf16, #tpu.memory_space<vmem>>, vector<1x16x18x128xbf16>
    %24 = vector.shape_cast %23 : vector<1x16x18x128xbf16> to vector<16x18x128xbf16>
    %25 = vector.extract_strided_slice %24 {offsets = [0, 0, 0], sizes = [16, 16, 128], strides = [1, 1, 1]} : vector<16x18x128xbf16> to vector<16x16x128xbf16>
    %26 = vector.extract_strided_slice %24 {offsets = [0, 1, 0], sizes = [16, 16, 128], strides = [1, 1, 1]} : vector<16x18x128xbf16> to vector<16x16x128xbf16>
    %27 = vector.extract_strided_slice %24 {offsets = [0, 2, 0], sizes = [16, 16, 128], strides = [1, 1, 1]} : vector<16x18x128xbf16> to vector<16x16x128xbf16>
    %28 = tpu.concatenate %25, %26, %27 in 2 : vector<16x16x128xbf16>, vector<16x16x128xbf16>, vector<16x16x128xbf16> -> vector<16x16x384xbf16>
    %29 = vector.shape_cast %28 : vector<16x16x384xbf16> to vector<256x384xbf16>
    %c2_17 = arith.constant 2 : index
    %c0_18 = arith.constant 0 : index
    %c0_19 = arith.constant 0 : index
    %30 = vector.load %arg3[%c2_17, %c0_18, %c0_19] : memref<3x384x128xbf16, #tpu.memory_space<vmem>>, vector<1x384x128xbf16>
    %31 = vector.shape_cast %30 : vector<1x384x128xbf16> to vector<384x128xbf16>
    %cst_20 = arith.constant dense<0.000000e+00> : vector<256x128xf32>
    %32 = tpu.matmul %29, %31, %cst_20 {dimension_numbers = #tpu.dot_dimension_numbers<[1], [0], [0], [1], [0, 0, 1, 1], [], []>} : vector<256x384xbf16>, vector<384x128xbf16>, vector<256x128xf32> -> vector<256x128xf32>
    %33 = arith.addf %22, %32 : vector<256x128xf32>
    %c0_21 = arith.constant 0 : index
    %c0_22 = arith.constant 0 : index
    %34 = vector.load %arg4[%c0_21, %c0_22] : memref<1x128xf32, #tpu.memory_space<vmem>>, vector<1x128xf32>
    %35 = vector.broadcast %34 : vector<1x128xf32> to vector<256x128xf32>
    %36 = arith.mulf %33, %35 : vector<256x128xf32>
    %c0_23 = arith.constant 0 : index
    %c0_24 = arith.constant 0 : index
    %37 = vector.load %arg5[%c0_23, %c0_24] : memref<1x128xf32, #tpu.memory_space<vmem>>, vector<1x128xf32>
    %38 = vector.broadcast %37 : vector<1x128xf32> to vector<256x128xf32>
    %39 = arith.addf %36, %38 : vector<256x128xf32>
    %cst_25 = arith.constant 0.000000e+00 : f32
    %40 = vector.broadcast %cst_25 : f32 to vector<256x128xf32>
    %41 = arith.maximumf %39, %40 : vector<256x128xf32>
    %42 = vector.shape_cast %41 : vector<256x128xf32> to vector<1x256x128xf32>
    %43 = arith.truncf %42 : vector<1x256x128xf32> to vector<1x256x128xbf16>
    %c0_26 = arith.constant 0 : index
    %c0_27 = arith.constant 0 : index
    %c0_28 = arith.constant 0 : index
    %44 = vector.load %arg6[%c0_26, %c0_27, %c0_28] : memref<1x256x128xbf16, #tpu.memory_space<vmem>>, vector<1x256x128xbf16>
    tpu.vector_store %arg6[%c0_26, %c0_27, %c0_28], %43 {strides = array<i32>} : memref<1x256x128xbf16, #tpu.memory_space<vmem>>, vector<1x256x128xbf16>,
    return
  }
  func.func @transform_0(%arg0: i32, %arg1: i32) -> (i32, i32, i32, i32) {
    %c0_i32 = arith.constant 0 : i32
    %c0_i32_0 = arith.constant 0 : i32
    %c0_i32_1 = arith.constant 0 : i32
    %c0_i32_2 = arith.constant 0 : i32
    return %arg0, %c0_i32, %c0_i32_0, %c0_i32_1 : i32, i32, i32, i32
  }
  func.func @transform_1(%arg0: i32, %arg1: i32) -> (i32, i32, i32) {
    %c0_i32 = arith.constant 0 : i32
    %c0_i32_0 = arith.constant 0 : i32
    %c0_i32_1 = arith.constant 0 : i32
    return %c0_i32, %c0_i32_0, %arg1 : i32, i32, i32
  }
  func.func @transform_2(%arg0: i32, %arg1: i32) -> (i32, i32) {
    %c0_i32 = arith.constant 0 : i32
    %c0_i32_0 = arith.constant 0 : i32
    return %c0_i32, %arg1 : i32, i32
  }
  func.func @transform_3(%arg0: i32, %arg1: i32) -> (i32, i32) {
    %c0_i32 = arith.constant 0 : i32
    %c0_i32_0 = arith.constant 0 : i32
    return %c0_i32, %arg1 : i32, i32
  }
  func.func @transform_4(%arg0: i32, %arg1: i32) -> (i32, i32, i32) {
    %c0_i32 = arith.constant 0 : i32
    %c0_i32_0 = arith.constant 0 : i32
    return %arg0, %c0_i32, %arg1 : i32, i32, i32
  }
}

module attributes {stable_mosaic.version = 11 : i64} {
  func.func @_matmul_bn_kernel(%arg0: i32, %arg1: memref<256x128xbf16, #tpu.memory_space<vmem>>, %arg2: memref<128x128xbf16, #tpu.memory_space<vmem>>, %arg3: memref<1x128xf32, #tpu.memory_space<vmem>>, %arg4: memref<1x128xf32, #tpu.memory_space<vmem>>, %arg5: memref<256x128xbf16, #tpu.memory_space<vmem>>, %arg6: memref<256x128xbf16, #tpu.memory_space<vmem>>) attributes {dimension_semantics = [#tpu.dimension_semantics<parallel>], iteration_bounds = array<i64: 2>, scalar_prefetch = 0 : i64, scratch_operands = 0 : i64, tpu.core_type = #tpu.core_type<tc>, window_params = [{transform_indices = @transform_0, window_bounds = array<i64: 256, 128>}, {pipeline_mode = #tpu.pipeline_mode<synchronous>, transform_indices = @transform_1, window_bounds = array<i64: 128, 128>}, {pipeline_mode = #tpu.pipeline_mode<synchronous>, transform_indices = @transform_2, window_bounds = array<i64: 1, 128>}, {pipeline_mode = #tpu.pipeline_mode<synchronous>, transform_indices = @transform_3, window_bounds = array<i64: 1, 128>}, {transform_indices = @transform_4, window_bounds = array<i64: 256, 128>}, {transform_indices = @transform_5, window_bounds = array<i64: 256, 128>}]} {
    %c0 = arith.constant 0 : index
    %c0_0 = arith.constant 0 : index
    %0 = vector.load %arg1[%c0, %c0_0] : memref<256x128xbf16, #tpu.memory_space<vmem>>, vector<256x128xbf16>
    %c0_1 = arith.constant 0 : index
    %c0_2 = arith.constant 0 : index
    %1 = vector.load %arg2[%c0_1, %c0_2] : memref<128x128xbf16, #tpu.memory_space<vmem>>, vector<128x128xbf16>
    %cst = arith.constant dense<0.000000e+00> : vector<256x128xf32>
    %2 = tpu.matmul %0, %1, %cst {dimension_numbers = #tpu.dot_dimension_numbers<[1], [0], [0], [1], [0, 0, 1, 1], [], []>} : vector<256x128xbf16>, vector<128x128xbf16>, vector<256x128xf32> -> vector<256x128xf32>
    %c0_3 = arith.constant 0 : index
    %c0_4 = arith.constant 0 : index
    %3 = vector.load %arg3[%c0_3, %c0_4] : memref<1x128xf32, #tpu.memory_space<vmem>>, vector<1x128xf32>
    %4 = vector.broadcast %3 : vector<1x128xf32> to vector<256x128xf32>
    %5 = arith.mulf %2, %4 : vector<256x128xf32>
    %c0_5 = arith.constant 0 : index
    %c0_6 = arith.constant 0 : index
    %6 = vector.load %arg4[%c0_5, %c0_6] : memref<1x128xf32, #tpu.memory_space<vmem>>, vector<1x128xf32>
    %7 = vector.broadcast %6 : vector<1x128xf32> to vector<256x128xf32>
    %8 = arith.addf %5, %7 : vector<256x128xf32>
    %c0_7 = arith.constant 0 : index
    %c0_8 = arith.constant 0 : index
    %9 = vector.load %arg5[%c0_7, %c0_8] : memref<256x128xbf16, #tpu.memory_space<vmem>>, vector<256x128xbf16>
    %10 = arith.extf %9 : vector<256x128xbf16> to vector<256x128xf32>
    %11 = arith.addf %8, %10 : vector<256x128xf32>
    %cst_9 = arith.constant 0.000000e+00 : f32
    %12 = vector.broadcast %cst_9 : f32 to vector<256x128xf32>
    %13 = arith.maximumf %11, %12 : vector<256x128xf32>
    %14 = arith.truncf %13 : vector<256x128xf32> to vector<256x128xbf16>
    %c0_10 = arith.constant 0 : index
    %c0_11 = arith.constant 0 : index
    %15 = vector.load %arg6[%c0_10, %c0_11] : memref<256x128xbf16, #tpu.memory_space<vmem>>, vector<256x128xbf16>
    tpu.vector_store %arg6[%c0_10, %c0_11], %14 {strides = array<i32>} : memref<256x128xbf16, #tpu.memory_space<vmem>>, vector<256x128xbf16>,
    return
  }
  func.func @transform_0(%arg0: i32) -> (i32, i32) {
    %c0_i32 = arith.constant 0 : i32
    %c0_i32_0 = arith.constant 0 : i32
    return %arg0, %c0_i32 : i32, i32
  }
  func.func @transform_1(%arg0: i32) -> (i32, i32) {
    %c0_i32 = arith.constant 0 : i32
    %c0_i32_0 = arith.constant 0 : i32
    %c0_i32_1 = arith.constant 0 : i32
    return %c0_i32, %c0_i32_0 : i32, i32
  }
  func.func @transform_2(%arg0: i32) -> (i32, i32) {
    %c0_i32 = arith.constant 0 : i32
    %c0_i32_0 = arith.constant 0 : i32
    %c0_i32_1 = arith.constant 0 : i32
    return %c0_i32, %c0_i32_0 : i32, i32
  }
  func.func @transform_3(%arg0: i32) -> (i32, i32) {
    %c0_i32 = arith.constant 0 : i32
    %c0_i32_0 = arith.constant 0 : i32
    %c0_i32_1 = arith.constant 0 : i32
    return %c0_i32, %c0_i32_0 : i32, i32
  }
  func.func @transform_4(%arg0: i32) -> (i32, i32) {
    %c0_i32 = arith.constant 0 : i32
    %c0_i32_0 = arith.constant 0 : i32
    return %arg0, %c0_i32 : i32, i32
  }
  func.func @transform_5(%arg0: i32) -> (i32, i32) {
    %c0_i32 = arith.constant 0 : i32
    %c0_i32_0 = arith.constant 0 : i32
    return %arg0, %c0_i32 : i32, i32
  }
}

</mosaic_0001>

<llo_original>
// kernel: bottleneck_forward.3
$region0: #{bottleneck_forward.3}
  #allocation0 [shape = 'u32[]', space=smem, size = 0x4, offset = 0x4, fixed_abs, tag = 'smem constant byte address 0x4 - core index']
  #allocation1 [shape = 'u32[144,128]{1,0:T(1,128)}', space=vmem, size = 0x12000, scoped, tag = 'internal scratch']
  %s0 = inlined_call_operand.hbm [shape: bf16[512,128], index: 0, kind: input, shape index: {}]
  %s1 = inlined_call_operand.hbm [shape: bf16[128,128], index: 1, kind: input, shape index: {}]
  %s2 = inlined_call_operand.hbm [shape: f32[1,128], index: 2, kind: input, shape index: {}]
  %s3 = inlined_call_operand.hbm [shape: f32[1,128], index: 3, kind: input, shape index: {}]
  %s4 = inlined_call_operand.hbm [shape: bf16[512,128], index: 4, kind: output, shape index: {}]
  %s5 = sld [smem:[#allocation0]]
  $region65: #{bottleneck_forward.3} parent=0
    _
  %s7 = ssub.s32 1, %s5
  %s8 = scalar_select 0, %s7, %s5
  $region1: #{bottleneck_forward.3} parent=0
    #allocation2 [shape = 'u8[131072]{0}', space=vmem, size = 0x20000, scoped, tag = 'input window, operand 0']
    #allocation3 [shape = 's32[2]{0}', space=sflag, size = 0x8, scoped, tag = 'scoped memory for bottleneck_forward.3']
    #allocation4 [shape = 's32[2]{0}', space=sflag, size = 0x8, scoped, tag = 'scoped memory for bottleneck_forward.3']
    #allocation5 [shape = 'u8[32768]{0}', space=vmem, size = 0x8000, scoped, tag = 'input window, operand 1, single buffered']
    #allocation6 [shape = 's32[1]{0}', space=sflag, size = 0x4, scoped, tag = 'scoped memory for bottleneck_forward.3']
    #allocation7 [shape = 'u8[512]{0}', space=vmem, size = 0x400, scoped, tag = 'input window, operand 2, single buffered']
    #allocation8 [shape = 'u8[512]{0}', space=vmem, size = 0x400, scoped, tag = 'input window, operand 3, single buffered']
    #allocation9 [shape = 's32[1]{0}', space=sflag, size = 0x4, scoped, tag = 'scoped memory for bottleneck_forward.3']
    #allocation10 [shape = 'u8[131072]{0}', space=vmem, size = 0x20000, scoped, tag = 'output window, operand 0']
    %9 = vsyncpa [#allocation3], 0
    %s10 = scalar_lea.sflag [#allocation3], 1
    %11 = vsyncpa %s10, 0
    %12 = vsyncpa [#allocation6], 0
    %13 = vsyncpa [#allocation9], 0
    %14 = vsyncpa [#allocation4], 0
    %s15 = scalar_lea.sflag [#allocation4], 1
    %16 = vsyncpa %s15, 0
    loop: start=0, step=1, limit=4
    $region2: #{bottleneck_forward.3} parent=1 // loop_pre_header
      _
    $region3: #{bottleneck_forward.3} parent=1 // loop_header
      %s18 = sphi 0, %s22
      %p19 = scmp.ge.s32.totalorder %s18, 4
      %s28 = sphi 0, %s30
      %s31 = sphi 0, %s28
      %s32 = sphi 0, %s31
      %s48 = sphi 0, %s32
      %s52 = sphi 0, %s52
      %s54 = sphi 0, %s52
      %s55 = sphi 0, %s54
      %s69 = sphi 0, %s55
      %s73 = sphi 0, %s73
      %s75 = sphi 0, %s73
      %s76 = sphi 0, %s75
      %s90 = sphi 0, %s76
      %s94 = sphi 0, %s94
      %s96 = sphi 0, %s94
      %s97 = sphi 0, %s96
      %s111 = sphi 0, %s97
      %s117 = sphi 0, %s119
      %s120 = sphi 0, %s117
      %s121 = sphi 0, %s120
      %s137 = sphi 0, %s121
    $region4: #{bottleneck_forward.3} parent=1 // loop_header_branch
      %21 = sbr.rel (%p19) target = $region8
    $region5: #{bottleneck_forward.3} parent=1 // loop_body
      %s23 = ssub.s32 %s18, 1
      %s24 = ssub.s32 %s18, 2
      %s25 = sadd.s32 %s18, 1
      %s26 = ssub.s32 %s18, %s25
      %p27 = scmp.eq.s32.totalorder %s26, 0
      %s29 = sadd.s32 %s28, 1
      %s30 = scalar_select %p27, %s28, %s29
      %p33 = pneg %p27
      %p34 = scmp.eq.s32.totalorder %s18, 1
      %p35 = por %p33, %p34
      %p36 = scmp.ne.s32.totalorder %s28, %s31
      %p37 = scmp.eq.s32.totalorder %s18, 0
      %p38 = por %p36, %p37
      %p39 = scmp.ne.s32.totalorder %s28, %s31
      %p40 = scmp.eq.s32.totalorder %s23, 1
      %p41 = por %p39, %p40
      %p42 = scmp.ne.s32.totalorder %s31, %s32
      %p43 = scmp.eq.s32.totalorder %s23, 0
      %p44 = por %p42, %p43
      %p45 = scmp.ne.s32.totalorder %s31, %s32
      %p46 = scmp.eq.s32.totalorder %s24, 1
      %p47 = por %p45, %p46
      %p49 = scmp.ne.s32.totalorder %s32, %s48
      %p50 = scmp.eq.s32.totalorder %s24, 0
      %p51 = por %p49, %p50
      %s53 = sadd.s32 %s52, 1
      %p56 = scmp.eq.s32.totalorder %s18, 1
      %p57 = scmp.ne.s32.totalorder %s52, %s54
      %p58 = scmp.eq.s32.totalorder %s18, 0
      %p59 = por %p57, %p58
      %p60 = scmp.ne.s32.totalorder %s52, %s54
      %p61 = scmp.eq.s32.totalorder %s23, 1
      %p62 = por %p60, %p61
      %p63 = scmp.ne.s32.totalorder %s54, %s55
      %p64 = scmp.eq.s32.totalorder %s23, 0
      %p65 = por %p63, %p64
      %p66 = scmp.ne.s32.totalorder %s54, %s55
      %p67 = scmp.eq.s32.totalorder %s24, 1
      %p68 = por %p66, %p67
      %p70 = scmp.ne.s32.totalorder %s55, %s69
      %p71 = scmp.eq.s32.totalorder %s24, 0
      %p72 = por %p70, %p71
      %s74 = sadd.s32 %s73, 1
      %p77 = scmp.eq.s32.totalorder %s18, 1
      %p78 = scmp.ne.s32.totalorder %s73, %s75
      %p79 = scmp.eq.s32.totalorder %s18, 0
      %p80 = por %p78, %p79
      %p81 = scmp.ne.s32.totalorder %s73, %s75
      %p82 = scmp.eq.s32.totalorder %s23, 1
      %p83 = por %p81, %p82
      %p84 = scmp.ne.s32.totalorder %s75, %s76
      %p85 = scmp.eq.s32.totalorder %s23, 0
      %p86 = por %p84, %p85
      %p87 = scmp.ne.s32.totalorder %s75, %s76
      %p88 = scmp.eq.s32.totalorder %s24, 1
      %p89 = por %p87, %p88
      %p91 = scmp.ne.s32.totalorder %s76, %s90
      %p92 = scmp.eq.s32.totalorder %s24, 0
      %p93 = por %p91, %p92
      %s95 = sadd.s32 %s94, 1
      %p98 = scmp.eq.s32.totalorder %s18, 1
      %p99 = scmp.ne.s32.totalorder %s94, %s96
      %p100 = scmp.eq.s32.totalorder %s18, 0
      %p101 = por %p99, %p100
      %p102 = scmp.ne.s32.totalorder %s94, %s96
      %p103 = scmp.eq.s32.totalorder %s23, 1
      %p104 = por %p102, %p103
      %p105 = scmp.ne.s32.totalorder %s96, %s97
      %p106 = scmp.eq.s32.totalorder %s23, 0
      %p107 = por %p105, %p106
      %p108 = scmp.ne.s32.totalorder %s96, %s97
      %p109 = scmp.eq.s32.totalorder %s24, 1
      %p110 = por %p108, %p109
      %p112 = scmp.ne.s32.totalorder %s97, %s111
      %p113 = scmp.eq.s32.totalorder %s24, 0
      %p114 = por %p112, %p113
      %s115 = ssub.s32 %s18, %s25
      %p116 = scmp.eq.s32.totalorder %s115, 0
      %s118 = sadd.s32 %s117, 1
      %s119 = scalar_select %p116, %s117, %s118
      %p122 = pneg %p116
      %p123 = scmp.eq.s32.totalorder %s18, 1
      %p124 = por %p122, %p123
      %p125 = scmp.ne.s32.totalorder %s117, %s120
      %p126 = scmp.eq.s32.totalorder %s18, 0
      %p127 = por %p125, %p126
      %p128 = scmp.ne.s32.totalorder %s117, %s120
      %p129 = scmp.eq.s32.totalorder %s23, 1
      %p130 = por %p128, %p129
      %p131 = scmp.ne.s32.totalorder %s120, %s121
      %p132 = scmp.eq.s32.totalorder %s23, 0
      %p133 = por %p131, %p132
      %p134 = scmp.ne.s32.totalorder %s120, %s121
      %p135 = scmp.eq.s32.totalorder %s24, 1
      %p136 = por %p134, %p135
      %p138 = scmp.ne.s32.totalorder %s121, %s137
      %p139 = scmp.eq.s32.totalorder %s24, 0
      %p140 = por %p138, %p139
      %p141 = scmp.le.s32.totalorder 1, %s18
      %p142 = scmp.lt.s32.totalorder %s18, 3
      %p143 = pnand %p141, %p142
      %p144 = pneg %p143
      // Predicated region
      $region9: #{bottleneck_forward.3} parent=5 // pred_check
        _
      $region10: #{bottleneck_forward.3} parent=5 // pred_check_branch
        %146 = sbr.rel (%p143) target = $region12
      $region11: #{bottleneck_forward.3} parent=5 // pred_region
        %s147 = ssub.s32 %s18, 1
        // Predicated region
        $region13: #{bottleneck_forward.3} parent=11 // pred_check
          %p148 = pneg %p65
        $region14: #{bottleneck_forward.3} parent=11 // pred_check_branch
          %150 = sbr.rel (%p148) target = $region16
        $region15: #{bottleneck_forward.3} parent=11 // pred_region
          %s152 = ssub.s32 1024, 1024
          %153 = vsyncadd [#allocation6], %s152
          %s154 = sshll.u32 [#allocation5], 4
          %s155 = int_to_ptr.vmem [resolvable:$true] %s154
          %160 = dma.hbm_to_vmem [thread:$0]  %s1, 1024, %s155, [#allocation6], 64, 64, 4
        $region16: #{bottleneck_forward.3} parent=11 // pred_fallthru
          _
        // Predicated region
        $region17: #{bottleneck_forward.3} parent=11 // pred_check
          %p161 = pneg %p86
        $region18: #{bottleneck_forward.3} parent=11 // pred_check_branch
          %163 = sbr.rel (%p161) target = $region20
        $region19: #{bottleneck_forward.3} parent=11 // pred_region
          %s165 = ssub.s32 16, 16
          %166 = vsyncadd [#allocation6], %s165
          %s168 = sshll.u32 [#allocation7], 4
          %s169 = int_to_ptr.vmem [resolvable:$true] %s168
          %171 = dma.hbm_to_vmem [thread:$0]  %s2, 16, %s169, [#allocation6]
        $region20: #{bottleneck_forward.3} parent=11 // pred_fallthru
          _
        // Predicated region
        $region21: #{bottleneck_forward.3} parent=11 // pred_check
          %p172 = pneg %p107
        $region22: #{bottleneck_forward.3} parent=11 // pred_check_branch
          %174 = sbr.rel (%p172) target = $region24
        $region23: #{bottleneck_forward.3} parent=11 // pred_region
          %s176 = ssub.s32 16, 16
          %177 = vsyncadd [#allocation9], %s176
          %s179 = sshll.u32 [#allocation8], 4
          %s180 = int_to_ptr.vmem [resolvable:$true] %s179
          %182 = dma.hbm_to_vmem [thread:$0]  %s3, 16, %s180, [#allocation9]
        $region24: #{bottleneck_forward.3} parent=11 // pred_fallthru
          _
      $region12: #{bottleneck_forward.3} parent=5 // pred_fallthru
        _
      %p183 = scmp.lt.s32.totalorder %s18, 2
      // Predicated region
      $region25: #{bottleneck_forward.3} parent=5 // pred_check
        %p184 = pneg %p183
      $region26: #{bottleneck_forward.3} parent=5 // pred_check_branch
        %186 = sbr.rel (%p184) target = $region28
      $region27: #{bottleneck_forward.3} parent=5 // pred_region
        // Predicated region
        $region29: #{bottleneck_forward.3} parent=27 // pred_check
          %p187 = pneg %p38
        $region30: #{bottleneck_forward.3} parent=27 // pred_check_branch
          %189 = sbr.rel (%p187) target = $region32
        $region31: #{bottleneck_forward.3} parent=27 // pred_region
          %s190 = sand.u32 %s28, 1
          %s191 = scalar_lea.sflag [#allocation3], %s190
          %s192 = sand.u32 %s28, 1
          %s193 = smul.addr %s192, 128
          %s194 = scalar_lea.vmem [#allocation2], %s193
          %s195 = smul.u32 32, %s18
          %s197 = ssub.s32 2048, 2048
          %198 = vsyncadd %s191, %s197
          %s199 = smul.addr %s195, 64
          %s200 = scalar_lea.hbm %s0, %s199
          %s201 = sshll.u32 %s194, 4
          %s202 = int_to_ptr.vmem [resolvable:$true] %s201
          %207 = dma.hbm_to_vmem [thread:$0]  %s200, 2048, %s202, %s191, 64, 64, 4
        $region32: #{bottleneck_forward.3} parent=27 // pred_fallthru
          _
      $region28: #{bottleneck_forward.3} parent=5 // pred_fallthru
        _
      %p208 = scmp.le.s32.totalorder 1, %s18
      %p209 = scmp.lt.s32.totalorder %s18, 3
      %p210 = pnand %p208, %p209
      %p211 = pneg %p210
      // Predicated region
      $region33: #{bottleneck_forward.3} parent=5 // pred_check
        _
      $region34: #{bottleneck_forward.3} parent=5 // pred_check_branch
        %213 = sbr.rel (%p210) target = $region36
      $region35: #{bottleneck_forward.3} parent=5 // pred_region
        %s214 = ssub.s32 %s18, 1
        %s215 = sand.u32 %s31, 1
        %s216 = scalar_lea.sflag [#allocation3], %s215
        %s217 = sand.u32 %s31, 1
        %s218 = smul.addr %s217, 128
        %s219 = scalar_lea.vmem [#allocation2], %s218
        // Predicated region
        $region37: #{bottleneck_forward.3} parent=35 // pred_check
          %p220 = pneg %p44
        $region38: #{bottleneck_forward.3} parent=35 // pred_check_branch
          %222 = sbr.rel (%p220) target = $region40
        $region39: #{bottleneck_forward.3} parent=35 // pred_region
          %223 = dma.done %s216, 2048
        $region40: #{bottleneck_forward.3} parent=35 // pred_fallthru
          _
        // Predicated region
        $region41: #{bottleneck_forward.3} parent=35 // pred_check
          %p224 = pneg %p65
        $region42: #{bottleneck_forward.3} parent=35 // pred_check_branch
          %226 = sbr.rel (%p224) target = $region44
        $region43: #{bottleneck_forward.3} parent=35 // pred_region
          %227 = dma.done [#allocation6], 1024
        $region44: #{bottleneck_forward.3} parent=35 // pred_fallthru
          _
        // Predicated region
        $region45: #{bottleneck_forward.3} parent=35 // pred_check
          %p228 = pneg %p86
        $region46: #{bottleneck_forward.3} parent=35 // pred_check_branch
          %230 = sbr.rel (%p228) target = $region48
        $region47: #{bottleneck_forward.3} parent=35 // pred_region
          %231 = dma.done [#allocation6], 16
        $region48: #{bottleneck_forward.3} parent=35 // pred_fallthru
          _
        // Predicated region
        $region49: #{bottleneck_forward.3} parent=35 // pred_check
          %p232 = pneg %p107
        $region50: #{bottleneck_forward.3} parent=35 // pred_check_branch
          %234 = sbr.rel (%p232) target = $region52
        $region51: #{bottleneck_forward.3} parent=35 // pred_region
          %235 = dma.done [#allocation9], 16
        $region52: #{bottleneck_forward.3} parent=35 // pred_fallthru
          _
        %s236 = sand.u32 %s31, 1
        %s237 = scalar_lea.sflag [#allocation3], %s236
        %s238 = sand.u32 %s31, 1
        %s239 = smul.addr %s238, 128
        %s240 = scalar_lea.vmem [#allocation2], %s239
        %p241 = pneg %p44
        %p242 = pneg %p41
        %p243 = pneg %p65
        %p244 = pneg %p62
        %p245 = pneg %p86
        %p246 = pneg %p83
        %p247 = pneg %p107
        %p248 = pneg %p104
        %p249 = pneg %p133
        %p250 = pneg %p130
        %s251 = sand.u32 %s120, 1
        %s252 = scalar_lea.sflag [#allocation4], %s251
        %s253 = sand.u32 %s120, 1
        %s254 = smul.addr %s253, 128
        %s255 = scalar_lea.vmem [#allocation10], %s254
        %s256 = smul.u32 32, %s23
        %s257 = smul.u32 32, %s23
        %v259 = vld [vmem:[%s219] sm:$0xf]
        %v260 = vld [vmem:[%s219 + $0x4] sm:$0xf]
        %v261 = vld [vmem:[%s219 + $0x8] sm:$0xf]
        %v262 = vld [vmem:[%s219 + $0xc] sm:$0xf]
        %v263 = vld [vmem:[%s219 + $0x10] sm:$0xf]
        %v264 = vld [vmem:[%s219 + $0x14] sm:$0xf]
        %v265 = vld [vmem:[%s219 + $0x18] sm:$0xf]
        %v266 = vld [vmem:[%s219 + $0x1c] sm:$0xf]
        %v267 = vld [vmem:[%s219 + $0x20] sm:$0xf]
        %v268 = vld [vmem:[%s219 + $0x24] sm:$0xf]
        %v269 = vld [vmem:[%s219 + $0x28] sm:$0xf]
        %v270 = vld [vmem:[%s219 + $0x2c] sm:$0xf]
        %v271 = vld [vmem:[%s219 + $0x30] sm:$0xf]
        %v272 = vld [vmem:[%s219 + $0x34] sm:$0xf]
        %v273 = vld [vmem:[%s219 + $0x38] sm:$0xf]
        %v274 = vld [vmem:[%s219 + $0x3c] sm:$0xf]
        %v275 = vld [vmem:[%s219 + $0x40] sm:$0xf]
        %v276 = vld [vmem:[%s219 + $0x44] sm:$0xf]
        %v277 = vld [vmem:[%s219 + $0x48] sm:$0xf]
        %v278 = vld [vmem:[%s219 + $0x4c] sm:$0xf]
        %v279 = vld [vmem:[%s219 + $0x50] sm:$0xf]
        %v280 = vld [vmem:[%s219 + $0x54] sm:$0xf]
        %v281 = vld [vmem:[%s219 + $0x58] sm:$0xf]
        %v282 = vld [vmem:[%s219 + $0x5c] sm:$0xf]
        %v283 = vld [vmem:[%s219 + $0x60] sm:$0xf]
        %v284 = vld [vmem:[%s219 + $0x64] sm:$0xf]
        %v285 = vld [vmem:[%s219 + $0x68] sm:$0xf]
        %v286 = vld [vmem:[%s219 + $0x6c] sm:$0xf]
        %v287 = vld [vmem:[%s219 + $0x70] sm:$0xf]
        %v288 = vld [vmem:[%s219 + $0x74] sm:$0xf]
        %v289 = vld [vmem:[%s219 + $0x78] sm:$0xf]
        %v290 = vld [vmem:[%s219 + $0x7c] sm:$0xf]
        %v291 = vld [vmem:[#allocation5] sm:$0xf]
        %v292 = vld [vmem:[#allocation5 + $0x4] sm:$0xf]
        %v293 = vld [vmem:[#allocation5 + $0x8] sm:$0xf]
        %v294 = vld [vmem:[#allocation5 + $0xc] sm:$0xf]
        %v295 = vld [vmem:[#allocation5 + $0x10] sm:$0xf]
        %v296 = vld [vmem:[#allocation5 + $0x14] sm:$0xf]
        %v297 = vld [vmem:[#allocation5 + $0x18] sm:$0xf]
        %v298 = vld [vmem:[#allocation5 + $0x1c] sm:$0xf]
        %v299 = vld [vmem:[#allocation5 + $0x20] sm:$0xf]
        %v300 = vld [vmem:[#allocation5 + $0x24] sm:$0xf]
        %v301 = vld [vmem:[#allocation5 + $0x28] sm:$0xf]
        %v302 = vld [vmem:[#allocation5 + $0x2c] sm:$0xf]
        %v303 = vld [vmem:[#allocation5 + $0x30] sm:$0xf]
        %v304 = vld [vmem:[#allocation5 + $0x34] sm:$0xf]
        %v305 = vld [vmem:[#allocation5 + $0x38] sm:$0xf]
        %v306 = vld [vmem:[#allocation5 + $0x3c] sm:$0xf]
        %v339 = vunpack.c.l.b16 %v259
        %v340 = vunpack.c.l.b16 %v260
        %v341 = vunpack.c.l.b16 %v261
        %v342 = vunpack.c.l.b16 %v262
        %v343 = vunpack.c.l.b16 %v263
        %v344 = vunpack.c.l.b16 %v264
        %v345 = vunpack.c.l.b16 %v265
        %v346 = vunpack.c.l.b16 %v266
        %v347 = vunpack.c.l.b16 %v267
        %v348 = vunpack.c.l.b16 %v268
        %v349 = vunpack.c.l.b16 %v269
        %v350 = vunpack.c.l.b16 %v270
        %v351 = vunpack.c.l.b16 %v271
        %v352 = vunpack.c.l.b16 %v272
        %v353 = vunpack.c.l.b16 %v273
        %v354 = vunpack.c.l.b16 %v274
        %v355 = vunpack.c.l.b16 %v275
        %v356 = vunpack.c.l.b16 %v276
        %v357 = vunpack.c.l.b16 %v277
        %v358 = vunpack.c.l.b16 %v278
        %v359 = vunpack.c.l.b16 %v279
        %v360 = vunpack.c.l.b16 %v280
        %v361 = vunpack.c.l.b16 %v281
        %v362 = vunpack.c.l.b16 %v282
        %v363 = vunpack.c.l.b16 %v283
        %v364 = vunpack.c.l.b16 %v284
        %v365 = vunpack.c.l.b16 %v285
        %v366 = vunpack.c.l.b16 %v286
        %v367 = vunpack.c.l.b16 %v287
        %v368 = vunpack.c.l.b16 %v288
        %v369 = vunpack.c.l.b16 %v289
        %v370 = vunpack.c.l.b16 %v290
        %v371 = vpack.c.b16 %v340, %v339
        %v372 = vpack.c.b16 %v342, %v341
        %v373 = vpack.c.b16 %v344, %v343
        %v374 = vpack.c.b16 %v346, %v345
        %v375 = vpack.c.b16 %v348, %v347
        %v376 = vpack.c.b16 %v350, %v349
        %v377 = vpack.c.b16 %v352, %v351
        %v378 = vpack.c.b16 %v354, %v353
        %v379 = vpack.c.b16 %v356, %v355
        %v380 = vpack.c.b16 %v358, %v357
        %v381 = vpack.c.b16 %v360, %v359
        %v382 = vpack.c.b16 %v362, %v361
        %v383 = vpack.c.b16 %v364, %v363
        %v384 = vpack.c.b16 %v366, %v365
        %v385 = vpack.c.b16 %v368, %v367
        %v386 = vpack.c.b16 %v370, %v369
        %v419 = vunpack.c.l.b16 %v291
        %v420 = vunpack.c.l.b16 %v292
        %v421 = vunpack.c.l.b16 %v293
        %v422 = vunpack.c.l.b16 %v294
        %v423 = vunpack.c.l.b16 %v295
        %v424 = vunpack.c.l.b16 %v296
        %v425 = vunpack.c.l.b16 %v297
        %v426 = vunpack.c.l.b16 %v298
        %v427 = vunpack.c.l.b16 %v299
        %v428 = vunpack.c.l.b16 %v300
        %v429 = vunpack.c.l.b16 %v301
        %v430 = vunpack.c.l.b16 %v302
        %v431 = vunpack.c.l.b16 %v303
        %v432 = vunpack.c.l.b16 %v304
        %v433 = vunpack.c.l.b16 %v305
        %v434 = vunpack.c.l.b16 %v306
        %v435 = vpack.c.b16 %v420, %v419
        %v436 = vpack.c.b16 %v422, %v421
        %v437 = vpack.c.b16 %v424, %v423
        %v438 = vpack.c.b16 %v426, %v425
        %v439 = vpack.c.b16 %v428, %v427
        %v440 = vpack.c.b16 %v430, %v429
        %v441 = vpack.c.b16 %v432, %v431
        %v442 = vpack.c.b16 %v434, %v433
        %451 = vmatprep.subr.bf16.mxu0 0
        %452 = vmatpush1.bf16.msra.mxu0 %v435
        %453 = vmatprep.subr.bf16.mxu0 0
        %454 = vmatpush1.bf16.msra.mxu0 %v436
        %455 = vmatprep.subr.bf16.mxu0 0
        %456 = vmatpush1.bf16.msra.mxu0 %v437
        %457 = vmatprep.subr.bf16.mxu0 0
        %458 = vmatpush1.bf16.msra.mxu0 %v438
        %459 = vmatprep.subr.bf16.mxu0 0
        %460 = vmatpush1.bf16.msra.mxu0 %v439
        %461 = vmatprep.subr.bf16.mxu0 0
        %462 = vmatpush1.bf16.msra.mxu0 %v440
        %463 = vmatprep.subr.bf16.mxu0 0
        %464 = vmatpush1.bf16.msra.mxu0 %v441
        %465 = vmatprep.subr.bf16.mxu0 0
        %466 = vmatpush1.bf16.msra.mxu0 %v442
        %467 = vmatprep.subr.bf16.mxu0 0
        %468 = vmatpush1.bf16.msra.mxu0 0
        %469 = vmatprep.subr.bf16.mxu0 0
        %470 = vmatpush1.bf16.msra.mxu0 0
        %471 = vmatprep.subr.bf16.mxu0 0
        %472 = vmatpush1.bf16.msra.mxu0 0
        %473 = vmatprep.subr.bf16.mxu0 0
        %474 = vmatpush1.bf16.msra.mxu0 0
        %475 = vmatprep.subr.bf16.mxu0 0
        %476 = vmatpush1.bf16.msra.mxu0 0
        %477 = vmatprep.subr.bf16.mxu0 0
        %478 = vmatpush1.bf16.msra.mxu0 0
        %479 = vmatprep.subr.bf16.mxu0 0
        %480 = vmatpush1.bf16.msra.mxu0 0
        %481 = vmatprep.subr.bf16.mxu0 0
        %482 = vmatpush1.bf16.msra.mxu0 0
        %483 = vmatprep.mubr.bf16.mxu0 0
        %484 = vmatmul.mubr.bf16.gmra.mrb[0].mxu0 %v371
        %v485 = vpop.f32.mrb[0].mxu0
        %v486 = vadd.f32 0.0, %v485
        %v487 = vpop.f32.mrb[0].mxu0
        %v488 = vpop.f32.mrb[0].mxu0
        %v489 = vadd.f32 0.0, %v488
        %v490 = vpop.f32.mrb[0].mxu0
        %491 = vmatprep.mubr.bf16.mxu0 0
        %492 = vmatmul.mubr.bf16.gmra.mrb[0].mxu0 %v372
        %v493 = vpop.f32.mrb[0].mxu0
        %v494 = vadd.f32 0.0, %v493
        %v495 = vpop.f32.mrb[0].mxu0
        %v496 = vpop.f32.mrb[0].mxu0
        %v497 = vadd.f32 0.0, %v496
        %v498 = vpop.f32.mrb[0].mxu0
        %499 = vmatprep.mubr.bf16.mxu0 0
        %500 = vmatmul.mubr.bf16.gmra.mrb[0].mxu0 %v373
        %v501 = vpop.f32.mrb[0].mxu0
        %v502 = vadd.f32 0.0, %v501
        %v503 = vpop.f32.mrb[0].mxu0
        %v504 = vpop.f32.mrb[0].mxu0
        %v505 = vadd.f32 0.0, %v504
        %v506 = vpop.f32.mrb[0].mxu0
        %507 = vmatprep.mubr.bf16.mxu0 0
        %508 = vmatmul.mubr.bf16.gmra.mrb[0].mxu0 %v374
        %v509 = vpop.f32.mrb[0].mxu0
        %v510 = vadd.f32 0.0, %v509
        %v511 = vpop.f32.mrb[0].mxu0
        %v512 = vpop.f32.mrb[0].mxu0
        %v513 = vadd.f32 0.0, %v512
        %v514 = vpop.f32.mrb[0].mxu0
        %515 = vmatprep.mubr.bf16.mxu0 0
        %516 = vmatmul.mubr.bf16.gmra.mrb[0].mxu0 %v375
        %v517 = vpop.f32.mrb[0].mxu0
        %v518 = vadd.f32 0.0, %v517
        %v519 = vpop.f32.mrb[0].mxu0
        %v520 = vpop.f32.mrb[0].mxu0
        %v521 = vadd.f32 0.0, %v520
        %v522 = vpop.f32.mrb[0].mxu0
        %523 = vmatprep.mubr.bf16.mxu0 0
        %524 = vmatmul.mubr.bf16.gmra.mrb[0].mxu0 %v376
        %v525 = vpop.f32.mrb[0].mxu0
        %v526 = vadd.f32 0.0, %v525
        %v527 = vpop.f32.mrb[0].mxu0
        %v528 = vpop.f32.mrb[0].mxu0
        %v529 = vadd.f32 0.0, %v528
        %v530 = vpop.f32.mrb[0].mxu0
        %531 = vmatprep.mubr.bf16.mxu0 0
        %532 = vmatmul.mubr.bf16.gmra.mrb[0].mxu0 %v377
        %v533 = vpop.f32.mrb[0].mxu0
        %v534 = vadd.f32 0.0, %v533
        %v535 = vpop.f32.mrb[0].mxu0
        %v536 = vpop.f32.mrb[0].mxu0
        %v537 = vadd.f32 0.0, %v536
        %v538 = vpop.f32.mrb[0].mxu0
        %539 = vmatprep.mubr.bf16.mxu0 0
        %540 = vmatmul.mubr.bf16.gmra.mrb[0].mxu0 %v378
        %v541 = vpop.f32.mrb[0].mxu0
        %v542 = vadd.f32 0.0, %v541
        %v543 = vpop.f32.mrb[0].mxu0
        %v544 = vpop.f32.mrb[0].mxu0
        %v545 = vadd.f32 0.0, %v544
        %v546 = vpop.f32.mrb[0].mxu0
        %547 = vmatprep.mubr.bf16.mxu0 0
        %548 = vmatmul.mubr.bf16.gmra.mrb[0].mxu0 %v379
        %v549 = vpop.f32.mrb[0].mxu0
        %v550 = vadd.f32 0.0, %v549
        %v551 = vpop.f32.mrb[0].mxu0
        %v552 = vpop.f32.mrb[0].mxu0
        %v553 = vadd.f32 0.0, %v552
        %v554 = vpop.f32.mrb[0].mxu0
        %555 = vmatprep.mubr.bf16.mxu0 0
        %556 = vmatmul.mubr.bf16.gmra.mrb[0].mxu0 %v380
        %v557 = vpop.f32.mrb[0].mxu0
        %v558 = vadd.f32 0.0, %v557
        %v559 = vpop.f32.mrb[0].mxu0
        %v560 = vpop.f32.mrb[0].mxu0
        %v561 = vadd.f32 0.0, %v560
        %v562 = vpop.f32.mrb[0].mxu0
        %563 = vmatprep.mubr.bf16.mxu0 0
        %564 = vmatmul.mubr.bf16.gmra.mrb[0].mxu0 %v381
        %v565 = vpop.f32.mrb[0].mxu0
        %v566 = vadd.f32 0.0, %v565
        %v567 = vpop.f32.mrb[0].mxu0
        %v568 = vpop.f32.mrb[0].mxu0
        %v569 = vadd.f32 0.0, %v568
        %v570 = vpop.f32.mrb[0].mxu0
        %571 = vmatprep.mubr.bf16.mxu0 0
        %572 = vmatmul.mubr.bf16.gmra.mrb[0].mxu0 %v382
        %v573 = vpop.f32.mrb[0].mxu0
        %v574 = vadd.f32 0.0, %v573
        %v575 = vpop.f32.mrb[0].mxu0
        %v576 = vpop.f32.mrb[0].mxu0
        %v577 = vadd.f32 0.0, %v576
        %v578 = vpop.f32.mrb[0].mxu0
        %579 = vmatprep.mubr.bf16.mxu0 0
        %580 = vmatmul.mubr.bf16.gmra.mrb[0].mxu0 %v383
        %v581 = vpop.f32.mrb[0].mxu0
        %v582 = vadd.f32 0.0, %v581
        %v583 = vpop.f32.mrb[0].mxu0
        %v584 = vpop.f32.mrb[0].mxu0
        %v585 = vadd.f32 0.0, %v584
        %v586 = vpop.f32.mrb[0].mxu0
        %587 = vmatprep.mubr.bf16.mxu0 0
        %588 = vmatmul.mubr.bf16.gmra.mrb[0].mxu0 %v384
        %v589 = vpop.f32.mrb[0].mxu0
        %v590 = vadd.f32 0.0, %v589
        %v591 = vpop.f32.mrb[0].mxu0
        %v592 = vpop.f32.mrb[0].mxu0
        %v593 = vadd.f32 0.0, %v592
        %v594 = vpop.f32.mrb[0].mxu0
        %595 = vmatprep.mubr.bf16.mxu0 0
        %596 = vmatmul.mubr.bf16.gmra.mrb[0].mxu0 %v385
        %v597 = vpop.f32.mrb[0].mxu0
        %v598 = vadd.f32 0.0, %v597
        %v599 = vpop.f32.mrb[0].mxu0
        %v600 = vpop.f32.mrb[0].mxu0
        %v601 = vadd.f32 0.0, %v600
        %v602 = vpop.f32.mrb[0].mxu0
        %603 = vmatprep.mubr.bf16.mxu0 0
        %604 = vmatmul.mubr.bf16.gmra.mrb[0].mxu0 %v386
        %v605 = vpop.f32.mrb[0].mxu0
        %v606 = vadd.f32 0.0, %v605
        %v607 = vpop.f32.mrb[0].mxu0
        %v608 = vpop.f32.mrb[0].mxu0
        %v609 = vadd.f32 0.0, %v608
        %v610 = vpop.f32.mrb[0].mxu0
        %611 = vdwg.mxu0
        %v612 = vld [vmem:[#allocation7] sm:$0x1]
        %v614 = vlaneseq
        %v615 = vshrl.u32 %v614, 7
        %v616 = vsub.s32 0, %v615
        %v617 = vrot.slane %v612, %v616
        %v619 = vmul.f32 %v486, %v617
        %v620 = vmul.f32 %v489, %v617
        %v621 = vmul.f32 %v494, %v617
        %v622 = vmul.f32 %v497, %v617
        %v623 = vmul.f32 %v502, %v617
        %v624 = vmul.f32 %v505, %v617
        %v625 = vmul.f32 %v510, %v617
        %v626 = vmul.f32 %v513, %v617
        %v627 = vmul.f32 %v518, %v617
        %v628 = vmul.f32 %v521, %v617
        %v629 = vmul.f32 %v526, %v617
        %v630 = vmul.f32 %v529, %v617
        %v631 = vmul.f32 %v534, %v617
        %v632 = vmul.f32 %v537, %v617
        %v633 = vmul.f32 %v542, %v617
        %v634 = vmul.f32 %v545, %v617
        %v635 = vmul.f32 %v550, %v617
        %v636 = vmul.f32 %v553, %v617
        %v637 = vmul.f32 %v558, %v617
        %v638 = vmul.f32 %v561, %v617
        %v639 = vmul.f32 %v566, %v617
        %v640 = vmul.f32 %v569, %v617
        %v641 = vmul.f32 %v574, %v617
        %v642 = vmul.f32 %v577, %v617
        %v643 = vmul.f32 %v582, %v617
        %v644 = vmul.f32 %v585, %v617
        %v645 = vmul.f32 %v590, %v617
        %v646 = vmul.f32 %v593, %v617
        %v647 = vmul.f32 %v598, %v617
        %v648 = vmul.f32 %v601, %v617
        %v649 = vmul.f32 %v606, %v617
        %v650 = vmul.f32 %v609, %v617
        %v651 = vld [vmem:[#allocation8] sm:$0x1]
        %v653 = vlaneseq
        %v654 = vshrl.u32 %v653, 7
        %v655 = vsub.s32 0, %v654
        %v656 = vrot.slane %v651, %v655
        %v658 = vadd.f32 %v619, %v656
        %v659 = vadd.f32 %v620, %v656
        %v660 = vadd.f32 %v621, %v656
        %v661 = vadd.f32 %v622, %v656
        %v662 = vadd.f32 %v623, %v656
        %v663 = vadd.f32 %v624, %v656
        %v664 = vadd.f32 %v625, %v656
        %v665 = vadd.f32 %v626, %v656
        %v666 = vadd.f32 %v627, %v656
        %v667 = vadd.f32 %v628, %v656
        %v668 = vadd.f32 %v629, %v656
        %v669 = vadd.f32 %v630, %v656
        %v670 = vadd.f32 %v631, %v656
        %v671 = vadd.f32 %v632, %v656
        %v672 = vadd.f32 %v633, %v656
        %v673 = vadd.f32 %v634, %v656
        %v674 = vadd.f32 %v635, %v656
        %v675 = vadd.f32 %v636, %v656
        %v676 = vadd.f32 %v637, %v656
        %v677 = vadd.f32 %v638, %v656
        %v678 = vadd.f32 %v639, %v656
        %v679 = vadd.f32 %v640, %v656
        %v680 = vadd.f32 %v641, %v656
        %v681 = vadd.f32 %v642, %v656
        %v682 = vadd.f32 %v643, %v656
        %v683 = vadd.f32 %v644, %v656
        %v684 = vadd.f32 %v645, %v656
        %v685 = vadd.f32 %v646, %v656
        %v686 = vadd.f32 %v647, %v656
        %v687 = vadd.f32 %v648, %v656
        %v688 = vadd.f32 %v649, %v656
        %v689 = vadd.f32 %v650, %v656
        %v690 = vmax.f32 %v658, 0.0
        %v691 = vmax.f32 %v659, 0.0
        %v692 = vmax.f32 %v660, 0.0
        %v693 = vmax.f32 %v661, 0.0
        %v694 = vmax.f32 %v662, 0.0
        %v695 = vmax.f32 %v663, 0.0
        %v696 = vmax.f32 %v664, 0.0
        %v697 = vmax.f32 %v665, 0.0
        %v698 = vmax.f32 %v666, 0.0
        %v699 = vmax.f32 %v667, 0.0
        %v700 = vmax.f32 %v668, 0.0
        %v701 = vmax.f32 %v669, 0.0
        %v702 = vmax.f32 %v670, 0.0
        %v703 = vmax.f32 %v671, 0.0
        %v704 = vmax.f32 %v672, 0.0
        %v705 = vmax.f32 %v673, 0.0
        %v706 = vmax.f32 %v674, 0.0
        %v707 = vmax.f32 %v675, 0.0
        %v708 = vmax.f32 %v676, 0.0
        %v709 = vmax.f32 %v677, 0.0
        %v710 = vmax.f32 %v678, 0.0
        %v711 = vmax.f32 %v679, 0.0
        %v712 = vmax.f32 %v680, 0.0
        %v713 = vmax.f32 %v681, 0.0
        %v714 = vmax.f32 %v682, 0.0
        %v715 = vmax.f32 %v683, 0.0
        %v716 = vmax.f32 %v684, 0.0
        %v717 = vmax.f32 %v685, 0.0
        %v718 = vmax.f32 %v686, 0.0
        %v719 = vmax.f32 %v687, 0.0
        %v720 = vmax.f32 %v688, 0.0
        %v721 = vmax.f32 %v689, 0.0
        %v722 = vpack.c.bf16 %v691, %v690
        %v723 = vpack.c.bf16 %v693, %v692
        %v724 = vpack.c.bf16 %v695, %v694
        %v725 = vpack.c.bf16 %v697, %v696
        %v726 = vpack.c.bf16 %v699, %v698
        %v727 = vpack.c.bf16 %v701, %v700
        %v728 = vpack.c.bf16 %v703, %v702
        %v729 = vpack.c.bf16 %v705, %v704
        %v730 = vpack.c.bf16 %v707, %v706
        %v731 = vpack.c.bf16 %v709, %v708
        %v732 = vpack.c.bf16 %v711, %v710
        %v733 = vpack.c.bf16 %v713, %v712
        %v734 = vpack.c.bf16 %v715, %v714
        %v735 = vpack.c.bf16 %v717, %v716
        %v736 = vpack.c.bf16 %v719, %v718
        %v737 = vpack.c.bf16 %v721, %v720
        %v754 = vunpack.c.l.b16 %v722
        %v755 = vunpack.c.h.b16 %v722
        %v756 = vunpack.c.l.b16 %v723
        %v757 = vunpack.c.h.b16 %v723
        %v758 = vunpack.c.l.b16 %v724
        %v759 = vunpack.c.h.b16 %v724
        %v760 = vunpack.c.l.b16 %v725
        %v761 = vunpack.c.h.b16 %v725
        %v762 = vunpack.c.l.b16 %v726
        %v763 = vunpack.c.h.b16 %v726
        %v764 = vunpack.c.l.b16 %v727
        %v765 = vunpack.c.h.b16 %v727
        %v766 = vunpack.c.l.b16 %v728
        %v767 = vunpack.c.h.b16 %v728
        %v768 = vunpack.c.l.b16 %v729
        %v769 = vunpack.c.h.b16 %v729
        %v770 = vunpack.c.l.b16 %v730
        %v771 = vunpack.c.h.b16 %v730
        %v772 = vunpack.c.l.b16 %v731
        %v773 = vunpack.c.h.b16 %v731
        %v774 = vunpack.c.l.b16 %v732
        %v775 = vunpack.c.h.b16 %v732
        %v776 = vunpack.c.l.b16 %v733
        %v777 = vunpack.c.h.b16 %v733
        %v778 = vunpack.c.l.b16 %v734
        %v779 = vunpack.c.h.b16 %v734
        %v780 = vunpack.c.l.b16 %v735
        %v781 = vunpack.c.h.b16 %v735
        %v782 = vunpack.c.l.b16 %v736
        %v783 = vunpack.c.h.b16 %v736
        %v784 = vunpack.c.l.b16 %v737
        %v785 = vunpack.c.h.b16 %v737
        %v786 = vpack.c.b16 %v754, %v754
        %v787 = vpack.c.b16 %v755, %v755
        %v788 = vpack.c.b16 %v756, %v756
        %v789 = vpack.c.b16 %v757, %v757
        %v790 = vpack.c.b16 %v758, %v758
        %v791 = vpack.c.b16 %v759, %v759
        %v792 = vpack.c.b16 %v760, %v760
        %v793 = vpack.c.b16 %v761, %v761
        %v794 = vpack.c.b16 %v762, %v762
        %v795 = vpack.c.b16 %v763, %v763
        %v796 = vpack.c.b16 %v764, %v764
        %v797 = vpack.c.b16 %v765, %v765
        %v798 = vpack.c.b16 %v766, %v766
        %v799 = vpack.c.b16 %v767, %v767
        %v800 = vpack.c.b16 %v768, %v768
        %v801 = vpack.c.b16 %v769, %v769
        %v802 = vpack.c.b16 %v770, %v770
        %v803 = vpack.c.b16 %v771, %v771
        %v804 = vpack.c.b16 %v772, %v772
        %v805 = vpack.c.b16 %v773, %v773
        %v806 = vpack.c.b16 %v774, %v774
        %v807 = vpack.c.b16 %v775, %v775
        %v808 = vpack.c.b16 %v776, %v776
        %v809 = vpack.c.b16 %v777, %v777
        %v810 = vpack.c.b16 %v778, %v778
        %v811 = vpack.c.b16 %v779, %v779
        %v812 = vpack.c.b16 %v780, %v780
        %v813 = vpack.c.b16 %v781, %v781
        %v814 = vpack.c.b16 %v782, %v782
        %v815 = vpack.c.b16 %v783, %v783
        %v816 = vpack.c.b16 %v784, %v784
        %v817 = vpack.c.b16 %v785, %v785
        %850 = vst [vmem:[%s255] sm:$0xf] %v786
        %851 = vst [vmem:[%s255 + $0x4] sm:$0xf] %v787
        %852 = vst [vmem:[%s255 + $0x8] sm:$0xf] %v788
        %853 = vst [vmem:[%s255 + $0xc] sm:$0xf] %v789
        %854 = vst [vmem:[%s255 + $0x10] sm:$0xf] %v790
        %855 = vst [vmem:[%s255 + $0x14] sm:$0xf] %v791
        %856 = vst [vmem:[%s255 + $0x18] sm:$0xf] %v792
        %857 = vst [vmem:[%s255 + $0x1c] sm:$0xf] %v793
        %858 = vst [vmem:[%s255 + $0x20] sm:$0xf] %v794
        %859 = vst [vmem:[%s255 + $0x24] sm:$0xf] %v795
        %860 = vst [vmem:[%s255 + $0x28] sm:$0xf] %v796
        %861 = vst [vmem:[%s255 + $0x2c] sm:$0xf] %v797
        %862 = vst [vmem:[%s255 + $0x30] sm:$0xf] %v798
        %863 = vst [vmem:[%s255 + $0x34] sm:$0xf] %v799
        %864 = vst [vmem:[%s255 + $0x38] sm:$0xf] %v800
        %865 = vst [vmem:[%s255 + $0x3c] sm:$0xf] %v801
        %866 = vst [vmem:[%s255 + $0x40] sm:$0xf] %v802
        %867 = vst [vmem:[%s255 + $0x44] sm:$0xf] %v803
        %868 = vst [vmem:[%s255 + $0x48] sm:$0xf] %v804
        %869 = vst [vmem:[%s255 + $0x4c] sm:$0xf] %v805
        %870 = vst [vmem:[%s255 + $0x50] sm:$0xf] %v806
        %871 = vst [vmem:[%s255 + $0x54] sm:$0xf] %v807
        %872 = vst [vmem:[%s255 + $0x58] sm:$0xf] %v808
        %873 = vst [vmem:[%s255 + $0x5c] sm:$0xf] %v809
        %874 = vst [vmem:[%s255 + $0x60] sm:$0xf] %v810
        %875 = vst [vmem:[%s255 + $0x64] sm:$0xf] %v811
        %876 = vst [vmem:[%s255 + $0x68] sm:$0xf] %v812
        %877 = vst [vmem:[%s255 + $0x6c] sm:$0xf] %v813
        %878 = vst [vmem:[%s255 + $0x70] sm:$0xf] %v814
        %879 = vst [vmem:[%s255 + $0x74] sm:$0xf] %v815
        %880 = vst [vmem:[%s255 + $0x78] sm:$0xf] %v816
        %881 = vst [vmem:[%s255 + $0x7c] sm:$0xf] %v817
        %s882 = sand.u32 %s120, 1
        %s883 = scalar_lea.sflag [#allocation4], %s882
        %s884 = sand.u32 %s120, 1
        %s885 = smul.addr %s884, 128
        %s886 = scalar_lea.vmem [#allocation10], %s885
        // Predicated region
        $region53: #{bottleneck_forward.3} parent=35 // pred_check
          %p887 = pneg %p130
        $region54: #{bottleneck_forward.3} parent=35 // pred_check_branch
          %889 = sbr.rel (%p887) target = $region56
        $region55: #{bottleneck_forward.3} parent=35 // pred_region
          %s890 = smul.u32 32, %s23
          %s892 = ssub.s32 2048, 2048
          %893 = vsyncadd %s883, %s892
          %s894 = smul.addr %s890, 64
          %s895 = scalar_lea.hbm %s4, %s894
          %s896 = sshll.u32 %s886, 4
          %s897 = int_to_ptr.vmem [resolvable:$true] %s896
          %902 = dma.vmem_to_hbm [thread:$0]  %s897, 2048, %s895, %s883, 64, 64, 4
        $region56: #{bottleneck_forward.3} parent=35 // pred_fallthru
          _
      $region36: #{bottleneck_forward.3} parent=5 // pred_fallthru
        _
      %p903 = scmp.le.s32.totalorder 2, %s18
      // Predicated region
      $region57: #{bottleneck_forward.3} parent=5 // pred_check
        %p904 = pneg %p903
      $region58: #{bottleneck_forward.3} parent=5 // pred_check_branch
        %906 = sbr.rel (%p904) target = $region60
      $region59: #{bottleneck_forward.3} parent=5 // pred_region
        %s907 = ssub.s32 %s18, 2
        // Predicated region
        $region61: #{bottleneck_forward.3} parent=59 // pred_check
          %p908 = pneg %p136
        $region62: #{bottleneck_forward.3} parent=59 // pred_check_branch
          %910 = sbr.rel (%p908) target = $region64
        $region63: #{bottleneck_forward.3} parent=59 // pred_region
          %s911 = sand.u32 %s121, 1
          %s912 = scalar_lea.sflag [#allocation4], %s911
          %s913 = sand.u32 %s121, 1
          %s914 = smul.addr %s913, 128
          %s915 = scalar_lea.vmem [#allocation10], %s914
          %916 = dma.done %s912, 2048
        $region64: #{bottleneck_forward.3} parent=59 // pred_fallthru
          _
      $region60: #{bottleneck_forward.3} parent=5 // pred_fallthru
        _
    $region6: #{bottleneck_forward.3} parent=1 // loop_footer
      %s22 = sadd.s32 1, %s18
    $region7: #{bottleneck_forward.3} parent=1 // loop_footer_branch
      %17 = sbr.rel target = $region3
    $region8: #{bottleneck_forward.3} parent=1 // loop_exit
      _
    %917 = vsyncpa [#allocation3], 1
    %s918 = scalar_lea.sflag [#allocation3], 1
    %919 = vsyncpa %s918, 1
    %920 = vsyncpa [#allocation6], 1
    %921 = vsyncpa [#allocation9], 1
    %922 = vsyncpa [#allocation4], 1
    %s923 = scalar_lea.sflag [#allocation4], 1
    %924 = vsyncpa %s923, 1

// kernel: bottleneck_forward.5
$region0: #{bottleneck_forward.5}
  #allocation0 [shape = 'u32[]', space=smem, size = 0x4, offset = 0x4, fixed_abs, tag = 'smem constant byte address 0x4 - core index']
  #allocation1 [shape = 'u32[144,128]{1,0:T(1,128)}', space=vmem, size = 0x12000, scoped, tag = 'internal scratch']
  %s0 = inlined_call_operand.hbm [shape: bf16[512,128], index: 0, kind: input, shape index: {}]
  %s1 = inlined_call_operand.hbm [shape: bf16[128,128], index: 1, kind: input, shape index: {}]
  %s2 = inlined_call_operand.hbm [shape: f32[1,128], index: 2, kind: input, shape index: {}]
  %s3 = inlined_call_operand.hbm [shape: f32[1,128], index: 3, kind: input, shape index: {}]
  %s4 = inlined_call_operand.hbm [shape: bf16[512,128], index: 4, kind: input, shape index: {}]
  %s5 = inlined_call_operand.hbm [shape: bf16[512,128], index: 5, kind: output, shape index: {}]
  %s6 = sld [smem:[#allocation0]]
  $region73: #{bottleneck_forward.5} parent=0
    _
  %s8 = ssub.s32 1, %s6
  %s9 = scalar_select 0, %s8, %s6
  $region1: #{bottleneck_forward.5} parent=0
    #allocation2 [shape = 'u8[131072]{0}', space=vmem, size = 0x20000, scoped, tag = 'input window, operand 0']
    #allocation3 [shape = 's32[2]{0}', space=sflag, size = 0x8, scoped, tag = 'scoped memory for bottleneck_forward.5']
    #allocation4 [shape = 's32[2]{0}', space=sflag, size = 0x8, scoped, tag = 'scoped memory for bottleneck_forward.5']
    #allocation5 [shape = 'u8[32768]{0}', space=vmem, size = 0x8000, scoped, tag = 'input window, operand 1, single buffered']
    #allocation6 [shape = 's32[1]{0}', space=sflag, size = 0x4, scoped, tag = 'scoped memory for bottleneck_forward.5']
    #allocation7 [shape = 'u8[512]{0}', space=vmem, size = 0x400, scoped, tag = 'input window, operand 2, single buffered']
    #allocation8 [shape = 'u8[512]{0}', space=vmem, size = 0x400, scoped, tag = 'input window, operand 3, single buffered']
    #allocation9 [shape = 's32[1]{0}', space=sflag, size = 0x4, scoped, tag = 'scoped memory for bottleneck_forward.5']
    #allocation10 [shape = 'u8[131072]{0}', space=vmem, size = 0x20000, scoped, tag = 'input window, operand 4']
    #allocation11 [shape = 'u8[131072]{0}', space=vmem, size = 0x20000, scoped, tag = 'output window, operand 0']
    %10 = vsyncpa [#allocation3], 0
    %s11 = scalar_lea.sflag [#allocation3], 1
    %12 = vsyncpa %s11, 0
    %13 = vsyncpa [#allocation6], 0
    %14 = vsyncpa [#allocation9], 0
    %15 = vsyncpa [#allocation4], 0
    %s16 = scalar_lea.sflag [#allocation4], 1
    %17 = vsyncpa %s16, 0
    loop: start=0, step=1, limit=4
    $region2: #{bottleneck_forward.5} parent=1 // loop_pre_header
      _
    $region3: #{bottleneck_forward.5} parent=1 // loop_header
      %s19 = sphi 0, %s23
      %p20 = scmp.ge.s32.totalorder %s19, 4
      %s29 = sphi 0, %s31
      %s32 = sphi 0, %s29
      %s33 = sphi 0, %s32
      %s49 = sphi 0, %s33
      %s53 = sphi 0, %s53
      %s55 = sphi 0, %s53
      %s56 = sphi 0, %s55
      %s70 = sphi 0, %s56
      %s74 = sphi 0, %s74
      %s76 = sphi 0, %s74
      %s77 = sphi 0, %s76
      %s91 = sphi 0, %s77
      %s95 = sphi 0, %s95
      %s97 = sphi 0, %s95
      %s98 = sphi 0, %s97
      %s112 = sphi 0, %s98
      %s118 = sphi 0, %s120
      %s121 = sphi 0, %s118
      %s122 = sphi 0, %s121
      %s138 = sphi 0, %s122
      %s144 = sphi 0, %s146
      %s147 = sphi 0, %s144
      %s148 = sphi 0, %s147
      %s164 = sphi 0, %s148
    $region4: #{bottleneck_forward.5} parent=1 // loop_header_branch
      %22 = sbr.rel (%p20) target = $region8
    $region5: #{bottleneck_forward.5} parent=1 // loop_body
      %s24 = ssub.s32 %s19, 1
      %s25 = ssub.s32 %s19, 2
      %s26 = sadd.s32 %s19, 1
      %s27 = ssub.s32 %s19, %s26
      %p28 = scmp.eq.s32.totalorder %s27, 0
      %s30 = sadd.s32 %s29, 1
      %s31 = scalar_select %p28, %s29, %s30
      %p34 = pneg %p28
      %p35 = scmp.eq.s32.totalorder %s19, 1
      %p36 = por %p34, %p35
      %p37 = scmp.ne.s32.totalorder %s29, %s32
      %p38 = scmp.eq.s32.totalorder %s19, 0
      %p39 = por %p37, %p38
      %p40 = scmp.ne.s32.totalorder %s29, %s32
      %p41 = scmp.eq.s32.totalorder %s24, 1
      %p42 = por %p40, %p41
      %p43 = scmp.ne.s32.totalorder %s32, %s33
      %p44 = scmp.eq.s32.totalorder %s24, 0
      %p45 = por %p43, %p44
      %p46 = scmp.ne.s32.totalorder %s32, %s33
      %p47 = scmp.eq.s32.totalorder %s25, 1
      %p48 = por %p46, %p47
      %p50 = scmp.ne.s32.totalorder %s33, %s49
      %p51 = scmp.eq.s32.totalorder %s25, 0
      %p52 = por %p50, %p51
      %s54 = sadd.s32 %s53, 1
      %p57 = scmp.eq.s32.totalorder %s19, 1
      %p58 = scmp.ne.s32.totalorder %s53, %s55
      %p59 = scmp.eq.s32.totalorder %s19, 0
      %p60 = por %p58, %p59
      %p61 = scmp.ne.s32.totalorder %s53, %s55
      %p62 = scmp.eq.s32.totalorder %s24, 1
      %p63 = por %p61, %p62
      %p64 = scmp.ne.s32.totalorder %s55, %s56
      %p65 = scmp.eq.s32.totalorder %s24, 0
      %p66 = por %p64, %p65
      %p67 = scmp.ne.s32.totalorder %s55, %s56
      %p68 = scmp.eq.s32.totalorder %s25, 1
      %p69 = por %p67, %p68
      %p71 = scmp.ne.s32.totalorder %s56, %s70
      %p72 = scmp.eq.s32.totalorder %s25, 0
      %p73 = por %p71, %p72
      %s75 = sadd.s32 %s74, 1
      %p78 = scmp.eq.s32.totalorder %s19, 1
      %p79 = scmp.ne.s32.totalorder %s74, %s76
      %p80 = scmp.eq.s32.totalorder %s19, 0
      %p81 = por %p79, %p80
      %p82 = scmp.ne.s32.totalorder %s74, %s76
      %p83 = scmp.eq.s32.totalorder %s24, 1
      %p84 = por %p82, %p83
      %p85 = scmp.ne.s32.totalorder %s76, %s77
      %p86 = scmp.eq.s32.totalorder %s24, 0
      %p87 = por %p85, %p86
      %p88 = scmp.ne.s32.totalorder %s76, %s77
      %p89 = scmp.eq.s32.totalorder %s25, 1
      %p90 = por %p88, %p89
      %p92 = scmp.ne.s32.totalorder %s77, %s91
      %p93 = scmp.eq.s32.totalorder %s25, 0
      %p94 = por %p92, %p93
      %s96 = sadd.s32 %s95, 1
      %p99 = scmp.eq.s32.totalorder %s19, 1
      %p100 = scmp.ne.s32.totalorder %s95, %s97
      %p101 = scmp.eq.s32.totalorder %s19, 0
      %p102 = por %p100, %p101
      %p103 = scmp.ne.s32.totalorder %s95, %s97
      %p104 = scmp.eq.s32.totalorder %s24, 1
      %p105 = por %p103, %p104
      %p106 = scmp.ne.s32.totalorder %s97, %s98
      %p107 = scmp.eq.s32.totalorder %s24, 0
      %p108 = por %p106, %p107
      %p109 = scmp.ne.s32.totalorder %s97, %s98
      %p110 = scmp.eq.s32.totalorder %s25, 1
      %p111 = por %p109, %p110
      %p113 = scmp.ne.s32.totalorder %s98, %s112
      %p114 = scmp.eq.s32.totalorder %s25, 0
      %p115 = por %p113, %p114
      %s116 = ssub.s32 %s19, %s26
      %p117 = scmp.eq.s32.totalorder %s116, 0
      %s119 = sadd.s32 %s118, 1
      %s120 = scalar_select %p117, %s118, %s119
      %p123 = pneg %p117
      %p124 = scmp.eq.s32.totalorder %s19, 1
      %p125 = por %p123, %p124
      %p126 = scmp.ne.s32.totalorder %s118, %s121
      %p127 = scmp.eq.s32.totalorder %s19, 0
      %p128 = por %p126, %p127
      %p129 = scmp.ne.s32.totalorder %s118, %s121
      %p130 = scmp.eq.s32.totalorder %s24, 1
      %p131 = por %p129, %p130
      %p132 = scmp.ne.s32.totalorder %s121, %s122
      %p133 = scmp.eq.s32.totalorder %s24, 0
      %p134 = por %p132, %p133
      %p135 = scmp.ne.s32.totalorder %s121, %s122
      %p136 = scmp.eq.s32.totalorder %s25, 1
      %p137 = por %p135, %p136
      %p139 = scmp.ne.s32.totalorder %s122, %s138
      %p140 = scmp.eq.s32.totalorder %s25, 0
      %p141 = por %p139, %p140
      %s142 = ssub.s32 %s19, %s26
      %p143 = scmp.eq.s32.totalorder %s142, 0
      %s145 = sadd.s32 %s144, 1
      %s146 = scalar_select %p143, %s144, %s145
      %p149 = pneg %p143
      %p150 = scmp.eq.s32.totalorder %s19, 1
      %p151 = por %p149, %p150
      %p152 = scmp.ne.s32.totalorder %s144, %s147
      %p153 = scmp.eq.s32.totalorder %s19, 0
      %p154 = por %p152, %p153
      %p155 = scmp.ne.s32.totalorder %s144, %s147
      %p156 = scmp.eq.s32.totalorder %s24, 1
      %p157 = por %p155, %p156
      %p158 = scmp.ne.s32.totalorder %s147, %s148
      %p159 = scmp.eq.s32.totalorder %s24, 0
      %p160 = por %p158, %p159
      %p161 = scmp.ne.s32.totalorder %s147, %s148
      %p162 = scmp.eq.s32.totalorder %s25, 1
      %p163 = por %p161, %p162
      %p165 = scmp.ne.s32.totalorder %s148, %s164
      %p166 = scmp.eq.s32.totalorder %s25, 0
      %p167 = por %p165, %p166
      %p168 = scmp.le.s32.totalorder 1, %s19
      %p169 = scmp.lt.s32.totalorder %s19, 3
      %p170 = pnand %p168, %p169
      %p171 = pneg %p170
      // Predicated region
      $region9: #{bottleneck_forward.5} parent=5 // pred_check
        _
      $region10: #{bottleneck_forward.5} parent=5 // pred_check_branch
        %173 = sbr.rel (%p170) target = $region12
      $region11: #{bottleneck_forward.5} parent=5 // pred_region
        %s174 = ssub.s32 %s19, 1
        // Predicated region
        $region13: #{bottleneck_forward.5} parent=11 // pred_check
          %p175 = pneg %p66
        $region14: #{bottleneck_forward.5} parent=11 // pred_check_branch
          %177 = sbr.rel (%p175) target = $region16
        $region15: #{bottleneck_forward.5} parent=11 // pred_region
          %s179 = ssub.s32 1024, 1024
          %180 = vsyncadd [#allocation6], %s179
          %s181 = sshll.u32 [#allocation5], 4
          %s182 = int_to_ptr.vmem [resolvable:$true] %s181
          %187 = dma.hbm_to_vmem [thread:$0]  %s1, 1024, %s182, [#allocation6], 64, 64, 4
        $region16: #{bottleneck_forward.5} parent=11 // pred_fallthru
          _
        // Predicated region
        $region17: #{bottleneck_forward.5} parent=11 // pred_check
          %p188 = pneg %p87
        $region18: #{bottleneck_forward.5} parent=11 // pred_check_branch
          %190 = sbr.rel (%p188) target = $region20
        $region19: #{bottleneck_forward.5} parent=11 // pred_region
          %s192 = ssub.s32 16, 16
          %193 = vsyncadd [#allocation6], %s192
          %s195 = sshll.u32 [#allocation7], 4
          %s196 = int_to_ptr.vmem [resolvable:$true] %s195
          %198 = dma.hbm_to_vmem [thread:$0]  %s2, 16, %s196, [#allocation6]
        $region20: #{bottleneck_forward.5} parent=11 // pred_fallthru
          _
        // Predicated region
        $region21: #{bottleneck_forward.5} parent=11 // pred_check
          %p199 = pneg %p108
        $region22: #{bottleneck_forward.5} parent=11 // pred_check_branch
          %201 = sbr.rel (%p199) target = $region24
        $region23: #{bottleneck_forward.5} parent=11 // pred_region
          %s203 = ssub.s32 16, 16
          %204 = vsyncadd [#allocation9], %s203
          %s206 = sshll.u32 [#allocation8], 4
          %s207 = int_to_ptr.vmem [resolvable:$true] %s206
          %209 = dma.hbm_to_vmem [thread:$0]  %s3, 16, %s207, [#allocation9]
        $region24: #{bottleneck_forward.5} parent=11 // pred_fallthru
          _
      $region12: #{bottleneck_forward.5} parent=5 // pred_fallthru
        _
      %p210 = scmp.lt.s32.totalorder %s19, 2
      // Predicated region
      $region25: #{bottleneck_forward.5} parent=5 // pred_check
        %p211 = pneg %p210
      $region26: #{bottleneck_forward.5} parent=5 // pred_check_branch
        %213 = sbr.rel (%p211) target = $region28
      $region27: #{bottleneck_forward.5} parent=5 // pred_region
        // Predicated region
        $region29: #{bottleneck_forward.5} parent=27 // pred_check
          %p214 = pneg %p39
        $region30: #{bottleneck_forward.5} parent=27 // pred_check_branch
          %216 = sbr.rel (%p214) target = $region32
        $region31: #{bottleneck_forward.5} parent=27 // pred_region
          %s217 = sand.u32 %s19, 1
          %s218 = scalar_lea.sflag [#allocation3], %s217
          %s219 = sand.u32 %s29, 1
          %s220 = smul.addr %s219, 128
          %s221 = scalar_lea.vmem [#allocation2], %s220
          %s222 = smul.u32 32, %s19
          %s224 = ssub.s32 2048, 2048
          %225 = vsyncadd %s218, %s224
          %s226 = smul.addr %s222, 64
          %s227 = scalar_lea.hbm %s0, %s226
          %s228 = sshll.u32 %s221, 4
          %s229 = int_to_ptr.vmem [resolvable:$true] %s228
          %234 = dma.hbm_to_vmem [thread:$0]  %s227, 2048, %s229, %s218, 64, 64, 4
        $region32: #{bottleneck_forward.5} parent=27 // pred_fallthru
          _
        // Predicated region
        $region33: #{bottleneck_forward.5} parent=27 // pred_check
          %p235 = pneg %p128
        $region34: #{bottleneck_forward.5} parent=27 // pred_check_branch
          %237 = sbr.rel (%p235) target = $region36
        $region35: #{bottleneck_forward.5} parent=27 // pred_region
          %s238 = sand.u32 %s19, 1
          %s239 = scalar_lea.sflag [#allocation3], %s238
          %s240 = sand.u32 %s118, 1
          %s241 = smul.addr %s240, 128
          %s242 = scalar_lea.vmem [#allocation10], %s241
          %s243 = smul.u32 32, %s19
          %s245 = ssub.s32 2048, 2048
          %246 = vsyncadd %s239, %s245
          %s247 = smul.addr %s243, 64
          %s248 = scalar_lea.hbm %s4, %s247
          %s249 = sshll.u32 %s242, 4
          %s250 = int_to_ptr.vmem [resolvable:$true] %s249
          %255 = dma.hbm_to_vmem [thread:$0]  %s248, 2048, %s250, %s239, 64, 64, 4
        $region36: #{bottleneck_forward.5} parent=27 // pred_fallthru
          _
      $region28: #{bottleneck_forward.5} parent=5 // pred_fallthru
        _
      %p256 = scmp.le.s32.totalorder 1, %s19
      %p257 = scmp.lt.s32.totalorder %s19, 3
      %p258 = pnand %p256, %p257
      %p259 = pneg %p258
      // Predicated region
      $region37: #{bottleneck_forward.5} parent=5 // pred_check
        _
      $region38: #{bottleneck_forward.5} parent=5 // pred_check_branch
        %261 = sbr.rel (%p258) target = $region40
      $region39: #{bottleneck_forward.5} parent=5 // pred_region
        %s262 = ssub.s32 %s19, 1
        %s263 = sand.u32 %s24, 1
        %s264 = scalar_lea.sflag [#allocation3], %s263
        %s265 = sand.u32 %s32, 1
        %s266 = smul.addr %s265, 128
        %s267 = scalar_lea.vmem [#allocation2], %s266
        // Predicated region
        $region41: #{bottleneck_forward.5} parent=39 // pred_check
          %p268 = pneg %p45
        $region42: #{bottleneck_forward.5} parent=39 // pred_check_branch
          %270 = sbr.rel (%p268) target = $region44
        $region43: #{bottleneck_forward.5} parent=39 // pred_region
          %271 = dma.done %s264, 2048
        $region44: #{bottleneck_forward.5} parent=39 // pred_fallthru
          _
        // Predicated region
        $region45: #{bottleneck_forward.5} parent=39 // pred_check
          %p272 = pneg %p66
        $region46: #{bottleneck_forward.5} parent=39 // pred_check_branch
          %274 = sbr.rel (%p272) target = $region48
        $region47: #{bottleneck_forward.5} parent=39 // pred_region
          %275 = dma.done [#allocation6], 1024
        $region48: #{bottleneck_forward.5} parent=39 // pred_fallthru
          _
        // Predicated region
        $region49: #{bottleneck_forward.5} parent=39 // pred_check
          %p276 = pneg %p87
        $region50: #{bottleneck_forward.5} parent=39 // pred_check_branch
          %278 = sbr.rel (%p276) target = $region52
        $region51: #{bottleneck_forward.5} parent=39 // pred_region
          %279 = dma.done [#allocation6], 16
        $region52: #{bottleneck_forward.5} parent=39 // pred_fallthru
          _
        // Predicated region
        $region53: #{bottleneck_forward.5} parent=39 // pred_check
          %p280 = pneg %p108
        $region54: #{bottleneck_forward.5} parent=39 // pred_check_branch
          %282 = sbr.rel (%p280) target = $region56
        $region55: #{bottleneck_forward.5} parent=39 // pred_region
          %283 = dma.done [#allocation9], 16
        $region56: #{bottleneck_forward.5} parent=39 // pred_fallthru
          _
        %s284 = sand.u32 %s24, 1
        %s285 = scalar_lea.sflag [#allocation3], %s284
        %s286 = sand.u32 %s121, 1
        %s287 = smul.addr %s286, 128
        %s288 = scalar_lea.vmem [#allocation10], %s287
        // Predicated region
        $region57: #{bottleneck_forward.5} parent=39 // pred_check
          %p289 = pneg %p134
        $region58: #{bottleneck_forward.5} parent=39 // pred_check_branch
          %291 = sbr.rel (%p289) target = $region60
        $region59: #{bottleneck_forward.5} parent=39 // pred_region
          %292 = dma.done %s285, 2048
        $region60: #{bottleneck_forward.5} parent=39 // pred_fallthru
          _
        %s293 = sand.u32 %s24, 1
        %s294 = scalar_lea.sflag [#allocation3], %s293
        %s295 = sand.u32 %s32, 1
        %s296 = smul.addr %s295, 128
        %s297 = scalar_lea.vmem [#allocation2], %s296
        %p298 = pneg %p45
        %p299 = pneg %p42
        %p300 = pneg %p66
        %p301 = pneg %p63
        %p302 = pneg %p87
        %p303 = pneg %p84
        %p304 = pneg %p108
        %p305 = pneg %p105
        %s306 = sand.u32 %s24, 1
        %s307 = scalar_lea.sflag [#allocation3], %s306
        %s308 = sand.u32 %s121, 1
        %s309 = smul.addr %s308, 128
        %s310 = scalar_lea.vmem [#allocation10], %s309
        %p311 = pneg %p134
        %p312 = pneg %p131
        %p313 = pneg %p160
        %p314 = pneg %p157
        %s315 = sand.u32 %s147, 1
        %s316 = scalar_lea.sflag [#allocation4], %s315
        %s317 = sand.u32 %s147, 1
        %s318 = smul.addr %s317, 128
        %s319 = scalar_lea.vmem [#allocation11], %s318
        %s320 = smul.u32 32, %s24
        %s321 = smul.u32 32, %s24
        %s322 = smul.u32 32, %s24
        %v324 = vld [vmem:[%s267] sm:$0xf]
        %v325 = vld [vmem:[%s267 + $0x4] sm:$0xf]
        %v326 = vld [vmem:[%s267 + $0x8] sm:$0xf]
        %v327 = vld [vmem:[%s267 + $0xc] sm:$0xf]
        %v328 = vld [vmem:[%s267 + $0x10] sm:$0xf]
        %v329 = vld [vmem:[%s267 + $0x14] sm:$0xf]
        %v330 = vld [vmem:[%s267 + $0x18] sm:$0xf]
        %v331 = vld [vmem:[%s267 + $0x1c] sm:$0xf]
        %v332 = vld [vmem:[%s267 + $0x20] sm:$0xf]
        %v333 = vld [vmem:[%s267 + $0x24] sm:$0xf]
        %v334 = vld [vmem:[%s267 + $0x28] sm:$0xf]
        %v335 = vld [vmem:[%s267 + $0x2c] sm:$0xf]
        %v336 = vld [vmem:[%s267 + $0x30] sm:$0xf]
        %v337 = vld [vmem:[%s267 + $0x34] sm:$0xf]
        %v338 = vld [vmem:[%s267 + $0x38] sm:$0xf]
        %v339 = vld [vmem:[%s267 + $0x3c] sm:$0xf]
        %v340 = vld [vmem:[%s267 + $0x40] sm:$0xf]
        %v341 = vld [vmem:[%s267 + $0x44] sm:$0xf]
        %v342 = vld [vmem:[%s267 + $0x48] sm:$0xf]
        %v343 = vld [vmem:[%s267 + $0x4c] sm:$0xf]
        %v344 = vld [vmem:[%s267 + $0x50] sm:$0xf]
        %v345 = vld [vmem:[%s267 + $0x54] sm:$0xf]
        %v346 = vld [vmem:[%s267 + $0x58] sm:$0xf]
        %v347 = vld [vmem:[%s267 + $0x5c] sm:$0xf]
        %v348 = vld [vmem:[%s267 + $0x60] sm:$0xf]
        %v349 = vld [vmem:[%s267 + $0x64] sm:$0xf]
        %v350 = vld [vmem:[%s267 + $0x68] sm:$0xf]
        %v351 = vld [vmem:[%s267 + $0x6c] sm:$0xf]
        %v352 = vld [vmem:[%s267 + $0x70] sm:$0xf]
        %v353 = vld [vmem:[%s267 + $0x74] sm:$0xf]
        %v354 = vld [vmem:[%s267 + $0x78] sm:$0xf]
        %v355 = vld [vmem:[%s267 + $0x7c] sm:$0xf]
        %v356 = vld [vmem:[#allocation5] sm:$0xf]
        %v357 = vld [vmem:[#allocation5 + $0x4] sm:$0xf]
        %v358 = vld [vmem:[#allocation5 + $0x8] sm:$0xf]
        %v359 = vld [vmem:[#allocation5 + $0xc] sm:$0xf]
        %v360 = vld [vmem:[#allocation5 + $0x10] sm:$0xf]
        %v361 = vld [vmem:[#allocation5 + $0x14] sm:$0xf]
        %v362 = vld [vmem:[#allocation5 + $0x18] sm:$0xf]
        %v363 = vld [vmem:[#allocation5 + $0x1c] sm:$0xf]
        %v364 = vld [vmem:[#allocation5 + $0x20] sm:$0xf]
        %v365 = vld [vmem:[#allocation5 + $0x24] sm:$0xf]
        %v366 = vld [vmem:[#allocation5 + $0x28] sm:$0xf]
        %v367 = vld [vmem:[#allocation5 + $0x2c] sm:$0xf]
        %v368 = vld [vmem:[#allocation5 + $0x30] sm:$0xf]
        %v369 = vld [vmem:[#allocation5 + $0x34] sm:$0xf]
        %v370 = vld [vmem:[#allocation5 + $0x38] sm:$0xf]
        %v371 = vld [vmem:[#allocation5 + $0x3c] sm:$0xf]
        %v404 = vunpack.c.l.b16 %v324
        %v405 = vunpack.c.l.b16 %v325
        %v406 = vunpack.c.l.b16 %v326
        %v407 = vunpack.c.l.b16 %v327
        %v408 = vunpack.c.l.b16 %v328
        %v409 = vunpack.c.l.b16 %v329
        %v410 = vunpack.c.l.b16 %v330
        %v411 = vunpack.c.l.b16 %v331
        %v412 = vunpack.c.l.b16 %v332
        %v413 = vunpack.c.l.b16 %v333
        %v414 = vunpack.c.l.b16 %v334
        %v415 = vunpack.c.l.b16 %v335
        %v416 = vunpack.c.l.b16 %v336
        %v417 = vunpack.c.l.b16 %v337
        %v418 = vunpack.c.l.b16 %v338
        %v419 = vunpack.c.l.b16 %v339
        %v420 = vunpack.c.l.b16 %v340
        %v421 = vunpack.c.l.b16 %v341
        %v422 = vunpack.c.l.b16 %v342
        %v423 = vunpack.c.l.b16 %v343
        %v424 = vunpack.c.l.b16 %v344
        %v425 = vunpack.c.l.b16 %v345
        %v426 = vunpack.c.l.b16 %v346
        %v427 = vunpack.c.l.b16 %v347
        %v428 = vunpack.c.l.b16 %v348
        %v429 = vunpack.c.l.b16 %v349
        %v430 = vunpack.c.l.b16 %v350
        %v431 = vunpack.c.l.b16 %v351
        %v432 = vunpack.c.l.b16 %v352
        %v433 = vunpack.c.l.b16 %v353
        %v434 = vunpack.c.l.b16 %v354
        %v435 = vunpack.c.l.b16 %v355
        %v436 = vpack.c.b16 %v405, %v404
        %v437 = vpack.c.b16 %v407, %v406
        %v438 = vpack.c.b16 %v409, %v408
        %v439 = vpack.c.b16 %v411, %v410
        %v440 = vpack.c.b16 %v413, %v412
        %v441 = vpack.c.b16 %v415, %v414
        %v442 = vpack.c.b16 %v417, %v416
        %v443 = vpack.c.b16 %v419, %v418
        %v444 = vpack.c.b16 %v421, %v420
        %v445 = vpack.c.b16 %v423, %v422
        %v446 = vpack.c.b16 %v425, %v424
        %v447 = vpack.c.b16 %v427, %v426
        %v448 = vpack.c.b16 %v429, %v428
        %v449 = vpack.c.b16 %v431, %v430
        %v450 = vpack.c.b16 %v433, %v432
        %v451 = vpack.c.b16 %v435, %v434
        %v484 = vunpack.c.l.b16 %v356
        %v485 = vunpack.c.l.b16 %v357
        %v486 = vunpack.c.l.b16 %v358
        %v487 = vunpack.c.l.b16 %v359
        %v488 = vunpack.c.l.b16 %v360
        %v489 = vunpack.c.l.b16 %v361
        %v490 = vunpack.c.l.b16 %v362
        %v491 = vunpack.c.l.b16 %v363
        %v492 = vunpack.c.l.b16 %v364
        %v493 = vunpack.c.l.b16 %v365
        %v494 = vunpack.c.l.b16 %v366
        %v495 = vunpack.c.l.b16 %v367
        %v496 = vunpack.c.l.b16 %v368
        %v497 = vunpack.c.l.b16 %v369
        %v498 = vunpack.c.l.b16 %v370
        %v499 = vunpack.c.l.b16 %v371
        %v500 = vpack.c.b16 %v485, %v484
        %v501 = vpack.c.b16 %v487, %v486
        %v502 = vpack.c.b16 %v489, %v488
        %v503 = vpack.c.b16 %v491, %v490
        %v504 = vpack.c.b16 %v493, %v492
        %v505 = vpack.c.b16 %v495, %v494
        %v506 = vpack.c.b16 %v497, %v496
        %v507 = vpack.c.b16 %v499, %v498
        %516 = vmatprep.subr.bf16.mxu0 0
        %517 = vmatpush1.bf16.msra.mxu0 %v500
        %518 = vmatprep.subr.bf16.mxu0 0
        %519 = vmatpush1.bf16.msra.mxu0 %v501
        %520 = vmatprep.subr.bf16.mxu0 0
        %521 = vmatpush1.bf16.msra.mxu0 %v502
        %522 = vmatprep.subr.bf16.mxu0 0
        %523 = vmatpush1.bf16.msra.mxu0 %v503
        %524 = vmatprep.subr.bf16.mxu0 0
        %525 = vmatpush1.bf16.msra.mxu0 %v504
        %526 = vmatprep.subr.bf16.mxu0 0
        %527 = vmatpush1.bf16.msra.mxu0 %v505
        %528 = vmatprep.subr.bf16.mxu0 0
        %529 = vmatpush1.bf16.msra.mxu0 %v506
        %530 = vmatprep.subr.bf16.mxu0 0
        %531 = vmatpush1.bf16.msra.mxu0 %v507
        %532 = vmatprep.subr.bf16.mxu0 0
        %533 = vmatpush1.bf16.msra.mxu0 0
        %534 = vmatprep.subr.bf16.mxu0 0
        %535 = vmatpush1.bf16.msra.mxu0 0
        %536 = vmatprep.subr.bf16.mxu0 0
        %537 = vmatpush1.bf16.msra.mxu0 0
        %538 = vmatprep.subr.bf16.mxu0 0
        %539 = vmatpush1.bf16.msra.mxu0 0
        %540 = vmatprep.subr.bf16.mxu0 0
        %541 = vmatpush1.bf16.msra.mxu0 0
        %542 = vmatprep.subr.bf16.mxu0 0
        %543 = vmatpush1.bf16.msra.mxu0 0
        %544 = vmatprep.subr.bf16.mxu0 0
        %545 = vmatpush1.bf16.msra.mxu0 0
        %546 = vmatprep.subr.bf16.mxu0 0
        %547 = vmatpush1.bf16.msra.mxu0 0
        %548 = vmatprep.mubr.bf16.mxu0 0
        %549 = vmatmul.mubr.bf16.gmra.mrb[0].mxu0 %v436
        %v550 = vpop.f32.mrb[0].mxu0
        %v551 = vadd.f32 0.0, %v550
        %v552 = vpop.f32.mrb[0].mxu0
        %v553 = vpop.f32.mrb[0].mxu0
        %v554 = vadd.f32 0.0, %v553
        %v555 = vpop.f32.mrb[0].mxu0
        %556 = vmatprep.mubr.bf16.mxu0 0
        %557 = vmatmul.mubr.bf16.gmra.mrb[0].mxu0 %v437
        %v558 = vpop.f32.mrb[0].mxu0
        %v559 = vadd.f32 0.0, %v558
        %v560 = vpop.f32.mrb[0].mxu0
        %v561 = vpop.f32.mrb[0].mxu0
        %v562 = vadd.f32 0.0, %v561
        %v563 = vpop.f32.mrb[0].mxu0
        %564 = vmatprep.mubr.bf16.mxu0 0
        %565 = vmatmul.mubr.bf16.gmra.mrb[0].mxu0 %v438
        %v566 = vpop.f32.mrb[0].mxu0
        %v567 = vadd.f32 0.0, %v566
        %v568 = vpop.f32.mrb[0].mxu0
        %v569 = vpop.f32.mrb[0].mxu0
        %v570 = vadd.f32 0.0, %v569
        %v571 = vpop.f32.mrb[0].mxu0
        %572 = vmatprep.mubr.bf16.mxu0 0
        %573 = vmatmul.mubr.bf16.gmra.mrb[0].mxu0 %v439
        %v574 = vpop.f32.mrb[0].mxu0
        %v575 = vadd.f32 0.0, %v574
        %v576 = vpop.f32.mrb[0].mxu0
        %v577 = vpop.f32.mrb[0].mxu0
        %v578 = vadd.f32 0.0, %v577
        %v579 = vpop.f32.mrb[0].mxu0
        %580 = vmatprep.mubr.bf16.mxu0 0
        %581 = vmatmul.mubr.bf16.gmra.mrb[0].mxu0 %v440
        %v582 = vpop.f32.mrb[0].mxu0
        %v583 = vadd.f32 0.0, %v582
        %v584 = vpop.f32.mrb[0].mxu0
        %v585 = vpop.f32.mrb[0].mxu0
        %v586 = vadd.f32 0.0, %v585
        %v587 = vpop.f32.mrb[0].mxu0
        %588 = vmatprep.mubr.bf16.mxu0 0
        %589 = vmatmul.mubr.bf16.gmra.mrb[0].mxu0 %v441
        %v590 = vpop.f32.mrb[0].mxu0
        %v591 = vadd.f32 0.0, %v590
        %v592 = vpop.f32.mrb[0].mxu0
        %v593 = vpop.f32.mrb[0].mxu0
        %v594 = vadd.f32 0.0, %v593
        %v595 = vpop.f32.mrb[0].mxu0
        %596 = vmatprep.mubr.bf16.mxu0 0
        %597 = vmatmul.mubr.bf16.gmra.mrb[0].mxu0 %v442
        %v598 = vpop.f32.mrb[0].mxu0
        %v599 = vadd.f32 0.0, %v598
        %v600 = vpop.f32.mrb[0].mxu0
        %v601 = vpop.f32.mrb[0].mxu0
        %v602 = vadd.f32 0.0, %v601
        %v603 = vpop.f32.mrb[0].mxu0
        %604 = vmatprep.mubr.bf16.mxu0 0
        %605 = vmatmul.mubr.bf16.gmra.mrb[0].mxu0 %v443
        %v606 = vpop.f32.mrb[0].mxu0
        %v607 = vadd.f32 0.0, %v606
        %v608 = vpop.f32.mrb[0].mxu0
        %v609 = vpop.f32.mrb[0].mxu0
        %v610 = vadd.f32 0.0, %v609
        %v611 = vpop.f32.mrb[0].mxu0
        %612 = vmatprep.mubr.bf16.mxu0 0
        %613 = vmatmul.mubr.bf16.gmra.mrb[0].mxu0 %v444
        %v614 = vpop.f32.mrb[0].mxu0
        %v615 = vadd.f32 0.0, %v614
        %v616 = vpop.f32.mrb[0].mxu0
        %v617 = vpop.f32.mrb[0].mxu0
        %v618 = vadd.f32 0.0, %v617
        %v619 = vpop.f32.mrb[0].mxu0
        %620 = vmatprep.mubr.bf16.mxu0 0
        %621 = vmatmul.mubr.bf16.gmra.mrb[0].mxu0 %v445
        %v622 = vpop.f32.mrb[0].mxu0
        %v623 = vadd.f32 0.0, %v622
        %v624 = vpop.f32.mrb[0].mxu0
        %v625 = vpop.f32.mrb[0].mxu0
        %v626 = vadd.f32 0.0, %v625
        %v627 = vpop.f32.mrb[0].mxu0
        %628 = vmatprep.mubr.bf16.mxu0 0
        %629 = vmatmul.mubr.bf16.gmra.mrb[0].mxu0 %v446
        %v630 = vpop.f32.mrb[0].mxu0
        %v631 = vadd.f32 0.0, %v630
        %v632 = vpop.f32.mrb[0].mxu0
        %v633 = vpop.f32.mrb[0].mxu0
        %v634 = vadd.f32 0.0, %v633
        %v635 = vpop.f32.mrb[0].mxu0
        %636 = vmatprep.mubr.bf16.mxu0 0
        %637 = vmatmul.mubr.bf16.gmra.mrb[0].mxu0 %v447
        %v638 = vpop.f32.mrb[0].mxu0
        %v639 = vadd.f32 0.0, %v638
        %v640 = vpop.f32.mrb[0].mxu0
        %v641 = vpop.f32.mrb[0].mxu0
        %v642 = vadd.f32 0.0, %v641
        %v643 = vpop.f32.mrb[0].mxu0
        %644 = vmatprep.mubr.bf16.mxu0 0
        %645 = vmatmul.mubr.bf16.gmra.mrb[0].mxu0 %v448
        %v646 = vpop.f32.mrb[0].mxu0
        %v647 = vadd.f32 0.0, %v646
        %v648 = vpop.f32.mrb[0].mxu0
        %v649 = vpop.f32.mrb[0].mxu0
        %v650 = vadd.f32 0.0, %v649
        %v651 = vpop.f32.mrb[0].mxu0
        %652 = vmatprep.mubr.bf16.mxu0 0
        %653 = vmatmul.mubr.bf16.gmra.mrb[0].mxu0 %v449
        %v654 = vpop.f32.mrb[0].mxu0
        %v655 = vadd.f32 0.0, %v654
        %v656 = vpop.f32.mrb[0].mxu0
        %v657 = vpop.f32.mrb[0].mxu0
        %v658 = vadd.f32 0.0, %v657
        %v659 = vpop.f32.mrb[0].mxu0
        %660 = vmatprep.mubr.bf16.mxu0 0
        %661 = vmatmul.mubr.bf16.gmra.mrb[0].mxu0 %v450
        %v662 = vpop.f32.mrb[0].mxu0
        %v663 = vadd.f32 0.0, %v662
        %v664 = vpop.f32.mrb[0].mxu0
        %v665 = vpop.f32.mrb[0].mxu0
        %v666 = vadd.f32 0.0, %v665
        %v667 = vpop.f32.mrb[0].mxu0
        %668 = vmatprep.mubr.bf16.mxu0 0
        %669 = vmatmul.mubr.bf16.gmra.mrb[0].mxu0 %v451
        %v670 = vpop.f32.mrb[0].mxu0
        %v671 = vadd.f32 0.0, %v670
        %v672 = vpop.f32.mrb[0].mxu0
        %v673 = vpop.f32.mrb[0].mxu0
        %v674 = vadd.f32 0.0, %v673
        %v675 = vpop.f32.mrb[0].mxu0
        %676 = vdwg.mxu0
        %v677 = vld [vmem:[#allocation7] sm:$0x1]
        %v679 = vlaneseq
        %v680 = vshrl.u32 %v679, 7
        %v681 = vsub.s32 0, %v680
        %v682 = vrot.slane %v677, %v681
        %v684 = vmul.f32 %v551, %v682
        %v685 = vmul.f32 %v554, %v682
        %v686 = vmul.f32 %v559, %v682
        %v687 = vmul.f32 %v562, %v682
        %v688 = vmul.f32 %v567, %v682
        %v689 = vmul.f32 %v570, %v682
        %v690 = vmul.f32 %v575, %v682
        %v691 = vmul.f32 %v578, %v682
        %v692 = vmul.f32 %v583, %v682
        %v693 = vmul.f32 %v586, %v682
        %v694 = vmul.f32 %v591, %v682
        %v695 = vmul.f32 %v594, %v682
        %v696 = vmul.f32 %v599, %v682
        %v697 = vmul.f32 %v602, %v682
        %v698 = vmul.f32 %v607, %v682
        %v699 = vmul.f32 %v610, %v682
        %v700 = vmul.f32 %v615, %v682
        %v701 = vmul.f32 %v618, %v682
        %v702 = vmul.f32 %v623, %v682
        %v703 = vmul.f32 %v626, %v682
        %v704 = vmul.f32 %v631, %v682
        %v705 = vmul.f32 %v634, %v682
        %v706 = vmul.f32 %v639, %v682
        %v707 = vmul.f32 %v642, %v682
        %v708 = vmul.f32 %v647, %v682
        %v709 = vmul.f32 %v650, %v682
        %v710 = vmul.f32 %v655, %v682
        %v711 = vmul.f32 %v658, %v682
        %v712 = vmul.f32 %v663, %v682
        %v713 = vmul.f32 %v666, %v682
        %v714 = vmul.f32 %v671, %v682
        %v715 = vmul.f32 %v674, %v682
        %v716 = vld [vmem:[#allocation8] sm:$0x1]
        %v718 = vlaneseq
        %v719 = vshrl.u32 %v718, 7
        %v720 = vsub.s32 0, %v719
        %v721 = vrot.slane %v716, %v720
        %v723 = vadd.f32 %v684, %v721
        %v724 = vadd.f32 %v685, %v721
        %v725 = vadd.f32 %v686, %v721
        %v726 = vadd.f32 %v687, %v721
        %v727 = vadd.f32 %v688, %v721
        %v728 = vadd.f32 %v689, %v721
        %v729 = vadd.f32 %v690, %v721
        %v730 = vadd.f32 %v691, %v721
        %v731 = vadd.f32 %v692, %v721
        %v732 = vadd.f32 %v693, %v721
        %v733 = vadd.f32 %v694, %v721
        %v734 = vadd.f32 %v695, %v721
        %v735 = vadd.f32 %v696, %v721
        %v736 = vadd.f32 %v697, %v721
        %v737 = vadd.f32 %v698, %v721
        %v738 = vadd.f32 %v699, %v721
        %v739 = vadd.f32 %v700, %v721
        %v740 = vadd.f32 %v701, %v721
        %v741 = vadd.f32 %v702, %v721
        %v742 = vadd.f32 %v703, %v721
        %v743 = vadd.f32 %v704, %v721
        %v744 = vadd.f32 %v705, %v721
        %v745 = vadd.f32 %v706, %v721
        %v746 = vadd.f32 %v707, %v721
        %v747 = vadd.f32 %v708, %v721
        %v748 = vadd.f32 %v709, %v721
        %v749 = vadd.f32 %v710, %v721
        %v750 = vadd.f32 %v711, %v721
        %v751 = vadd.f32 %v712, %v721
        %v752 = vadd.f32 %v713, %v721
        %v753 = vadd.f32 %v714, %v721
        %v754 = vadd.f32 %v715, %v721
        %v755 = vld [vmem:[%s288] sm:$0xf]
        %v756 = vld [vmem:[%s288 + $0x4] sm:$0xf]
        %v757 = vld [vmem:[%s288 + $0x8] sm:$0xf]
        %v758 = vld [vmem:[%s288 + $0xc] sm:$0xf]
        %v759 = vld [vmem:[%s288 + $0x10] sm:$0xf]
        %v760 = vld [vmem:[%s288 + $0x14] sm:$0xf]
        %v761 = vld [vmem:[%s288 + $0x18] sm:$0xf]
        %v762 = vld [vmem:[%s288 + $0x1c] sm:$0xf]
        %v763 = vld [vmem:[%s288 + $0x20] sm:$0xf]
        %v764 = vld [vmem:[%s288 + $0x24] sm:$0xf]
        %v765 = vld [vmem:[%s288 + $0x28] sm:$0xf]
        %v766 = vld [vmem:[%s288 + $0x2c] sm:$0xf]
        %v767 = vld [vmem:[%s288 + $0x30] sm:$0xf]
        %v768 = vld [vmem:[%s288 + $0x34] sm:$0xf]
        %v769 = vld [vmem:[%s288 + $0x38] sm:$0xf]
        %v770 = vld [vmem:[%s288 + $0x3c] sm:$0xf]
        %v771 = vld [vmem:[%s288 + $0x40] sm:$0xf]
        %v772 = vld [vmem:[%s288 + $0x44] sm:$0xf]
        %v773 = vld [vmem:[%s288 + $0x48] sm:$0xf]
        %v774 = vld [vmem:[%s288 + $0x4c] sm:$0xf]
        %v775 = vld [vmem:[%s288 + $0x50] sm:$0xf]
        %v776 = vld [vmem:[%s288 + $0x54] sm:$0xf]
        %v777 = vld [vmem:[%s288 + $0x58] sm:$0xf]
        %v778 = vld [vmem:[%s288 + $0x5c] sm:$0xf]
        %v779 = vld [vmem:[%s288 + $0x60] sm:$0xf]
        %v780 = vld [vmem:[%s288 + $0x64] sm:$0xf]
        %v781 = vld [vmem:[%s288 + $0x68] sm:$0xf]
        %v782 = vld [vmem:[%s288 + $0x6c] sm:$0xf]
        %v783 = vld [vmem:[%s288 + $0x70] sm:$0xf]
        %v784 = vld [vmem:[%s288 + $0x74] sm:$0xf]
        %v785 = vld [vmem:[%s288 + $0x78] sm:$0xf]
        %v786 = vld [vmem:[%s288 + $0x7c] sm:$0xf]
        %v787 = vunpack.c.l.bf16 %v755
        %v788 = vunpack.c.l.bf16 %v756
        %v789 = vunpack.c.l.bf16 %v757
        %v790 = vunpack.c.l.bf16 %v758
        %v791 = vunpack.c.l.bf16 %v759
        %v792 = vunpack.c.l.bf16 %v760
        %v793 = vunpack.c.l.bf16 %v761
        %v794 = vunpack.c.l.bf16 %v762
        %v795 = vunpack.c.l.bf16 %v763
        %v796 = vunpack.c.l.bf16 %v764
        %v797 = vunpack.c.l.bf16 %v765
        %v798 = vunpack.c.l.bf16 %v766
        %v799 = vunpack.c.l.bf16 %v767
        %v800 = vunpack.c.l.bf16 %v768
        %v801 = vunpack.c.l.bf16 %v769
        %v802 = vunpack.c.l.bf16 %v770
        %v803 = vunpack.c.l.bf16 %v771
        %v804 = vunpack.c.l.bf16 %v772
        %v805 = vunpack.c.l.bf16 %v773
        %v806 = vunpack.c.l.bf16 %v774
        %v807 = vunpack.c.l.bf16 %v775
        %v808 = vunpack.c.l.bf16 %v776
        %v809 = vunpack.c.l.bf16 %v777
        %v810 = vunpack.c.l.bf16 %v778
        %v811 = vunpack.c.l.bf16 %v779
        %v812 = vunpack.c.l.bf16 %v780
        %v813 = vunpack.c.l.bf16 %v781
        %v814 = vunpack.c.l.bf16 %v782
        %v815 = vunpack.c.l.bf16 %v783
        %v816 = vunpack.c.l.bf16 %v784
        %v817 = vunpack.c.l.bf16 %v785
        %v818 = vunpack.c.l.bf16 %v786
        %v819 = vadd.f32 %v723, %v787
        %v820 = vadd.f32 %v724, %v788
        %v821 = vadd.f32 %v725, %v789
        %v822 = vadd.f32 %v726, %v790
        %v823 = vadd.f32 %v727, %v791
        %v824 = vadd.f32 %v728, %v792
        %v825 = vadd.f32 %v729, %v793
        %v826 = vadd.f32 %v730, %v794
        %v827 = vadd.f32 %v731, %v795
        %v828 = vadd.f32 %v732, %v796
        %v829 = vadd.f32 %v733, %v797
        %v830 = vadd.f32 %v734, %v798
        %v831 = vadd.f32 %v735, %v799
        %v832 = vadd.f32 %v736, %v800
        %v833 = vadd.f32 %v737, %v801
        %v834 = vadd.f32 %v738, %v802
        %v835 = vadd.f32 %v739, %v803
        %v836 = vadd.f32 %v740, %v804
        %v837 = vadd.f32 %v741, %v805
        %v838 = vadd.f32 %v742, %v806
        %v839 = vadd.f32 %v743, %v807
        %v840 = vadd.f32 %v744, %v808
        %v841 = vadd.f32 %v745, %v809
        %v842 = vadd.f32 %v746, %v810
        %v843 = vadd.f32 %v747, %v811
        %v844 = vadd.f32 %v748, %v812
        %v845 = vadd.f32 %v749, %v813
        %v846 = vadd.f32 %v750, %v814
        %v847 = vadd.f32 %v751, %v815
        %v848 = vadd.f32 %v752, %v816
        %v849 = vadd.f32 %v753, %v817
        %v850 = vadd.f32 %v754, %v818
        %v851 = vmax.f32 %v819, 0.0
        %v852 = vmax.f32 %v820, 0.0
        %v853 = vmax.f32 %v821, 0.0
        %v854 = vmax.f32 %v822, 0.0
        %v855 = vmax.f32 %v823, 0.0
        %v856 = vmax.f32 %v824, 0.0
        %v857 = vmax.f32 %v825, 0.0
        %v858 = vmax.f32 %v826, 0.0
        %v859 = vmax.f32 %v827, 0.0
        %v860 = vmax.f32 %v828, 0.0
        %v861 = vmax.f32 %v829, 0.0
        %v862 = vmax.f32 %v830, 0.0
        %v863 = vmax.f32 %v831, 0.0
        %v864 = vmax.f32 %v832, 0.0
        %v865 = vmax.f32 %v833, 0.0
        %v866 = vmax.f32 %v834, 0.0
        %v867 = vmax.f32 %v835, 0.0
        %v868 = vmax.f32 %v836, 0.0
        %v869 = vmax.f32 %v837, 0.0
        %v870 = vmax.f32 %v838, 0.0
        %v871 = vmax.f32 %v839, 0.0
        %v872 = vmax.f32 %v840, 0.0
        %v873 = vmax.f32 %v841, 0.0
        %v874 = vmax.f32 %v842, 0.0
        %v875 = vmax.f32 %v843, 0.0
        %v876 = vmax.f32 %v844, 0.0
        %v877 = vmax.f32 %v845, 0.0
        %v878 = vmax.f32 %v846, 0.0
        %v879 = vmax.f32 %v847, 0.0
        %v880 = vmax.f32 %v848, 0.0
        %v881 = vmax.f32 %v849, 0.0
        %v882 = vmax.f32 %v850, 0.0
        %v883 = vpack.c.bf16 %v852, %v851
        %v884 = vpack.c.bf16 %v854, %v853
        %v885 = vpack.c.bf16 %v856, %v855
        %v886 = vpack.c.bf16 %v858, %v857
        %v887 = vpack.c.bf16 %v860, %v859
        %v888 = vpack.c.bf16 %v862, %v861
        %v889 = vpack.c.bf16 %v864, %v863
        %v890 = vpack.c.bf16 %v866, %v865
        %v891 = vpack.c.bf16 %v868, %v867
        %v892 = vpack.c.bf16 %v870, %v869
        %v893 = vpack.c.bf16 %v872, %v871
        %v894 = vpack.c.bf16 %v874, %v873
        %v895 = vpack.c.bf16 %v876, %v875
        %v896 = vpack.c.bf16 %v878, %v877
        %v897 = vpack.c.bf16 %v880, %v879
        %v898 = vpack.c.bf16 %v882, %v881
        %v915 = vunpack.c.l.b16 %v883
        %v916 = vunpack.c.h.b16 %v883
        %v917 = vunpack.c.l.b16 %v884
        %v918 = vunpack.c.h.b16 %v884
        %v919 = vunpack.c.l.b16 %v885
        %v920 = vunpack.c.h.b16 %v885
        %v921 = vunpack.c.l.b16 %v886
        %v922 = vunpack.c.h.b16 %v886
        %v923 = vunpack.c.l.b16 %v887
        %v924 = vunpack.c.h.b16 %v887
        %v925 = vunpack.c.l.b16 %v888
        %v926 = vunpack.c.h.b16 %v888
        %v927 = vunpack.c.l.b16 %v889
        %v928 = vunpack.c.h.b16 %v889
        %v929 = vunpack.c.l.b16 %v890
        %v930 = vunpack.c.h.b16 %v890
        %v931 = vunpack.c.l.b16 %v891
        %v932 = vunpack.c.h.b16 %v891
        %v933 = vunpack.c.l.b16 %v892
        %v934 = vunpack.c.h.b16 %v892
        %v935 = vunpack.c.l.b16 %v893
        %v936 = vunpack.c.h.b16 %v893
        %v937 = vunpack.c.l.b16 %v894
        %v938 = vunpack.c.h.b16 %v894
        %v939 = vunpack.c.l.b16 %v895
        %v940 = vunpack.c.h.b16 %v895
        %v941 = vunpack.c.l.b16 %v896
        %v942 = vunpack.c.h.b16 %v896
        %v943 = vunpack.c.l.b16 %v897
        %v944 = vunpack.c.h.b16 %v897
        %v945 = vunpack.c.l.b16 %v898
        %v946 = vunpack.c.h.b16 %v898
        %v947 = vpack.c.b16 %v915, %v915
        %v948 = vpack.c.b16 %v916, %v916
        %v949 = vpack.c.b16 %v917, %v917
        %v950 = vpack.c.b16 %v918, %v918
        %v951 = vpack.c.b16 %v919, %v919
        %v952 = vpack.c.b16 %v920, %v920
        %v953 = vpack.c.b16 %v921, %v921
        %v954 = vpack.c.b16 %v922, %v922
        %v955 = vpack.c.b16 %v923, %v923
        %v956 = vpack.c.b16 %v924, %v924
        %v957 = vpack.c.b16 %v925, %v925
        %v958 = vpack.c.b16 %v926, %v926
        %v959 = vpack.c.b16 %v927, %v927
        %v960 = vpack.c.b16 %v928, %v928
        %v961 = vpack.c.b16 %v929, %v929
        %v962 = vpack.c.b16 %v930, %v930
        %v963 = vpack.c.b16 %v931, %v931
        %v964 = vpack.c.b16 %v932, %v932
        %v965 = vpack.c.b16 %v933, %v933
        %v966 = vpack.c.b16 %v934, %v934
        %v967 = vpack.c.b16 %v935, %v935
        %v968 = vpack.c.b16 %v936, %v936
        %v969 = vpack.c.b16 %v937, %v937
        %v970 = vpack.c.b16 %v938, %v938
        %v971 = vpack.c.b16 %v939, %v939
        %v972 = vpack.c.b16 %v940, %v940
        %v973 = vpack.c.b16 %v941, %v941
        %v974 = vpack.c.b16 %v942, %v942
        %v975 = vpack.c.b16 %v943, %v943
        %v976 = vpack.c.b16 %v944, %v944
        %v977 = vpack.c.b16 %v945, %v945
        %v978 = vpack.c.b16 %v946, %v946
        %1011 = vst [vmem:[%s319] sm:$0xf] %v947
        %1012 = vst [vmem:[%s319 + $0x4] sm:$0xf] %v948
        %1013 = vst [vmem:[%s319 + $0x8] sm:$0xf] %v949
        %1014 = vst [vmem:[%s319 + $0xc] sm:$0xf] %v950
        %1015 = vst [vmem:[%s319 + $0x10] sm:$0xf] %v951
        %1016 = vst [vmem:[%s319 + $0x14] sm:$0xf] %v952
        %1017 = vst [vmem:[%s319 + $0x18] sm:$0xf] %v953
        %1018 = vst [vmem:[%s319 + $0x1c] sm:$0xf] %v954
        %1019 = vst [vmem:[%s319 + $0x20] sm:$0xf] %v955
        %1020 = vst [vmem:[%s319 + $0x24] sm:$0xf] %v956
        %1021 = vst [vmem:[%s319 + $0x28] sm:$0xf] %v957
        %1022 = vst [vmem:[%s319 + $0x2c] sm:$0xf] %v958
        %1023 = vst [vmem:[%s319 + $0x30] sm:$0xf] %v959
        %1024 = vst [vmem:[%s319 + $0x34] sm:$0xf] %v960
        %1025 = vst [vmem:[%s319 + $0x38] sm:$0xf] %v961
        %1026 = vst [vmem:[%s319 + $0x3c] sm:$0xf] %v962
        %1027 = vst [vmem:[%s319 + $0x40] sm:$0xf] %v963
        %1028 = vst [vmem:[%s319 + $0x44] sm:$0xf] %v964
        %1029 = vst [vmem:[%s319 + $0x48] sm:$0xf] %v965
        %1030 = vst [vmem:[%s319 + $0x4c] sm:$0xf] %v966
        %1031 = vst [vmem:[%s319 + $0x50] sm:$0xf] %v967
        %1032 = vst [vmem:[%s319 + $0x54] sm:$0xf] %v968
        %1033 = vst [vmem:[%s319 + $0x58] sm:$0xf] %v969
        %1034 = vst [vmem:[%s319 + $0x5c] sm:$0xf] %v970
        %1035 = vst [vmem:[%s319 + $0x60] sm:$0xf] %v971
        %1036 = vst [vmem:[%s319 + $0x64] sm:$0xf] %v972
        %1037 = vst [vmem:[%s319 + $0x68] sm:$0xf] %v973
        %1038 = vst [vmem:[%s319 + $0x6c] sm:$0xf] %v974
        %1039 = vst [vmem:[%s319 + $0x70] sm:$0xf] %v975
        %1040 = vst [vmem:[%s319 + $0x74] sm:$0xf] %v976
        %1041 = vst [vmem:[%s319 + $0x78] sm:$0xf] %v977
        %1042 = vst [vmem:[%s319 + $0x7c] sm:$0xf] %v978
        %s1043 = sand.u32 %s147, 1
        %s1044 = scalar_lea.sflag [#allocation4], %s1043
        %s1045 = sand.u32 %s147, 1
        %s1046 = smul.addr %s1045, 128
        %s1047 = scalar_lea.vmem [#allocation11], %s1046
        // Predicated region
        $region61: #{bottleneck_forward.5} parent=39 // pred_check
          %p1048 = pneg %p157
        $region62: #{bottleneck_forward.5} parent=39 // pred_check_branch
          %1050 = sbr.rel (%p1048) target = $region64
        $region63: #{bottleneck_forward.5} parent=39 // pred_region
          %s1051 = smul.u32 32, %s24
          %s1053 = ssub.s32 2048, 2048
          %1054 = vsyncadd %s1044, %s1053
          %s1055 = smul.addr %s1051, 64
          %s1056 = scalar_lea.hbm %s5, %s1055
          %s1057 = sshll.u32 %s1047, 4
          %s1058 = int_to_ptr.vmem [resolvable:$true] %s1057
          %1063 = dma.vmem_to_hbm [thread:$0]  %s1058, 2048, %s1056, %s1044, 64, 64, 4
        $region64: #{bottleneck_forward.5} parent=39 // pred_fallthru
          _
      $region40: #{bottleneck_forward.5} parent=5 // pred_fallthru
        _
      %p1064 = scmp.le.s32.totalorder 2, %s19
      // Predicated region
      $region65: #{bottleneck_forward.5} parent=5 // pred_check
        %p1065 = pneg %p1064
      $region66: #{bottleneck_forward.5} parent=5 // pred_check_branch
        %1067 = sbr.rel (%p1065) target = $region68
      $region67: #{bottleneck_forward.5} parent=5 // pred_region
        %s1068 = ssub.s32 %s19, 2
        // Predicated region
        $region69: #{bottleneck_forward.5} parent=67 // pred_check
          %p1069 = pneg %p163
        $region70: #{bottleneck_forward.5} parent=67 // pred_check_branch
          %1071 = sbr.rel (%p1069) target = $region72
        $region71: #{bottleneck_forward.5} parent=67 // pred_region
          %s1072 = sand.u32 %s148, 1
          %s1073 = scalar_lea.sflag [#allocation4], %s1072
          %s1074 = sand.u32 %s148, 1
          %s1075 = smul.addr %s1074, 128
          %s1076 = scalar_lea.vmem [#allocation11], %s1075
          %1077 = dma.done %s1073, 2048
        $region72: #{bottleneck_forward.5} parent=67 // pred_fallthru
          _
      $region68: #{bottleneck_forward.5} parent=5 // pred_fallthru
        _
    $region6: #{bottleneck_forward.5} parent=1 // loop_footer
      %s23 = sadd.s32 1, %s19
    $region7: #{bottleneck_forward.5} parent=1 // loop_footer_branch
      %18 = sbr.rel target = $region3
    $region8: #{bottleneck_forward.5} parent=1 // loop_exit
      _
    %1078 = vsyncpa [#allocation3], 1
    %s1079 = scalar_lea.sflag [#allocation3], 1
    %1080 = vsyncpa %s1079, 1
    %1081 = vsyncpa [#allocation6], 1
    %1082 = vsyncpa [#allocation9], 1
    %1083 = vsyncpa [#allocation4], 1
    %s1084 = scalar_lea.sflag [#allocation4], 1
    %1085 = vsyncpa %s1084, 1

// kernel: bottleneck_forward.4
$region0: #{bottleneck_forward.4}
  #allocation0 [shape = 'u32[]', space=smem, size = 0x4, offset = 0x4, fixed_abs, tag = 'smem constant byte address 0x4 - core index']
  #allocation1 [shape = 'u32[144,128]{1,0:T(1,128)}', space=vmem, size = 0x12000, scoped, tag = 'internal scratch']
  %s0 = inlined_call_operand.hbm [shape: bf16[2,18,18,128], index: 0, kind: input, shape index: {}]
  %s1 = inlined_call_operand.hbm [shape: bf16[3,384,128], index: 1, kind: input, shape index: {}]
  %s2 = inlined_call_operand.hbm [shape: f32[1,128], index: 2, kind: input, shape index: {}]
  %s3 = inlined_call_operand.hbm [shape: f32[1,128], index: 3, kind: input, shape index: {}]
  %s4 = inlined_call_operand.hbm [shape: bf16[2,256,128], index: 4, kind: output, shape index: {}]
  %s5 = sld [smem:[#allocation0]]
  $region65: #{bottleneck_forward.4} parent=0
    _
  %s7 = ssub.s32 1, %s5
  %s8 = scalar_select 0, %s7, %s5
  $region1: #{bottleneck_forward.4} parent=0
    #allocation2 [shape = 'u8[221184]{0}', space=vmem, size = 0x36000, scoped, tag = 'input window, operand 0']
    #allocation3 [shape = 's32[2]{0}', space=sflag, size = 0x8, scoped, tag = 'scoped memory for bottleneck_forward.4']
    #allocation4 [shape = 's32[2]{0}', space=sflag, size = 0x8, scoped, tag = 'scoped memory for bottleneck_forward.4']
    #allocation5 [shape = 'u8[294912]{0}', space=vmem, size = 0x48000, scoped, tag = 'input window, operand 1, single buffered']
    #allocation6 [shape = 's32[1]{0}', space=sflag, size = 0x4, scoped, tag = 'scoped memory for bottleneck_forward.4']
    #allocation7 [shape = 'u8[512]{0}', space=vmem, size = 0x400, scoped, tag = 'input window, operand 2, single buffered']
    #allocation8 [shape = 'u8[512]{0}', space=vmem, size = 0x400, scoped, tag = 'input window, operand 3, single buffered']
    #allocation9 [shape = 's32[1]{0}', space=sflag, size = 0x4, scoped, tag = 'scoped memory for bottleneck_forward.4']
    #allocation10 [shape = 'u8[131072]{0}', space=vmem, size = 0x20000, scoped, tag = 'output window, operand 0']
    %9 = vsyncpa [#allocation3], 0
    %s10 = scalar_lea.sflag [#allocation3], 1
    %11 = vsyncpa %s10, 0
    %12 = vsyncpa [#allocation6], 0
    %13 = vsyncpa [#allocation9], 0
    %14 = vsyncpa [#allocation4], 0
    %s15 = scalar_lea.sflag [#allocation4], 1
    %16 = vsyncpa %s15, 0
    loop: start=0, step=1, limit=4
    $region2: #{bottleneck_forward.4} parent=1 // loop_pre_header
      _
    $region3: #{bottleneck_forward.4} parent=1 // loop_header
      %s18 = sphi 0, %s22
      %p19 = scmp.ge.s32.totalorder %s18, 4
      %s25 = sphi 0, %s37
      %s26 = sphi 0, %s33
      %s27 = sphi 0, %s25
      %s28 = sphi 0, %s26
      %s29 = sphi 0, %s27
      %s30 = sphi 0, %s28
      %s40 = sphi 0, %s42
      %s43 = sphi 0, %s40
      %s44 = sphi 0, %s43
      %s60 = sphi 0, %s44
      %s66 = sphi 0, %s68
      %s69 = sphi 0, %s66
      %s70 = sphi 0, %s69
      %s86 = sphi 0, %s70
      %s92 = sphi 0, %s94
      %s95 = sphi 0, %s92
      %s96 = sphi 0, %s95
      %s112 = sphi 0, %s96
      %s118 = sphi 0, %s120
      %s121 = sphi 0, %s118
      %s122 = sphi 0, %s121
      %s138 = sphi 0, %s122
      %s146 = sphi 0, %s148
      %s149 = sphi 0, %s146
      %s150 = sphi 0, %s149
      %s166 = sphi 0, %s150
    $region4: #{bottleneck_forward.4} parent=1 // loop_header_branch
      %21 = sbr.rel (%p19) target = $region8
    $region5: #{bottleneck_forward.4} parent=1 // loop_body
      %s23 = ssub.s32 %s18, 1
      %s24 = ssub.s32 %s18, 2
      %s31 = sadd.s32 1, %s26
      %p32 = scmp.ge.s32.totalorder %s31, 1
      %s33 = scalar_select %p32, 0, %s31
      %s34 = sadd.s32 1, %s25
      %s35 = scalar_select %p32, %s34, %s25
      %p36 = scmp.ge.s32.totalorder %s35, 2
      %s37 = scalar_select %p36, 0, %s35
      %s38 = ssub.s32 %s25, %s37
      %p39 = scmp.eq.s32.totalorder %s38, 0
      %s41 = sadd.s32 %s40, 1
      %s42 = scalar_select %p39, %s40, %s41
      %p45 = pneg %p39
      %p46 = scmp.eq.s32.totalorder %s18, 1
      %p47 = por %p45, %p46
      %p48 = scmp.ne.s32.totalorder %s40, %s43
      %p49 = scmp.eq.s32.totalorder %s18, 0
      %p50 = por %p48, %p49
      %p51 = scmp.ne.s32.totalorder %s40, %s43
      %p52 = scmp.eq.s32.totalorder %s23, 1
      %p53 = por %p51, %p52
      %p54 = scmp.ne.s32.totalorder %s43, %s44
      %p55 = scmp.eq.s32.totalorder %s23, 0
      %p56 = por %p54, %p55
      %p57 = scmp.ne.s32.totalorder %s43, %s44
      %p58 = scmp.eq.s32.totalorder %s24, 1
      %p59 = por %p57, %p58
      %p61 = scmp.ne.s32.totalorder %s44, %s60
      %p62 = scmp.eq.s32.totalorder %s24, 0
      %p63 = por %p61, %p62
      %s64 = ssub.s32 %s26, %s33
      %p65 = scmp.eq.s32.totalorder %s64, 0
      %s67 = sadd.s32 %s66, 1
      %s68 = scalar_select %p65, %s66, %s67
      %p71 = pneg %p65
      %p72 = scmp.eq.s32.totalorder %s18, 1
      %p73 = por %p71, %p72
      %p74 = scmp.ne.s32.totalorder %s66, %s69
      %p75 = scmp.eq.s32.totalorder %s18, 0
      %p76 = por %p74, %p75
      %p77 = scmp.ne.s32.totalorder %s66, %s69
      %p78 = scmp.eq.s32.totalorder %s23, 1
      %p79 = por %p77, %p78
      %p80 = scmp.ne.s32.totalorder %s69, %s70
      %p81 = scmp.eq.s32.totalorder %s23, 0
      %p82 = por %p80, %p81
      %p83 = scmp.ne.s32.totalorder %s69, %s70
      %p84 = scmp.eq.s32.totalorder %s24, 1
      %p85 = por %p83, %p84
      %p87 = scmp.ne.s32.totalorder %s70, %s86
      %p88 = scmp.eq.s32.totalorder %s24, 0
      %p89 = por %p87, %p88
      %s90 = ssub.s32 %s26, %s33
      %p91 = scmp.eq.s32.totalorder %s90, 0
      %s93 = sadd.s32 %s92, 1
      %s94 = scalar_select %p91, %s92, %s93
      %p97 = pneg %p91
      %p98 = scmp.eq.s32.totalorder %s18, 1
      %p99 = por %p97, %p98
      %p100 = scmp.ne.s32.totalorder %s92, %s95
      %p101 = scmp.eq.s32.totalorder %s18, 0
      %p102 = por %p100, %p101
      %p103 = scmp.ne.s32.totalorder %s92, %s95
      %p104 = scmp.eq.s32.totalorder %s23, 1
      %p105 = por %p103, %p104
      %p106 = scmp.ne.s32.totalorder %s95, %s96
      %p107 = scmp.eq.s32.totalorder %s23, 0
      %p108 = por %p106, %p107
      %p109 = scmp.ne.s32.totalorder %s95, %s96
      %p110 = scmp.eq.s32.totalorder %s24, 1
      %p111 = por %p109, %p110
      %p113 = scmp.ne.s32.totalorder %s96, %s112
      %p114 = scmp.eq.s32.totalorder %s24, 0
      %p115 = por %p113, %p114
      %s116 = ssub.s32 %s26, %s33
      %p117 = scmp.eq.s32.totalorder %s116, 0
      %s119 = sadd.s32 %s118, 1
      %s120 = scalar_select %p117, %s118, %s119
      %p123 = pneg %p117
      %p124 = scmp.eq.s32.totalorder %s18, 1
      %p125 = por %p123, %p124
      %p126 = scmp.ne.s32.totalorder %s118, %s121
      %p127 = scmp.eq.s32.totalorder %s18, 0
      %p128 = por %p126, %p127
      %p129 = scmp.ne.s32.totalorder %s118, %s121
      %p130 = scmp.eq.s32.totalorder %s23, 1
      %p131 = por %p129, %p130
      %p132 = scmp.ne.s32.totalorder %s121, %s122
      %p133 = scmp.eq.s32.totalorder %s23, 0
      %p134 = por %p132, %p133
      %p135 = scmp.ne.s32.totalorder %s121, %s122
      %p136 = scmp.eq.s32.totalorder %s24, 1
      %p137 = por %p135, %p136
      %p139 = scmp.ne.s32.totalorder %s122, %s138
      %p140 = scmp.eq.s32.totalorder %s24, 0
      %p141 = por %p139, %p140
      %s142 = ssub.s32 %s25, %s37
      %s143 = ssub.s32 %s26, %s33
      %s144 = sor.u32 %s142, %s143
      %p145 = scmp.eq.s32.totalorder %s144, 0
      %s147 = sadd.s32 %s146, 1
      %s148 = scalar_select %p145, %s146, %s147
      %p151 = pneg %p145
      %p152 = scmp.eq.s32.totalorder %s18, 1
      %p153 = por %p151, %p152
      %p154 = scmp.ne.s32.totalorder %s146, %s149
      %p155 = scmp.eq.s32.totalorder %s18, 0
      %p156 = por %p154, %p155
      %p157 = scmp.ne.s32.totalorder %s146, %s149
      %p158 = scmp.eq.s32.totalorder %s23, 1
      %p159 = por %p157, %p158
      %p160 = scmp.ne.s32.totalorder %s149, %s150
      %p161 = scmp.eq.s32.totalorder %s23, 0
      %p162 = por %p160, %p161
      %p163 = scmp.ne.s32.totalorder %s149, %s150
      %p164 = scmp.eq.s32.totalorder %s24, 1
      %p165 = por %p163, %p164
      %p167 = scmp.ne.s32.totalorder %s150, %s166
      %p168 = scmp.eq.s32.totalorder %s24, 0
      %p169 = por %p167, %p168
      %p170 = scmp.le.s32.totalorder 1, %s18
      %p171 = scmp.lt.s32.totalorder %s18, 3
      %p172 = pnand %p170, %p171
      %p173 = pneg %p172
      // Predicated region
      $region9: #{bottleneck_forward.4} parent=5 // pred_check
        _
      $region10: #{bottleneck_forward.4} parent=5 // pred_check_branch
        %175 = sbr.rel (%p172) target = $region12
      $region11: #{bottleneck_forward.4} parent=5 // pred_region
        %s176 = ssub.s32 %s18, 1
        // Predicated region
        $region13: #{bottleneck_forward.4} parent=11 // pred_check
          %p177 = pneg %p82
        $region14: #{bottleneck_forward.4} parent=11 // pred_check_branch
          %179 = sbr.rel (%p177) target = $region16
        $region15: #{bottleneck_forward.4} parent=11 // pred_region
          %s181 = ssub.s32 9216, 9216
          %182 = vsyncadd [#allocation6], %s181
          %s183 = smul.addr %s28, 64
          %s184 = scalar_lea.hbm %s1, %s183
          %s185 = sshll.u32 [#allocation5], 4
          %s186 = int_to_ptr.vmem [resolvable:$true] %s185
          %191 = dma.hbm_to_vmem [thread:$0]  %s184, 9216, %s186, [#allocation6], 64, 64, 4
        $region16: #{bottleneck_forward.4} parent=11 // pred_fallthru
          _
        // Predicated region
        $region17: #{bottleneck_forward.4} parent=11 // pred_check
          %p192 = pneg %p108
        $region18: #{bottleneck_forward.4} parent=11 // pred_check_branch
          %194 = sbr.rel (%p192) target = $region20
        $region19: #{bottleneck_forward.4} parent=11 // pred_region
          %s196 = ssub.s32 16, 16
          %197 = vsyncadd [#allocation6], %s196
          %s198 = smul.addr %s28, 16
          %s199 = scalar_lea.hbm %s2, %s198
          %s201 = sshll.u32 [#allocation7], 4
          %s202 = int_to_ptr.vmem [resolvable:$true] %s201
          %204 = dma.hbm_to_vmem [thread:$0]  %s199, 16, %s202, [#allocation6]
        $region20: #{bottleneck_forward.4} parent=11 // pred_fallthru
          _
        // Predicated region
        $region21: #{bottleneck_forward.4} parent=11 // pred_check
          %p205 = pneg %p134
        $region22: #{bottleneck_forward.4} parent=11 // pred_check_branch
          %207 = sbr.rel (%p205) target = $region24
        $region23: #{bottleneck_forward.4} parent=11 // pred_region
          %s209 = ssub.s32 16, 16
          %210 = vsyncadd [#allocation9], %s209
          %s211 = smul.addr %s28, 16
          %s212 = scalar_lea.hbm %s3, %s211
          %s214 = sshll.u32 [#allocation8], 4
          %s215 = int_to_ptr.vmem [resolvable:$true] %s214
          %217 = dma.hbm_to_vmem [thread:$0]  %s212, 16, %s215, [#allocation9]
        $region24: #{bottleneck_forward.4} parent=11 // pred_fallthru
          _
      $region12: #{bottleneck_forward.4} parent=5 // pred_fallthru
        _
      %p218 = scmp.lt.s32.totalorder %s18, 2
      // Predicated region
      $region25: #{bottleneck_forward.4} parent=5 // pred_check
        %p219 = pneg %p218
      $region26: #{bottleneck_forward.4} parent=5 // pred_check_branch
        %221 = sbr.rel (%p219) target = $region28
      $region27: #{bottleneck_forward.4} parent=5 // pred_region
        // Predicated region
        $region29: #{bottleneck_forward.4} parent=27 // pred_check
          %p222 = pneg %p50
        $region30: #{bottleneck_forward.4} parent=27 // pred_check_branch
          %224 = sbr.rel (%p222) target = $region32
        $region31: #{bottleneck_forward.4} parent=27 // pred_region
          %s225 = sand.u32 %s40, 1
          %s226 = scalar_lea.sflag [#allocation3], %s225
          %s227 = sand.u32 %s40, 1
          %s228 = smul.addr %s227, 216
          %s229 = scalar_lea.vmem [#allocation2], %s228
          %s231 = ssub.s32 3456, 3456
          %232 = vsyncadd %s226, %s231
          %s233 = smul.addr %s25, 54
          %s234 = smul.addr %s233, 64
          %s235 = scalar_lea.hbm %s0, %s234
          %s236 = sshll.u32 %s229, 4
          %s237 = int_to_ptr.vmem [resolvable:$true] %s236
          %242 = dma.hbm_to_vmem [thread:$0]  %s235, 3456, %s237, %s226, 64, 64, 4
        $region32: #{bottleneck_forward.4} parent=27 // pred_fallthru
          _
      $region28: #{bottleneck_forward.4} parent=5 // pred_fallthru
        _
      %p243 = scmp.le.s32.totalorder 1, %s18
      %p244 = scmp.lt.s32.totalorder %s18, 3
      %p245 = pnand %p243, %p244
      %p246 = pneg %p245
      // Predicated region
      $region33: #{bottleneck_forward.4} parent=5 // pred_check
        _
      $region34: #{bottleneck_forward.4} parent=5 // pred_check_branch
        %248 = sbr.rel (%p245) target = $region36
      $region35: #{bottleneck_forward.4} parent=5 // pred_region
        %s249 = ssub.s32 %s18, 1
        %s250 = sand.u32 %s43, 1
        %s251 = scalar_lea.sflag [#allocation3], %s250
        %s252 = sand.u32 %s43, 1
        %s253 = smul.addr %s252, 216
        %s254 = scalar_lea.vmem [#allocation2], %s253
        // Predicated region
        $region37: #{bottleneck_forward.4} parent=35 // pred_check
          %p255 = pneg %p56
        $region38: #{bottleneck_forward.4} parent=35 // pred_check_branch
          %257 = sbr.rel (%p255) target = $region40
        $region39: #{bottleneck_forward.4} parent=35 // pred_region
          %258 = dma.done %s251, 3456
        $region40: #{bottleneck_forward.4} parent=35 // pred_fallthru
          _
        // Predicated region
        $region41: #{bottleneck_forward.4} parent=35 // pred_check
          %p259 = pneg %p82
        $region42: #{bottleneck_forward.4} parent=35 // pred_check_branch
          %261 = sbr.rel (%p259) target = $region44
        $region43: #{bottleneck_forward.4} parent=35 // pred_region
          %262 = dma.done [#allocation6], 9216
        $region44: #{bottleneck_forward.4} parent=35 // pred_fallthru
          _
        // Predicated region
        $region45: #{bottleneck_forward.4} parent=35 // pred_check
          %p263 = pneg %p108
        $region46: #{bottleneck_forward.4} parent=35 // pred_check_branch
          %265 = sbr.rel (%p263) target = $region48
        $region47: #{bottleneck_forward.4} parent=35 // pred_region
          %266 = dma.done [#allocation6], 16
        $region48: #{bottleneck_forward.4} parent=35 // pred_fallthru
          _
        // Predicated region
        $region49: #{bottleneck_forward.4} parent=35 // pred_check
          %p267 = pneg %p134
        $region50: #{bottleneck_forward.4} parent=35 // pred_check_branch
          %269 = sbr.rel (%p267) target = $region52
        $region51: #{bottleneck_forward.4} parent=35 // pred_region
          %270 = dma.done [#allocation9], 16
        $region52: #{bottleneck_forward.4} parent=35 // pred_fallthru
          _
        %s271 = sand.u32 %s43, 1
        %s272 = scalar_lea.sflag [#allocation3], %s271
        %s273 = sand.u32 %s43, 1
        %s274 = smul.addr %s273, 216
        %s275 = scalar_lea.vmem [#allocation2], %s274
        %p276 = pneg %p56
        %p277 = pneg %p53
        %p278 = pneg %p82
        %p279 = pneg %p79
        %p280 = pneg %p108
        %p281 = pneg %p105
        %p282 = pneg %p134
        %p283 = pneg %p131
        %p284 = pneg %p162
        %p285 = pneg %p159
        %s286 = sand.u32 %s149, 1
        %s287 = scalar_lea.sflag [#allocation4], %s286
        %s288 = sand.u32 %s149, 1
        %s289 = smul.addr %s288, 128
        %s290 = scalar_lea.vmem [#allocation10], %s289
        %v292 = vld [vmem:[%s254] sm:$0xf]
        %v293 = vld [vmem:[%s254 + $0x4] sm:$0xf]
        %v294 = vld [vmem:[%s254 + $0x8] sm:$0x1]
        %v295 = vld [vmem:[%s254 + $0xc] sm:$0xf]
        %v296 = vld [vmem:[%s254 + $0x10] sm:$0xf]
        %v297 = vld [vmem:[%s254 + $0x14] sm:$0x1]
        %v298 = vld [vmem:[%s254 + $0x18] sm:$0xf]
        %v299 = vld [vmem:[%s254 + $0x1c] sm:$0xf]
        %v300 = vld [vmem:[%s254 + $0x20] sm:$0x1]
        %v301 = vld [vmem:[%s254 + $0x24] sm:$0xf]
        %v302 = vld [vmem:[%s254 + $0x28] sm:$0xf]
        %v303 = vld [vmem:[%s254 + $0x2c] sm:$0x1]
        %v304 = vld [vmem:[%s254 + $0x30] sm:$0xf]
        %v305 = vld [vmem:[%s254 + $0x34] sm:$0xf]
        %v306 = vld [vmem:[%s254 + $0x38] sm:$0x1]
        %v307 = vld [vmem:[%s254 + $0x3c] sm:$0xf]
        %v308 = vld [vmem:[%s254 + $0x40] sm:$0xf]
        %v309 = vld [vmem:[%s254 + $0x44] sm:$0x1]
        %v310 = vld [vmem:[%s254 + $0x48] sm:$0xf]
        %v311 = vld [vmem:[%s254 + $0x4c] sm:$0xf]
        %v312 = vld [vmem:[%s254 + $0x50] sm:$0x1]
        %v313 = vld [vmem:[%s254 + $0x54] sm:$0xf]
        %v314 = vld [vmem:[%s254 + $0x58] sm:$0xf]
        %v315 = vld [vmem:[%s254 + $0x5c] sm:$0x1]
        %v316 = vld [vmem:[%s254 + $0x60] sm:$0xf]
        %v317 = vld [vmem:[%s254 + $0x64] sm:$0xf]
        %v318 = vld [vmem:[%s254 + $0x68] sm:$0x1]
        %v319 = vld [vmem:[%s254 + $0x6c] sm:$0xf]
        %v320 = vld [vmem:[%s254 + $0x70] sm:$0xf]
        %v321 = vld [vmem:[%s254 + $0x74] sm:$0x1]
        %v322 = vld [vmem:[%s254 + $0x78] sm:$0xf]
        %v323 = vld [vmem:[%s254 + $0x7c] sm:$0xf]
        %v324 = vld [vmem:[%s254 + $0x80] sm:$0x1]
        %v325 = vld [vmem:[%s254 + $0x84] sm:$0xf]
        %v326 = vld [vmem:[%s254 + $0x88] sm:$0xf]
        %v327 = vld [vmem:[%s254 + $0x8c] sm:$0x1]
        %v328 = vld [vmem:[%s254 + $0x90] sm:$0xf]
        %v329 = vld [vmem:[%s254 + $0x94] sm:$0xf]
        %v330 = vld [vmem:[%s254 + $0x98] sm:$0x1]
        %v331 = vld [vmem:[%s254 + $0x9c] sm:$0xf]
        %v332 = vld [vmem:[%s254 + $0xa0] sm:$0xf]
        %v333 = vld [vmem:[%s254 + $0xa4] sm:$0x1]
        %v334 = vld [vmem:[%s254 + $0xa8] sm:$0xf]
        %v335 = vld [vmem:[%s254 + $0xac] sm:$0xf]
        %v336 = vld [vmem:[%s254 + $0xb0] sm:$0x1]
        %v337 = vld [vmem:[%s254 + $0xb4] sm:$0xf]
        %v338 = vld [vmem:[%s254 + $0xb8] sm:$0xf]
        %v339 = vld [vmem:[%s254 + $0xbc] sm:$0x1]
        %v372 = vunpack.c.l.b16 %v292
        %v373 = vunpack.c.l.b16 %v293
        %v374 = vunpack.c.l.b16 %v295
        %v375 = vunpack.c.l.b16 %v296
        %v376 = vunpack.c.l.b16 %v298
        %v377 = vunpack.c.l.b16 %v299
        %v378 = vunpack.c.l.b16 %v301
        %v379 = vunpack.c.l.b16 %v302
        %v380 = vunpack.c.l.b16 %v304
        %v381 = vunpack.c.l.b16 %v305
        %v382 = vunpack.c.l.b16 %v307
        %v383 = vunpack.c.l.b16 %v308
        %v384 = vunpack.c.l.b16 %v310
        %v385 = vunpack.c.l.b16 %v311
        %v386 = vunpack.c.l.b16 %v313
        %v387 = vunpack.c.l.b16 %v314
        %v388 = vunpack.c.l.b16 %v316
        %v389 = vunpack.c.l.b16 %v317
        %v390 = vunpack.c.l.b16 %v319
        %v391 = vunpack.c.l.b16 %v320
        %v392 = vunpack.c.l.b16 %v322
        %v393 = vunpack.c.l.b16 %v323
        %v394 = vunpack.c.l.b16 %v325
        %v395 = vunpack.c.l.b16 %v326
        %v396 = vunpack.c.l.b16 %v328
        %v397 = vunpack.c.l.b16 %v329
        %v398 = vunpack.c.l.b16 %v331
        %v399 = vunpack.c.l.b16 %v332
        %v400 = vunpack.c.l.b16 %v334
        %v401 = vunpack.c.l.b16 %v335
        %v402 = vunpack.c.l.b16 %v337
        %v403 = vunpack.c.l.b16 %v338
        %v404 = vpack.c.b16 %v373, %v372
        %v405 = vpack.c.b16 %v375, %v374
        %v406 = vpack.c.b16 %v377, %v376
        %v407 = vpack.c.b16 %v379, %v378
        %v408 = vpack.c.b16 %v381, %v380
        %v409 = vpack.c.b16 %v383, %v382
        %v410 = vpack.c.b16 %v385, %v384
        %v411 = vpack.c.b16 %v387, %v386
        %v412 = vpack.c.b16 %v389, %v388
        %v413 = vpack.c.b16 %v391, %v390
        %v414 = vpack.c.b16 %v393, %v392
        %v415 = vpack.c.b16 %v395, %v394
        %v416 = vpack.c.b16 %v397, %v396
        %v417 = vpack.c.b16 %v399, %v398
        %v418 = vpack.c.b16 %v401, %v400
        %v419 = vpack.c.b16 %v403, %v402
        %v452 = vunpack.c.l.b16 %v294
        %v453 = vunpack.c.l.b16 %v297
        %v454 = vunpack.c.l.b16 %v300
        %v455 = vunpack.c.l.b16 %v303
        %v456 = vunpack.c.l.b16 %v306
        %v457 = vunpack.c.l.b16 %v309
        %v458 = vunpack.c.l.b16 %v312
        %v459 = vunpack.c.l.b16 %v315
        %v460 = vunpack.c.l.b16 %v318
        %v461 = vunpack.c.l.b16 %v321
        %v462 = vunpack.c.l.b16 %v324
        %v463 = vunpack.c.l.b16 %v327
        %v464 = vunpack.c.l.b16 %v330
        %v465 = vunpack.c.l.b16 %v333
        %v466 = vunpack.c.l.b16 %v336
        %v467 = vunpack.c.l.b16 %v339
        %v468 = vpack.c.b16 %v452, %v452
        %v469 = vpack.c.b16 %v453, %v453
        %v470 = vpack.c.b16 %v454, %v454
        %v471 = vpack.c.b16 %v455, %v455
        %v472 = vpack.c.b16 %v456, %v456
        %v473 = vpack.c.b16 %v457, %v457
        %v474 = vpack.c.b16 %v458, %v458
        %v475 = vpack.c.b16 %v459, %v459
        %v476 = vpack.c.b16 %v460, %v460
        %v477 = vpack.c.b16 %v461, %v461
        %v478 = vpack.c.b16 %v462, %v462
        %v479 = vpack.c.b16 %v463, %v463
        %v480 = vpack.c.b16 %v464, %v464
        %v481 = vpack.c.b16 %v465, %v465
        %v482 = vpack.c.b16 %v466, %v466
        %v483 = vpack.c.b16 %v467, %v467
        %vm484 = vsmask.f32 7424
        %v486 = vshrl.u32 %v404, 16
        %v488 = vshll.u32 %v404, 16
        %v490 = vrot.slane %v488, 1
        %v491 = vor.u32 %v486, %v490
        %v493 = vshll.u32 %v468, 16
        %v495 = vrot.slane %v493, 1
        %v496 = vsel %vm484, %v491, %v495
        %v498 = vshrl.u32 %v405, 16
        %v500 = vshll.u32 %v405, 16
        %v502 = vrot.slane %v500, 1
        %v503 = vor.u32 %v498, %v502
        %v505 = vshll.u32 %v469, 16
        %v507 = vrot.slane %v505, 1
        %v508 = vsel %vm484, %v503, %v507
        %v510 = vshrl.u32 %v406, 16
        %v512 = vshll.u32 %v406, 16
        %v514 = vrot.slane %v512, 1
        %v515 = vor.u32 %v510, %v514
        %v517 = vshll.u32 %v470, 16
        %v519 = vrot.slane %v517, 1
        %v520 = vsel %vm484, %v515, %v519
        %v522 = vshrl.u32 %v407, 16
        %v524 = vshll.u32 %v407, 16
        %v526 = vrot.slane %v524, 1
        %v527 = vor.u32 %v522, %v526
        %v529 = vshll.u32 %v471, 16
        %v531 = vrot.slane %v529, 1
        %v532 = vsel %vm484, %v527, %v531
        %v534 = vshrl.u32 %v408, 16
        %v536 = vshll.u32 %v408, 16
        %v538 = vrot.slane %v536, 1
        %v539 = vor.u32 %v534, %v538
        %v541 = vshll.u32 %v472, 16
        %v543 = vrot.slane %v541, 1
        %v544 = vsel %vm484, %v539, %v543
        %v546 = vshrl.u32 %v409, 16
        %v548 = vshll.u32 %v409, 16
        %v550 = vrot.slane %v548, 1
        %v551 = vor.u32 %v546, %v550
        %v553 = vshll.u32 %v473, 16
        %v555 = vrot.slane %v553, 1
        %v556 = vsel %vm484, %v551, %v555
        %v558 = vshrl.u32 %v410, 16
        %v560 = vshll.u32 %v410, 16
        %v562 = vrot.slane %v560, 1
        %v563 = vor.u32 %v558, %v562
        %v565 = vshll.u32 %v474, 16
        %v567 = vrot.slane %v565, 1
        %v568 = vsel %vm484, %v563, %v567
        %v570 = vshrl.u32 %v411, 16
        %v572 = vshll.u32 %v411, 16
        %v574 = vrot.slane %v572, 1
        %v575 = vor.u32 %v570, %v574
        %v577 = vshll.u32 %v475, 16
        %v579 = vrot.slane %v577, 1
        %v580 = vsel %vm484, %v575, %v579
        %v582 = vshrl.u32 %v412, 16
        %v584 = vshll.u32 %v412, 16
        %v586 = vrot.slane %v584, 1
        %v587 = vor.u32 %v582, %v586
        %v589 = vshll.u32 %v476, 16
        %v591 = vrot.slane %v589, 1
        %v592 = vsel %vm484, %v587, %v591
        %v594 = vshrl.u32 %v413, 16
        %v596 = vshll.u32 %v413, 16
        %v598 = vrot.slane %v596, 1
        %v599 = vor.u32 %v594, %v598
        %v601 = vshll.u32 %v477, 16
        %v603 = vrot.slane %v601, 1
        %v604 = vsel %vm484, %v599, %v603
        %v606 = vshrl.u32 %v414, 16
        %v608 = vshll.u32 %v414, 16
        %v610 = vrot.slane %v608, 1
        %v611 = vor.u32 %v606, %v610
        %v613 = vshll.u32 %v478, 16
        %v615 = vrot.slane %v613, 1
        %v616 = vsel %vm484, %v611, %v615
        %v618 = vshrl.u32 %v415, 16
        %v620 = vshll.u32 %v415, 16
        %v622 = vrot.slane %v620, 1
        %v623 = vor.u32 %v618, %v622
        %v625 = vshll.u32 %v479, 16
        %v627 = vrot.slane %v625, 1
        %v628 = vsel %vm484, %v623, %v627
        %v630 = vshrl.u32 %v416, 16
        %v632 = vshll.u32 %v416, 16
        %v634 = vrot.slane %v632, 1
        %v635 = vor.u32 %v630, %v634
        %v637 = vshll.u32 %v480, 16
        %v639 = vrot.slane %v637, 1
        %v640 = vsel %vm484, %v635, %v639
        %v642 = vshrl.u32 %v417, 16
        %v644 = vshll.u32 %v417, 16
        %v646 = vrot.slane %v644, 1
        %v647 = vor.u32 %v642, %v646
        %v649 = vshll.u32 %v481, 16
        %v651 = vrot.slane %v649, 1
        %v652 = vsel %vm484, %v647, %v651
        %v654 = vshrl.u32 %v418, 16
        %v656 = vshll.u32 %v418, 16
        %v658 = vrot.slane %v656, 1
        %v659 = vor.u32 %v654, %v658
        %v661 = vshll.u32 %v482, 16
        %v663 = vrot.slane %v661, 1
        %v664 = vsel %vm484, %v659, %v663
        %v666 = vshrl.u32 %v419, 16
        %v668 = vshll.u32 %v419, 16
        %v670 = vrot.slane %v668, 1
        %v671 = vor.u32 %v666, %v670
        %v673 = vshll.u32 %v483, 16
        %v675 = vrot.slane %v673, 1
        %v676 = vsel %vm484, %v671, %v675
        %vm693 = vcmask 1046528
        %v694 = vrot.slane %v404, 1
        %v695 = vrot.slane %v468, 1
        %v696 = vsel %vm693, %v694, %v695
        %v697 = vrot.slane %v405, 1
        %v698 = vrot.slane %v469, 1
        %v699 = vsel %vm693, %v697, %v698
        %v700 = vrot.slane %v406, 1
        %v701 = vrot.slane %v470, 1
        %v702 = vsel %vm693, %v700, %v701
        %v703 = vrot.slane %v407, 1
        %v704 = vrot.slane %v471, 1
        %v705 = vsel %vm693, %v703, %v704
        %v706 = vrot.slane %v408, 1
        %v707 = vrot.slane %v472, 1
        %v708 = vsel %vm693, %v706, %v707
        %v709 = vrot.slane %v409, 1
        %v710 = vrot.slane %v473, 1
        %v711 = vsel %vm693, %v709, %v710
        %v712 = vrot.slane %v410, 1
        %v713 = vrot.slane %v474, 1
        %v714 = vsel %vm693, %v712, %v713
        %v715 = vrot.slane %v411, 1
        %v716 = vrot.slane %v475, 1
        %v717 = vsel %vm693, %v715, %v716
        %v718 = vrot.slane %v412, 1
        %v719 = vrot.slane %v476, 1
        %v720 = vsel %vm693, %v718, %v719
        %v721 = vrot.slane %v413, 1
        %v722 = vrot.slane %v477, 1
        %v723 = vsel %vm693, %v721, %v722
        %v724 = vrot.slane %v414, 1
        %v725 = vrot.slane %v478, 1
        %v726 = vsel %vm693, %v724, %v725
        %v727 = vrot.slane %v415, 1
        %v728 = vrot.slane %v479, 1
        %v729 = vsel %vm693, %v727, %v728
        %v730 = vrot.slane %v416, 1
        %v731 = vrot.slane %v480, 1
        %v732 = vsel %vm693, %v730, %v731
        %v733 = vrot.slane %v417, 1
        %v734 = vrot.slane %v481, 1
        %v735 = vsel %vm693, %v733, %v734
        %v736 = vrot.slane %v418, 1
        %v737 = vrot.slane %v482, 1
        %v738 = vsel %vm693, %v736, %v737
        %v739 = vrot.slane %v419, 1
        %v740 = vrot.slane %v483, 1
        %v741 = vsel %vm693, %v739, %v740
        %v758 = vld [vmem:[#allocation5] sm:$0xf]
        %v759 = vld [vmem:[#allocation5 + $0x4] sm:$0xf]
        %v760 = vld [vmem:[#allocation5 + $0x8] sm:$0xf]
        %v761 = vld [vmem:[#allocation5 + $0xc] sm:$0xf]
        %v762 = vld [vmem:[#allocation5 + $0x10] sm:$0xf]
        %v763 = vld [vmem:[#allocation5 + $0x14] sm:$0xf]
        %v764 = vld [vmem:[#allocation5 + $0x18] sm:$0xf]
        %v765 = vld [vmem:[#allocation5 + $0x1c] sm:$0xf]
        %v766 = vld [vmem:[#allocation5 + $0x20] sm:$0xf]
        %v767 = vld [vmem:[#allocation5 + $0x24] sm:$0xf]
        %v768 = vld [vmem:[#allocation5 + $0x28] sm:$0xf]
        %v769 = vld [vmem:[#allocation5 + $0x2c] sm:$0xf]
        %v770 = vld [vmem:[#allocation5 + $0x30] sm:$0xf]
        %v771 = vld [vmem:[#allocation5 + $0x34] sm:$0xf]
        %v772 = vld [vmem:[#allocation5 + $0x38] sm:$0xf]
        %v773 = vld [vmem:[#allocation5 + $0x3c] sm:$0xf]
        %v774 = vld [vmem:[#allocation5 + $0x40] sm:$0xf]
        %v775 = vld [vmem:[#allocation5 + $0x44] sm:$0xf]
        %v776 = vld [vmem:[#allocation5 + $0x48] sm:$0xf]
        %v777 = vld [vmem:[#allocation5 + $0x4c] sm:$0xf]
        %v778 = vld [vmem:[#allocation5 + $0x50] sm:$0xf]
        %v779 = vld [vmem:[#allocation5 + $0x54] sm:$0xf]
        %v780 = vld [vmem:[#allocation5 + $0x58] sm:$0xf]
        %v781 = vld [vmem:[#allocation5 + $0x5c] sm:$0xf]
        %v782 = vld [vmem:[#allocation5 + $0x60] sm:$0xf]
        %v783 = vld [vmem:[#allocation5 + $0x64] sm:$0xf]
        %v784 = vld [vmem:[#allocation5 + $0x68] sm:$0xf]
        %v785 = vld [vmem:[#allocation5 + $0x6c] sm:$0xf]
        %v786 = vld [vmem:[#allocation5 + $0x70] sm:$0xf]
        %v787 = vld [vmem:[#allocation5 + $0x74] sm:$0xf]
        %v788 = vld [vmem:[#allocation5 + $0x78] sm:$0xf]
        %v789 = vld [vmem:[#allocation5 + $0x7c] sm:$0xf]
        %v790 = vld [vmem:[#allocation5 + $0x80] sm:$0xf]
        %v791 = vld [vmem:[#allocation5 + $0x84] sm:$0xf]
        %v792 = vld [vmem:[#allocation5 + $0x88] sm:$0xf]
        %v793 = vld [vmem:[#allocation5 + $0x8c] sm:$0xf]
        %v794 = vld [vmem:[#allocation5 + $0x90] sm:$0xf]
        %v795 = vld [vmem:[#allocation5 + $0x94] sm:$0xf]
        %v796 = vld [vmem:[#allocation5 + $0x98] sm:$0xf]
        %v797 = vld [vmem:[#allocation5 + $0x9c] sm:$0xf]
        %v798 = vld [vmem:[#allocation5 + $0xa0] sm:$0xf]
        %v799 = vld [vmem:[#allocation5 + $0xa4] sm:$0xf]
        %v800 = vld [vmem:[#allocation5 + $0xa8] sm:$0xf]
        %v801 = vld [vmem:[#allocation5 + $0xac] sm:$0xf]
        %v802 = vld [vmem:[#allocation5 + $0xb0] sm:$0xf]
        %v803 = vld [vmem:[#allocation5 + $0xb4] sm:$0xf]
        %v804 = vld [vmem:[#allocation5 + $0xb8] sm:$0xf]
        %v805 = vld [vmem:[#allocation5 + $0xbc] sm:$0xf]
        %s806 = scalar_lea.vmem %s254, 12 [#allocation2]
        %v807 = vld [vmem:[%s806] sm:$0xf]
        %v808 = vld [vmem:[%s806 + $0x4] sm:$0xf]
        %v809 = vld [vmem:[%s806 + $0x8] sm:$0x1]
        %v810 = vld [vmem:[%s806 + $0xc] sm:$0xf]
        %v811 = vld [vmem:[%s806 + $0x10] sm:$0xf]
        %v812 = vld [vmem:[%s806 + $0x14] sm:$0x1]
        %v813 = vld [vmem:[%s806 + $0x18] sm:$0xf]
        %v814 = vld [vmem:[%s806 + $0x1c] sm:$0xf]
        %v815 = vld [vmem:[%s806 + $0x20] sm:$0x1]
        %v816 = vld [vmem:[%s806 + $0x24] sm:$0xf]
        %v817 = vld [vmem:[%s806 + $0x28] sm:$0xf]
        %v818 = vld [vmem:[%s806 + $0x2c] sm:$0x1]
        %v819 = vld [vmem:[%s806 + $0x30] sm:$0xf]
        %v820 = vld [vmem:[%s806 + $0x34] sm:$0xf]
        %v821 = vld [vmem:[%s806 + $0x38] sm:$0x1]
        %v822 = vld [vmem:[%s806 + $0x3c] sm:$0xf]
        %v823 = vld [vmem:[%s806 + $0x40] sm:$0xf]
        %v824 = vld [vmem:[%s806 + $0x44] sm:$0x1]
        %v825 = vld [vmem:[%s806 + $0x48] sm:$0xf]
        %v826 = vld [vmem:[%s806 + $0x4c] sm:$0xf]
        %v827 = vld [vmem:[%s806 + $0x50] sm:$0x1]
        %v828 = vld [vmem:[%s806 + $0x54] sm:$0xf]
        %v829 = vld [vmem:[%s806 + $0x58] sm:$0xf]
        %v830 = vld [vmem:[%s806 + $0x5c] sm:$0x1]
        %v831 = vld [vmem:[%s806 + $0x60] sm:$0xf]
        %v832 = vld [vmem:[%s806 + $0x64] sm:$0xf]
        %v833 = vld [vmem:[%s806 + $0x68] sm:$0x1]
        %v834 = vld [vmem:[%s806 + $0x6c] sm:$0xf]
        %v835 = vld [vmem:[%s806 + $0x70] sm:$0xf]
        %v836 = vld [vmem:[%s806 + $0x74] sm:$0x1]
        %v837 = vld [vmem:[%s806 + $0x78] sm:$0xf]
        %v838 = vld [vmem:[%s806 + $0x7c] sm:$0xf]
        %v839 = vld [vmem:[%s806 + $0x80] sm:$0x1]
        %v840 = vld [vmem:[%s806 + $0x84] sm:$0xf]
        %v841 = vld [vmem:[%s806 + $0x88] sm:$0xf]
        %v842 = vld [vmem:[%s806 + $0x8c] sm:$0x1]
        %v843 = vld [vmem:[%s806 + $0x90] sm:$0xf]
        %v844 = vld [vmem:[%s806 + $0x94] sm:$0xf]
        %v845 = vld [vmem:[%s806 + $0x98] sm:$0x1]
        %v846 = vld [vmem:[%s806 + $0x9c] sm:$0xf]
        %v847 = vld [vmem:[%s806 + $0xa0] sm:$0xf]
        %v848 = vld [vmem:[%s806 + $0xa4] sm:$0x1]
        %v849 = vld [vmem:[%s806 + $0xa8] sm:$0xf]
        %v850 = vld [vmem:[%s806 + $0xac] sm:$0xf]
        %v851 = vld [vmem:[%s806 + $0xb0] sm:$0x1]
        %v852 = vld [vmem:[%s806 + $0xb4] sm:$0xf]
        %v853 = vld [vmem:[%s806 + $0xb8] sm:$0xf]
        %v854 = vld [vmem:[%s806 + $0xbc] sm:$0x1]
        %v887 = vunpack.c.l.b16 %v807
        %v888 = vunpack.c.l.b16 %v808
        %v889 = vunpack.c.l.b16 %v810
        %v890 = vunpack.c.l.b16 %v811
        %v891 = vunpack.c.l.b16 %v813
        %v892 = vunpack.c.l.b16 %v814
        %v893 = vunpack.c.l.b16 %v816
        %v894 = vunpack.c.l.b16 %v817
        %v895 = vunpack.c.l.b16 %v819
        %v896 = vunpack.c.l.b16 %v820
        %v897 = vunpack.c.l.b16 %v822
        %v898 = vunpack.c.l.b16 %v823
        %v899 = vunpack.c.l.b16 %v825
        %v900 = vunpack.c.l.b16 %v826
        %v901 = vunpack.c.l.b16 %v828
        %v902 = vunpack.c.l.b16 %v829
        %v903 = vunpack.c.l.b16 %v831
        %v904 = vunpack.c.l.b16 %v832
        %v905 = vunpack.c.l.b16 %v834
        %v906 = vunpack.c.l.b16 %v835
        %v907 = vunpack.c.l.b16 %v837
        %v908 = vunpack.c.l.b16 %v838
        %v909 = vunpack.c.l.b16 %v840
        %v910 = vunpack.c.l.b16 %v841
        %v911 = vunpack.c.l.b16 %v843
        %v912 = vunpack.c.l.b16 %v844
        %v913 = vunpack.c.l.b16 %v846
        %v914 = vunpack.c.l.b16 %v847
        %v915 = vunpack.c.l.b16 %v849
        %v916 = vunpack.c.l.b16 %v850
        %v917 = vunpack.c.l.b16 %v852
        %v918 = vunpack.c.l.b16 %v853
        %v919 = vpack.c.b16 %v888, %v887
        %v920 = vpack.c.b16 %v890, %v889
        %v921 = vpack.c.b16 %v892, %v891
        %v922 = vpack.c.b16 %v894, %v893
        %v923 = vpack.c.b16 %v896, %v895
        %v924 = vpack.c.b16 %v898, %v897
        %v925 = vpack.c.b16 %v900, %v899
        %v926 = vpack.c.b16 %v902, %v901
        %v927 = vpack.c.b16 %v904, %v903
        %v928 = vpack.c.b16 %v906, %v905
        %v929 = vpack.c.b16 %v908, %v907
        %v930 = vpack.c.b16 %v910, %v909
        %v931 = vpack.c.b16 %v912, %v911
        %v932 = vpack.c.b16 %v914, %v913
        %v933 = vpack.c.b16 %v916, %v915
        %v934 = vpack.c.b16 %v918, %v917
        %v967 = vunpack.c.l.b16 %v809
        %v968 = vunpack.c.l.b16 %v812
        %v969 = vunpack.c.l.b16 %v815
        %v970 = vunpack.c.l.b16 %v818
        %v971 = vunpack.c.l.b16 %v821
        %v972 = vunpack.c.l.b16 %v824
        %v973 = vunpack.c.l.b16 %v827
        %v974 = vunpack.c.l.b16 %v830
        %v975 = vunpack.c.l.b16 %v833
        %v976 = vunpack.c.l.b16 %v836
        %v977 = vunpack.c.l.b16 %v839
        %v978 = vunpack.c.l.b16 %v842
        %v979 = vunpack.c.l.b16 %v845
        %v980 = vunpack.c.l.b16 %v848
        %v981 = vunpack.c.l.b16 %v851
        %v982 = vunpack.c.l.b16 %v854
        %v983 = vpack.c.b16 %v967, %v967
        %v984 = vpack.c.b16 %v968, %v968
        %v985 = vpack.c.b16 %v969, %v969
        %v986 = vpack.c.b16 %v970, %v970
        %v987 = vpack.c.b16 %v971, %v971
        %v988 = vpack.c.b16 %v972, %v972
        %v989 = vpack.c.b16 %v973, %v973
        %v990 = vpack.c.b16 %v974, %v974
        %v991 = vpack.c.b16 %v975, %v975
        %v992 = vpack.c.b16 %v976, %v976
        %v993 = vpack.c.b16 %v977, %v977
        %v994 = vpack.c.b16 %v978, %v978
        %v995 = vpack.c.b16 %v979, %v979
        %v996 = vpack.c.b16 %v980, %v980
        %v997 = vpack.c.b16 %v981, %v981
        %v998 = vpack.c.b16 %v982, %v982
        %v1000 = vshrl.u32 %v919, 16
        %v1002 = vshll.u32 %v919, 16
        %v1004 = vrot.slane %v1002, 1
        %v1005 = vor.u32 %v1000, %v1004
        %v1007 = vshll.u32 %v983, 16
        %v1009 = vrot.slane %v1007, 1
        %v1010 = vsel %vm484, %v1005, %v1009
        %v1012 = vshrl.u32 %v920, 16
        %v1014 = vshll.u32 %v920, 16
        %v1016 = vrot.slane %v1014, 1
        %v1017 = vor.u32 %v1012, %v1016
        %v1019 = vshll.u32 %v984, 16
        %v1021 = vrot.slane %v1019, 1
        %v1022 = vsel %vm484, %v1017, %v1021
        %v1024 = vshrl.u32 %v921, 16
        %v1026 = vshll.u32 %v921, 16
        %v1028 = vrot.slane %v1026, 1
        %v1029 = vor.u32 %v1024, %v1028
        %v1031 = vshll.u32 %v985, 16
        %v1033 = vrot.slane %v1031, 1
        %v1034 = vsel %vm484, %v1029, %v1033
        %v1036 = vshrl.u32 %v922, 16
        %v1038 = vshll.u32 %v922, 16
        %v1040 = vrot.slane %v1038, 1
        %v1041 = vor.u32 %v1036, %v1040
        %v1043 = vshll.u32 %v986, 16
        %v1045 = vrot.slane %v1043, 1
        %v1046 = vsel %vm484, %v1041, %v1045
        %v1048 = vshrl.u32 %v923, 16
        %v1050 = vshll.u32 %v923, 16
        %v1052 = vrot.slane %v1050, 1
        %v1053 = vor.u32 %v1048, %v1052
        %v1055 = vshll.u32 %v987, 16
        %v1057 = vrot.slane %v1055, 1
        %v1058 = vsel %vm484, %v1053, %v1057
        %v1060 = vshrl.u32 %v924, 16
        %v1062 = vshll.u32 %v924, 16
        %v1064 = vrot.slane %v1062, 1
        %v1065 = vor.u32 %v1060, %v1064
        %v1067 = vshll.u32 %v988, 16
        %v1069 = vrot.slane %v1067, 1
        %v1070 = vsel %vm484, %v1065, %v1069
        %v1072 = vshrl.u32 %v925, 16
        %v1074 = vshll.u32 %v925, 16
        %v1076 = vrot.slane %v1074, 1
        %v1077 = vor.u32 %v1072, %v1076
        %v1079 = vshll.u32 %v989, 16
        %v1081 = vrot.slane %v1079, 1
        %v1082 = vsel %vm484, %v1077, %v1081
        %v1084 = vshrl.u32 %v926, 16
        %v1086 = vshll.u32 %v926, 16
        %v1088 = vrot.slane %v1086, 1
        %v1089 = vor.u32 %v1084, %v1088
        %v1091 = vshll.u32 %v990, 16
        %v1093 = vrot.slane %v1091, 1
        %v1094 = vsel %vm484, %v1089, %v1093
        %v1096 = vshrl.u32 %v927, 16
        %v1098 = vshll.u32 %v927, 16
        %v1100 = vrot.slane %v1098, 1
        %v1101 = vor.u32 %v1096, %v1100
        %v1103 = vshll.u32 %v991, 16
        %v1105 = vrot.slane %v1103, 1
        %v1106 = vsel %vm484, %v1101, %v1105
        %v1108 = vshrl.u32 %v928, 16
        %v1110 = vshll.u32 %v928, 16
        %v1112 = vrot.slane %v1110, 1
        %v1113 = vor.u32 %v1108, %v1112
        %v1115 = vshll.u32 %v992, 16
        %v1117 = vrot.slane %v1115, 1
        %v1118 = vsel %vm484, %v1113, %v1117
        %v1120 = vshrl.u32 %v929, 16
        %v1122 = vshll.u32 %v929, 16
        %v1124 = vrot.slane %v1122, 1
        %v1125 = vor.u32 %v1120, %v1124
        %v1127 = vshll.u32 %v993, 16
        %v1129 = vrot.slane %v1127, 1
        %v1130 = vsel %vm484, %v1125, %v1129
        %v1132 = vshrl.u32 %v930, 16
        %v1134 = vshll.u32 %v930, 16
        %v1136 = vrot.slane %v1134, 1
        %v1137 = vor.u32 %v1132, %v1136
        %v1139 = vshll.u32 %v994, 16
        %v1141 = vrot.slane %v1139, 1
        %v1142 = vsel %vm484, %v1137, %v1141
        %v1144 = vshrl.u32 %v931, 16
        %v1146 = vshll.u32 %v931, 16
        %v1148 = vrot.slane %v1146, 1
        %v1149 = vor.u32 %v1144, %v1148
        %v1151 = vshll.u32 %v995, 16
        %v1153 = vrot.slane %v1151, 1
        %v1154 = vsel %vm484, %v1149, %v1153
        %v1156 = vshrl.u32 %v932, 16
        %v1158 = vshll.u32 %v932, 16
        %v1160 = vrot.slane %v1158, 1
        %v1161 = vor.u32 %v1156, %v1160
        %v1163 = vshll.u32 %v996, 16
        %v1165 = vrot.slane %v1163, 1
        %v1166 = vsel %vm484, %v1161, %v1165
        %v1168 = vshrl.u32 %v933, 16
        %v1170 = vshll.u32 %v933, 16
        %v1172 = vrot.slane %v1170, 1
        %v1173 = vor.u32 %v1168, %v1172
        %v1175 = vshll.u32 %v997, 16
        %v1177 = vrot.slane %v1175, 1
        %v1178 = vsel %vm484, %v1173, %v1177
        %v1180 = vshrl.u32 %v934, 16
        %v1182 = vshll.u32 %v934, 16
        %v1184 = vrot.slane %v1182, 1
        %v1185 = vor.u32 %v1180, %v1184
        %v1187 = vshll.u32 %v998, 16
        %v1189 = vrot.slane %v1187, 1
        %v1190 = vsel %vm484, %v1185, %v1189
        %v1207 = vrot.slane %v919, 1
        %v1208 = vrot.slane %v983, 1
        %v1209 = vsel %vm693, %v1207, %v1208
        %v1210 = vrot.slane %v920, 1
        %v1211 = vrot.slane %v984, 1
        %v1212 = vsel %vm693, %v1210, %v1211
        %v1213 = vrot.slane %v921, 1
        %v1214 = vrot.slane %v985, 1
        %v1215 = vsel %vm693, %v1213, %v1214
        %v1216 = vrot.slane %v922, 1
        %v1217 = vrot.slane %v986, 1
        %v1218 = vsel %vm693, %v1216, %v1217
        %v1219 = vrot.slane %v923, 1
        %v1220 = vrot.slane %v987, 1
        %v1221 = vsel %vm693, %v1219, %v1220
        %v1222 = vrot.slane %v924, 1
        %v1223 = vrot.slane %v988, 1
        %v1224 = vsel %vm693, %v1222, %v1223
        %v1225 = vrot.slane %v925, 1
        %v1226 = vrot.slane %v989, 1
        %v1227 = vsel %vm693, %v1225, %v1226
        %v1228 = vrot.slane %v926, 1
        %v1229 = vrot.slane %v990, 1
        %v1230 = vsel %vm693, %v1228, %v1229
        %v1231 = vrot.slane %v927, 1
        %v1232 = vrot.slane %v991, 1
        %v1233 = vsel %vm693, %v1231, %v1232
        %v1234 = vrot.slane %v928, 1
        %v1235 = vrot.slane %v992, 1
        %v1236 = vsel %vm693, %v1234, %v1235
        %v1237 = vrot.slane %v929, 1
        %v1238 = vrot.slane %v993, 1
        %v1239 = vsel %vm693, %v1237, %v1238
        %v1240 = vrot.slane %v930, 1
        %v1241 = vrot.slane %v994, 1
        %v1242 = vsel %vm693, %v1240, %v1241
        %v1243 = vrot.slane %v931, 1
        %v1244 = vrot.slane %v995, 1
        %v1245 = vsel %vm693, %v1243, %v1244
        %v1246 = vrot.slane %v932, 1
        %v1247 = vrot.slane %v996, 1
        %v1248 = vsel %vm693, %v1246, %v1247
        %v1249 = vrot.slane %v933, 1
        %v1250 = vrot.slane %v997, 1
        %v1251 = vsel %vm693, %v1249, %v1250
        %v1252 = vrot.slane %v934, 1
        %v1253 = vrot.slane %v998, 1
        %v1254 = vsel %vm693, %v1252, %v1253
        %s1271 = scalar_lea.vmem [#allocation5], 192
        %v1272 = vld [vmem:[%s1271] sm:$0xf]
        %v1273 = vld [vmem:[%s1271 + $0x4] sm:$0xf]
        %v1274 = vld [vmem:[%s1271 + $0x8] sm:$0xf]
        %v1275 = vld [vmem:[%s1271 + $0xc] sm:$0xf]
        %v1276 = vld [vmem:[%s1271 + $0x10] sm:$0xf]
        %v1277 = vld [vmem:[%s1271 + $0x14] sm:$0xf]
        %v1278 = vld [vmem:[%s1271 + $0x18] sm:$0xf]
        %v1279 = vld [vmem:[%s1271 + $0x1c] sm:$0xf]
        %v1280 = vld [vmem:[%s1271 + $0x20] sm:$0xf]
        %v1281 = vld [vmem:[%s1271 + $0x24] sm:$0xf]
        %v1282 = vld [vmem:[%s1271 + $0x28] sm:$0xf]
        %v1283 = vld [vmem:[%s1271 + $0x2c] sm:$0xf]
        %v1284 = vld [vmem:[%s1271 + $0x30] sm:$0xf]
        %v1285 = vld [vmem:[%s1271 + $0x34] sm:$0xf]
        %v1286 = vld [vmem:[%s1271 + $0x38] sm:$0xf]
        %v1287 = vld [vmem:[%s1271 + $0x3c] sm:$0xf]
        %v1288 = vld [vmem:[%s1271 + $0x40] sm:$0xf]
        %v1289 = vld [vmem:[%s1271 + $0x44] sm:$0xf]
        %v1290 = vld [vmem:[%s1271 + $0x48] sm:$0xf]
        %v1291 = vld [vmem:[%s1271 + $0x4c] sm:$0xf]
        %v1292 = vld [vmem:[%s1271 + $0x50] sm:$0xf]
        %v1293 = vld [vmem:[%s1271 + $0x54] sm:$0xf]
        %v1294 = vld [vmem:[%s1271 + $0x58] sm:$0xf]
        %v1295 = vld [vmem:[%s1271 + $0x5c] sm:$0xf]
        %v1296 = vld [vmem:[%s1271 + $0x60] sm:$0xf]
        %v1297 = vld [vmem:[%s1271 + $0x64] sm:$0xf]
        %v1298 = vld [vmem:[%s1271 + $0x68] sm:$0xf]
        %v1299 = vld [vmem:[%s1271 + $0x6c] sm:$0xf]
        %v1300 = vld [vmem:[%s1271 + $0x70] sm:$0xf]
        %v1301 = vld [vmem:[%s1271 + $0x74] sm:$0xf]
        %v1302 = vld [vmem:[%s1271 + $0x78] sm:$0xf]
        %v1303 = vld [vmem:[%s1271 + $0x7c] sm:$0xf]
        %v1304 = vld [vmem:[%s1271 + $0x80] sm:$0xf]
        %v1305 = vld [vmem:[%s1271 + $0x84] sm:$0xf]
        %v1306 = vld [vmem:[%s1271 + $0x88] sm:$0xf]
        %v1307 = vld [vmem:[%s1271 + $0x8c] sm:$0xf]
        %v1308 = vld [vmem:[%s1271 + $0x90] sm:$0xf]
        %v1309 = vld [vmem:[%s1271 + $0x94] sm:$0xf]
        %v1310 = vld [vmem:[%s1271 + $0x98] sm:$0xf]
        %v1311 = vld [vmem:[%s1271 + $0x9c] sm:$0xf]
        %v1312 = vld [vmem:[%s1271 + $0xa0] sm:$0xf]
        %v1313 = vld [vmem:[%s1271 + $0xa4] sm:$0xf]
        %v1314 = vld [vmem:[%s1271 + $0xa8] sm:$0xf]
        %v1315 = vld [vmem:[%s1271 + $0xac] sm:$0xf]
        %v1316 = vld [vmem:[%s1271 + $0xb0] sm:$0xf]
        %v1317 = vld [vmem:[%s1271 + $0xb4] sm:$0xf]
        %v1318 = vld [vmem:[%s1271 + $0xb8] sm:$0xf]
        %v1319 = vld [vmem:[%s1271 + $0xbc] sm:$0xf]
        %v1368 = vunpack.c.l.b16 %v1272
        %v1369 = vunpack.c.l.b16 %v1273
        %v1370 = vunpack.c.l.b16 %v1274
        %v1371 = vunpack.c.l.b16 %v1275
        %v1372 = vunpack.c.l.b16 %v1276
        %v1373 = vunpack.c.l.b16 %v1277
        %v1374 = vunpack.c.l.b16 %v1278
        %v1375 = vunpack.c.l.b16 %v1279
        %v1376 = vunpack.c.l.b16 %v1280
        %v1377 = vunpack.c.l.b16 %v1281
        %v1378 = vunpack.c.l.b16 %v1282
        %v1379 = vunpack.c.l.b16 %v1283
        %v1380 = vunpack.c.l.b16 %v1284
        %v1381 = vunpack.c.l.b16 %v1285
        %v1382 = vunpack.c.l.b16 %v1286
        %v1383 = vunpack.c.l.b16 %v1287
        %v1384 = vunpack.c.l.b16 %v1288
        %v1385 = vunpack.c.l.b16 %v1289
        %v1386 = vunpack.c.l.b16 %v1290
        %v1387 = vunpack.c.l.b16 %v1291
        %v1388 = vunpack.c.l.b16 %v1292
        %v1389 = vunpack.c.l.b16 %v1293
        %v1390 = vunpack.c.l.b16 %v1294
        %v1391 = vunpack.c.l.b16 %v1295
        %v1392 = vunpack.c.l.b16 %v1296
        %v1393 = vunpack.c.l.b16 %v1297
        %v1394 = vunpack.c.l.b16 %v1298
        %v1395 = vunpack.c.l.b16 %v1299
        %v1396 = vunpack.c.l.b16 %v1300
        %v1397 = vunpack.c.l.b16 %v1301
        %v1398 = vunpack.c.l.b16 %v1302
        %v1399 = vunpack.c.l.b16 %v1303
        %v1400 = vunpack.c.l.b16 %v1304
        %v1401 = vunpack.c.l.b16 %v1305
        %v1402 = vunpack.c.l.b16 %v1306
        %v1403 = vunpack.c.l.b16 %v1307
        %v1404 = vunpack.c.l.b16 %v1308
        %v1405 = vunpack.c.l.b16 %v1309
        %v1406 = vunpack.c.l.b16 %v1310
        %v1407 = vunpack.c.l.b16 %v1311
        %v1408 = vunpack.c.l.b16 %v1312
        %v1409 = vunpack.c.l.b16 %v1313
        %v1410 = vunpack.c.l.b16 %v1314
        %v1411 = vunpack.c.l.b16 %v1315
        %v1412 = vunpack.c.l.b16 %v1316
        %v1413 = vunpack.c.l.b16 %v1317
        %v1414 = vunpack.c.l.b16 %v1318
        %v1415 = vunpack.c.l.b16 %v1319
        %v1416 = vpack.c.b16 %v1369, %v1368
        %v1417 = vpack.c.b16 %v1371, %v1370
        %v1418 = vpack.c.b16 %v1373, %v1372
        %v1419 = vpack.c.b16 %v1375, %v1374
        %v1420 = vpack.c.b16 %v1377, %v1376
        %v1421 = vpack.c.b16 %v1379, %v1378
        %v1422 = vpack.c.b16 %v1381, %v1380
        %v1423 = vpack.c.b16 %v1383, %v1382
        %v1424 = vpack.c.b16 %v1385, %v1384
        %v1425 = vpack.c.b16 %v1387, %v1386
        %v1426 = vpack.c.b16 %v1389, %v1388
        %v1427 = vpack.c.b16 %v1391, %v1390
        %v1428 = vpack.c.b16 %v1393, %v1392
        %v1429 = vpack.c.b16 %v1395, %v1394
        %v1430 = vpack.c.b16 %v1397, %v1396
        %v1431 = vpack.c.b16 %v1399, %v1398
        %v1432 = vpack.c.b16 %v1401, %v1400
        %v1433 = vpack.c.b16 %v1403, %v1402
        %v1434 = vpack.c.b16 %v1405, %v1404
        %v1435 = vpack.c.b16 %v1407, %v1406
        %v1436 = vpack.c.b16 %v1409, %v1408
        %v1437 = vpack.c.b16 %v1411, %v1410
        %v1438 = vpack.c.b16 %v1413, %v1412
        %v1439 = vpack.c.b16 %v1415, %v1414
        %1464 = vmatprep.subr.bf16.mxu0 0
        %1465 = vmatpush1.bf16.msra.mxu0 %v1416
        %1466 = vmatprep.subr.bf16.mxu0 0
        %1467 = vmatpush1.bf16.msra.mxu0 %v1417
        %1468 = vmatprep.subr.bf16.mxu0 0
        %1469 = vmatpush1.bf16.msra.mxu0 %v1418
        %1470 = vmatprep.subr.bf16.mxu0 0
        %1471 = vmatpush1.bf16.msra.mxu0 %v1419
        %1472 = vmatprep.subr.bf16.mxu0 0
        %1473 = vmatpush1.bf16.msra.mxu0 %v1420
        %1474 = vmatprep.subr.bf16.mxu0 0
        %1475 = vmatpush1.bf16.msra.mxu0 %v1421
        %1476 = vmatprep.subr.bf16.mxu0 0
        %1477 = vmatpush1.bf16.msra.mxu0 %v1422
        %1478 = vmatprep.subr.bf16.mxu0 0
        %1479 = vmatpush1.bf16.msra.mxu0 %v1423
        %1480 = vmatprep.subr.bf16.mxu0 0
        %1481 = vmatpush1.bf16.msra.mxu0 %v1424
        %1482 = vmatprep.subr.bf16.mxu0 0
        %1483 = vmatpush1.bf16.msra.mxu0 %v1425
        %1484 = vmatprep.subr.bf16.mxu0 0
        %1485 = vmatpush1.bf16.msra.mxu0 %v1426
        %1486 = vmatprep.subr.bf16.mxu0 0
        %1487 = vmatpush1.bf16.msra.mxu0 %v1427
        %1488 = vmatprep.subr.bf16.mxu0 0
        %1489 = vmatpush1.bf16.msra.mxu0 %v1428
        %1490 = vmatprep.subr.bf16.mxu0 0
        %1491 = vmatpush1.bf16.msra.mxu0 %v1429
        %1492 = vmatprep.subr.bf16.mxu0 0
        %1493 = vmatpush1.bf16.msra.mxu0 %v1430
        %1494 = vmatprep.subr.bf16.mxu0 0
        %1495 = vmatpush1.bf16.msra.mxu0 %v1431
        %1496 = vmatprep.mubr.bf16.mxu0 %v1010
        %1497 = vmatmul.mubr.bf16.gmra.mrb[0].mxu0 %v919
        %v1498 = vpop.f32.mrb[0].mxu0
        %v1499 = vadd.f32 0.0, %v1498
        %v1500 = vpop.f32.mrb[0].mxu0
        %v1501 = vpop.f32.mrb[0].mxu0
        %v1502 = vadd.f32 0.0, %v1501
        %v1503 = vpop.f32.mrb[0].mxu0
        %1504 = vmatprep.mubr.bf16.mxu0 %v1022
        %1505 = vmatmul.mubr.bf16.gmra.mrb[0].mxu0 %v920
        %v1506 = vpop.f32.mrb[0].mxu0
        %v1507 = vadd.f32 0.0, %v1506
        %v1508 = vpop.f32.mrb[0].mxu0
        %v1509 = vpop.f32.mrb[0].mxu0
        %v1510 = vadd.f32 0.0, %v1509
        %v1511 = vpop.f32.mrb[0].mxu0
        %1512 = vmatprep.mubr.bf16.mxu0 %v1034
        %1513 = vmatmul.mubr.bf16.gmra.mrb[0].mxu0 %v921
        %v1514 = vpop.f32.mrb[0].mxu0
        %v1515 = vadd.f32 0.0, %v1514
        %v1516 = vpop.f32.mrb[0].mxu0
        %v1517 = vpop.f32.mrb[0].mxu0
        %v1518 = vadd.f32 0.0, %v1517
        %v1519 = vpop.f32.mrb[0].mxu0
        %1520 = vmatprep.mubr.bf16.mxu0 %v1046
        %1521 = vmatmul.mubr.bf16.gmra.mrb[0].mxu0 %v922
        %v1522 = vpop.f32.mrb[0].mxu0
        %v1523 = vadd.f32 0.0, %v1522
        %v1524 = vpop.f32.mrb[0].mxu0
        %v1525 = vpop.f32.mrb[0].mxu0
        %v1526 = vadd.f32 0.0, %v1525
        %v1527 = vpop.f32.mrb[0].mxu0
        %1528 = vmatprep.mubr.bf16.mxu0 %v1058
        %1529 = vmatmul.mubr.bf16.gmra.mrb[0].mxu0 %v923
        %v1530 = vpop.f32.mrb[0].mxu0
        %v1531 = vadd.f32 0.0, %v1530
        %v1532 = vpop.f32.mrb[0].mxu0
        %v1533 = vpop.f32.mrb[0].mxu0
        %v1534 = vadd.f32 0.0, %v1533
        %v1535 = vpop.f32.mrb[0].mxu0
        %1536 = vmatprep.mubr.bf16.mxu0 %v1070
        %1537 = vmatmul.mubr.bf16.gmra.mrb[0].mxu0 %v924
        %v1538 = vpop.f32.mrb[0].mxu0
        %v1539 = vadd.f32 0.0, %v1538
        %v1540 = vpop.f32.mrb[0].mxu0
        %v1541 = vpop.f32.mrb[0].mxu0
        %v1542 = vadd.f32 0.0, %v1541
        %v1543 = vpop.f32.mrb[0].mxu0
        %1544 = vmatprep.mubr.bf16.mxu0 %v1082
        %1545 = vmatmul.mubr.bf16.gmra.mrb[0].mxu0 %v925
        %v1546 = vpop.f32.mrb[0].mxu0
        %v1547 = vadd.f32 0.0, %v1546
        %v1548 = vpop.f32.mrb[0].mxu0
        %v1549 = vpop.f32.mrb[0].mxu0
        %v1550 = vadd.f32 0.0, %v1549
        %v1551 = vpop.f32.mrb[0].mxu0
        %1552 = vmatprep.mubr.bf16.mxu0 %v1094
        %1553 = vmatmul.mubr.bf16.gmra.mrb[0].mxu0 %v926
        %v1554 = vpop.f32.mrb[0].mxu0
        %v1555 = vadd.f32 0.0, %v1554
        %v1556 = vpop.f32.mrb[0].mxu0
        %v1557 = vpop.f32.mrb[0].mxu0
        %v1558 = vadd.f32 0.0, %v1557
        %v1559 = vpop.f32.mrb[0].mxu0
        %1560 = vmatprep.mubr.bf16.mxu0 %v1106
        %1561 = vmatmul.mubr.bf16.gmra.mrb[0].mxu0 %v927
        %v1562 = vpop.f32.mrb[0].mxu0
        %v1563 = vadd.f32 0.0, %v1562
        %v1564 = vpop.f32.mrb[0].mxu0
        %v1565 = vpop.f32.mrb[0].mxu0
        %v1566 = vadd.f32 0.0, %v1565
        %v1567 = vpop.f32.mrb[0].mxu0
        %1568 = vmatprep.mubr.bf16.mxu0 %v1118
        %1569 = vmatmul.mubr.bf16.gmra.mrb[0].mxu0 %v928
        %v1570 = vpop.f32.mrb[0].mxu0
        %v1571 = vadd.f32 0.0, %v1570
        %v1572 = vpop.f32.mrb[0].mxu0
        %v1573 = vpop.f32.mrb[0].mxu0
        %v1574 = vadd.f32 0.0, %v1573
        %v1575 = vpop.f32.mrb[0].mxu0
        %1576 = vmatprep.mubr.bf16.mxu0 %v1130
        %1577 = vmatmul.mubr.bf16.gmra.mrb[0].mxu0 %v929
        %v1578 = vpop.f32.mrb[0].mxu0
        %v1579 = vadd.f32 0.0, %v1578
        %v1580 = vpop.f32.mrb[0].mxu0
        %v1581 = vpop.f32.mrb[0].mxu0
        %v1582 = vadd.f32 0.0, %v1581
        %v1583 = vpop.f32.mrb[0].mxu0
        %1584 = vmatprep.mubr.bf16.mxu0 %v1142
        %1585 = vmatmul.mubr.bf16.gmra.mrb[0].mxu0 %v930
        %v1586 = vpop.f32.mrb[0].mxu0
        %v1587 = vadd.f32 0.0, %v1586
        %v1588 = vpop.f32.mrb[0].mxu0
        %v1589 = vpop.f32.mrb[0].mxu0
        %v1590 = vadd.f32 0.0, %v1589
        %v1591 = vpop.f32.mrb[0].mxu0
        %1592 = vmatprep.mubr.bf16.mxu0 %v1154
        %1593 = vmatmul.mubr.bf16.gmra.mrb[0].mxu0 %v931
        %v1594 = vpop.f32.mrb[0].mxu0
        %v1595 = vadd.f32 0.0, %v1594
        %v1596 = vpop.f32.mrb[0].mxu0
        %v1597 = vpop.f32.mrb[0].mxu0
        %v1598 = vadd.f32 0.0, %v1597
        %v1599 = vpop.f32.mrb[0].mxu0
        %1600 = vmatprep.mubr.bf16.mxu0 %v1166
        %1601 = vmatmul.mubr.bf16.gmra.mrb[0].mxu0 %v932
        %v1602 = vpop.f32.mrb[0].mxu0
        %v1603 = vadd.f32 0.0, %v1602
        %v1604 = vpop.f32.mrb[0].mxu0
        %v1605 = vpop.f32.mrb[0].mxu0
        %v1606 = vadd.f32 0.0, %v1605
        %v1607 = vpop.f32.mrb[0].mxu0
        %1608 = vmatprep.mubr.bf16.mxu0 %v1178
        %1609 = vmatmul.mubr.bf16.gmra.mrb[0].mxu0 %v933
        %v1610 = vpop.f32.mrb[0].mxu0
        %v1611 = vadd.f32 0.0, %v1610
        %v1612 = vpop.f32.mrb[0].mxu0
        %v1613 = vpop.f32.mrb[0].mxu0
        %v1614 = vadd.f32 0.0, %v1613
        %v1615 = vpop.f32.mrb[0].mxu0
        %1616 = vmatprep.mubr.bf16.mxu0 %v1190
        %1617 = vmatmul.mubr.bf16.gmra.mrb[0].mxu0 %v934
        %v1618 = vpop.f32.mrb[0].mxu0
        %v1619 = vadd.f32 0.0, %v1618
        %v1620 = vpop.f32.mrb[0].mxu0
        %v1621 = vpop.f32.mrb[0].mxu0
        %v1622 = vadd.f32 0.0, %v1621
        %v1623 = vpop.f32.mrb[0].mxu0
        %1624 = vdwg.mxu0
        %1625 = vmatprep.subr.bf16.mxu0 0
        %1626 = vmatpush1.bf16.msra.mxu0 %v1432
        %1627 = vmatprep.subr.bf16.mxu0 0
        %1628 = vmatpush1.bf16.msra.mxu0 %v1433
        %1629 = vmatprep.subr.bf16.mxu0 0
        %1630 = vmatpush1.bf16.msra.mxu0 %v1434
        %1631 = vmatprep.subr.bf16.mxu0 0
        %1632 = vmatpush1.bf16.msra.mxu0 %v1435
        %1633 = vmatprep.subr.bf16.mxu0 0
        %1634 = vmatpush1.bf16.msra.mxu0 %v1436
        %1635 = vmatprep.subr.bf16.mxu0 0
        %1636 = vmatpush1.bf16.msra.mxu0 %v1437
        %1637 = vmatprep.subr.bf16.mxu0 0
        %1638 = vmatpush1.bf16.msra.mxu0 %v1438
        %1639 = vmatprep.subr.bf16.mxu0 0
        %1640 = vmatpush1.bf16.msra.mxu0 %v1439
        %1641 = vmatprep.subr.bf16.mxu0 0
        %1642 = vmatpush1.bf16.msra.mxu0 0
        %1643 = vmatprep.subr.bf16.mxu0 0
        %1644 = vmatpush1.bf16.msra.mxu0 0
        %1645 = vmatprep.subr.bf16.mxu0 0
        %1646 = vmatpush1.bf16.msra.mxu0 0
        %1647 = vmatprep.subr.bf16.mxu0 0
        %1648 = vmatpush1.bf16.msra.mxu0 0
        %1649 = vmatprep.subr.bf16.mxu0 0
        %1650 = vmatpush1.bf16.msra.mxu0 0
        %1651 = vmatprep.subr.bf16.mxu0 0
        %1652 = vmatpush1.bf16.msra.mxu0 0
        %1653 = vmatprep.subr.bf16.mxu0 0
        %1654 = vmatpush1.bf16.msra.mxu0 0
        %1655 = vmatprep.subr.bf16.mxu0 0
        %1656 = vmatpush1.bf16.msra.mxu0 0
        %1657 = vmatprep.mubr.bf16.mxu0 0
        %1658 = vmatmul.mubr.bf16.gmra.mrb[0].mxu0 %v1209
        %v1659 = vpop.f32.mrb[0].mxu0
        %v1660 = vadd.f32 %v1499, %v1659
        %v1661 = vpop.f32.mrb[0].mxu0
        %v1662 = vpop.f32.mrb[0].mxu0
        %v1663 = vadd.f32 %v1502, %v1662
        %v1664 = vpop.f32.mrb[0].mxu0
        %1665 = vmatprep.mubr.bf16.mxu0 0
        %1666 = vmatmul.mubr.bf16.gmra.mrb[0].mxu0 %v1212
        %v1667 = vpop.f32.mrb[0].mxu0
        %v1668 = vadd.f32 %v1507, %v1667
        %v1669 = vpop.f32.mrb[0].mxu0
        %v1670 = vpop.f32.mrb[0].mxu0
        %v1671 = vadd.f32 %v1510, %v1670
        %v1672 = vpop.f32.mrb[0].mxu0
        %1673 = vmatprep.mubr.bf16.mxu0 0
        %1674 = vmatmul.mubr.bf16.gmra.mrb[0].mxu0 %v1215
        %v1675 = vpop.f32.mrb[0].mxu0
        %v1676 = vadd.f32 %v1515, %v1675
        %v1677 = vpop.f32.mrb[0].mxu0
        %v1678 = vpop.f32.mrb[0].mxu0
        %v1679 = vadd.f32 %v1518, %v1678
        %v1680 = vpop.f32.mrb[0].mxu0
        %1681 = vmatprep.mubr.bf16.mxu0 0
        %1682 = vmatmul.mubr.bf16.gmra.mrb[0].mxu0 %v1218
        %v1683 = vpop.f32.mrb[0].mxu0
        %v1684 = vadd.f32 %v1523, %v1683
        %v1685 = vpop.f32.mrb[0].mxu0
        %v1686 = vpop.f32.mrb[0].mxu0
        %v1687 = vadd.f32 %v1526, %v1686
        %v1688 = vpop.f32.mrb[0].mxu0
        %1689 = vmatprep.mubr.bf16.mxu0 0
        %1690 = vmatmul.mubr.bf16.gmra.mrb[0].mxu0 %v1221
        %v1691 = vpop.f32.mrb[0].mxu0
        %v1692 = vadd.f32 %v1531, %v1691
        %v1693 = vpop.f32.mrb[0].mxu0
        %v1694 = vpop.f32.mrb[0].mxu0
        %v1695 = vadd.f32 %v1534, %v1694
        %v1696 = vpop.f32.mrb[0].mxu0
        %1697 = vmatprep.mubr.bf16.mxu0 0
        %1698 = vmatmul.mubr.bf16.gmra.mrb[0].mxu0 %v1224
        %v1699 = vpop.f32.mrb[0].mxu0
        %v1700 = vadd.f32 %v1539, %v1699
        %v1701 = vpop.f32.mrb[0].mxu0
        %v1702 = vpop.f32.mrb[0].mxu0
        %v1703 = vadd.f32 %v1542, %v1702
        %v1704 = vpop.f32.mrb[0].mxu0
        %1705 = vmatprep.mubr.bf16.mxu0 0
        %1706 = vmatmul.mubr.bf16.gmra.mrb[0].mxu0 %v1227
        %v1707 = vpop.f32.mrb[0].mxu0
        %v1708 = vadd.f32 %v1547, %v1707
        %v1709 = vpop.f32.mrb[0].mxu0
        %v1710 = vpop.f32.mrb[0].mxu0
        %v1711 = vadd.f32 %v1550, %v1710
        %v1712 = vpop.f32.mrb[0].mxu0
        %1713 = vmatprep.mubr.bf16.mxu0 0
        %1714 = vmatmul.mubr.bf16.gmra.mrb[0].mxu0 %v1230
        %v1715 = vpop.f32.mrb[0].mxu0
        %v1716 = vadd.f32 %v1555, %v1715
        %v1717 = vpop.f32.mrb[0].mxu0
        %v1718 = vpop.f32.mrb[0].mxu0
        %v1719 = vadd.f32 %v1558, %v1718
        %v1720 = vpop.f32.mrb[0].mxu0
        %1721 = vmatprep.mubr.bf16.mxu0 0
        %1722 = vmatmul.mubr.bf16.gmra.mrb[0].mxu0 %v1233
        %v1723 = vpop.f32.mrb[0].mxu0
        %v1724 = vadd.f32 %v1563, %v1723
        %v1725 = vpop.f32.mrb[0].mxu0
        %v1726 = vpop.f32.mrb[0].mxu0
        %v1727 = vadd.f32 %v1566, %v1726
        %v1728 = vpop.f32.mrb[0].mxu0
        %1729 = vmatprep.mubr.bf16.mxu0 0
        %1730 = vmatmul.mubr.bf16.gmra.mrb[0].mxu0 %v1236
        %v1731 = vpop.f32.mrb[0].mxu0
        %v1732 = vadd.f32 %v1571, %v1731
        %v1733 = vpop.f32.mrb[0].mxu0
        %v1734 = vpop.f32.mrb[0].mxu0
        %v1735 = vadd.f32 %v1574, %v1734
        %v1736 = vpop.f32.mrb[0].mxu0
        %1737 = vmatprep.mubr.bf16.mxu0 0
        %1738 = vmatmul.mubr.bf16.gmra.mrb[0].mxu0 %v1239
        %v1739 = vpop.f32.mrb[0].mxu0
        %v1740 = vadd.f32 %v1579, %v1739
        %v1741 = vpop.f32.mrb[0].mxu0
        %v1742 = vpop.f32.mrb[0].mxu0
        %v1743 = vadd.f32 %v1582, %v1742
        %v1744 = vpop.f32.mrb[0].mxu0
        %1745 = vmatprep.mubr.bf16.mxu0 0
        %1746 = vmatmul.mubr.bf16.gmra.mrb[0].mxu0 %v1242
        %v1747 = vpop.f32.mrb[0].mxu0
        %v1748 = vadd.f32 %v1587, %v1747
        %v1749 = vpop.f32.mrb[0].mxu0
        %v1750 = vpop.f32.mrb[0].mxu0
        %v1751 = vadd.f32 %v1590, %v1750
        %v1752 = vpop.f32.mrb[0].mxu0
        %1753 = vmatprep.mubr.bf16.mxu0 0
        %1754 = vmatmul.mubr.bf16.gmra.mrb[0].mxu0 %v1245
        %v1755 = vpop.f32.mrb[0].mxu0
        %v1756 = vadd.f32 %v1595, %v1755
        %v1757 = vpop.f32.mrb[0].mxu0
        %v1758 = vpop.f32.mrb[0].mxu0
        %v1759 = vadd.f32 %v1598, %v1758
        %v1760 = vpop.f32.mrb[0].mxu0
        %1761 = vmatprep.mubr.bf16.mxu0 0
        %1762 = vmatmul.mubr.bf16.gmra.mrb[0].mxu0 %v1248
        %v1763 = vpop.f32.mrb[0].mxu0
        %v1764 = vadd.f32 %v1603, %v1763
        %v1765 = vpop.f32.mrb[0].mxu0
        %v1766 = vpop.f32.mrb[0].mxu0
        %v1767 = vadd.f32 %v1606, %v1766
        %v1768 = vpop.f32.mrb[0].mxu0
        %1769 = vmatprep.mubr.bf16.mxu0 0
        %1770 = vmatmul.mubr.bf16.gmra.mrb[0].mxu0 %v1251
        %v1771 = vpop.f32.mrb[0].mxu0
        %v1772 = vadd.f32 %v1611, %v1771
        %v1773 = vpop.f32.mrb[0].mxu0
        %v1774 = vpop.f32.mrb[0].mxu0
        %v1775 = vadd.f32 %v1614, %v1774
        %v1776 = vpop.f32.mrb[0].mxu0
        %1777 = vmatprep.mubr.bf16.mxu0 0
        %1778 = vmatmul.mubr.bf16.gmra.mrb[0].mxu0 %v1254
        %v1779 = vpop.f32.mrb[0].mxu0
        %v1780 = vadd.f32 %v1619, %v1779
        %v1781 = vpop.f32.mrb[0].mxu0
        %v1782 = vpop.f32.mrb[0].mxu0
        %v1783 = vadd.f32 %v1622, %v1782
        %v1784 = vpop.f32.mrb[0].mxu0
        %1785 = vdwg.mxu0
        %v1834 = vunpack.c.l.b16 %v758
        %v1835 = vunpack.c.l.b16 %v759
        %v1836 = vunpack.c.l.b16 %v760
        %v1837 = vunpack.c.l.b16 %v761
        %v1838 = vunpack.c.l.b16 %v762
        %v1839 = vunpack.c.l.b16 %v763
        %v1840 = vunpack.c.l.b16 %v764
        %v1841 = vunpack.c.l.b16 %v765
        %v1842 = vunpack.c.l.b16 %v766
        %v1843 = vunpack.c.l.b16 %v767
        %v1844 = vunpack.c.l.b16 %v768
        %v1845 = vunpack.c.l.b16 %v769
        %v1846 = vunpack.c.l.b16 %v770
        %v1847 = vunpack.c.l.b16 %v771
        %v1848 = vunpack.c.l.b16 %v772
        %v1849 = vunpack.c.l.b16 %v773
        %v1850 = vunpack.c.l.b16 %v774
        %v1851 = vunpack.c.l.b16 %v775
        %v1852 = vunpack.c.l.b16 %v776
        %v1853 = vunpack.c.l.b16 %v777
        %v1854 = vunpack.c.l.b16 %v778
        %v1855 = vunpack.c.l.b16 %v779
        %v1856 = vunpack.c.l.b16 %v780
        %v1857 = vunpack.c.l.b16 %v781
        %v1858 = vunpack.c.l.b16 %v782
        %v1859 = vunpack.c.l.b16 %v783
        %v1860 = vunpack.c.l.b16 %v784
        %v1861 = vunpack.c.l.b16 %v785
        %v1862 = vunpack.c.l.b16 %v786
        %v1863 = vunpack.c.l.b16 %v787
        %v1864 = vunpack.c.l.b16 %v788
        %v1865 = vunpack.c.l.b16 %v789
        %v1866 = vunpack.c.l.b16 %v790
        %v1867 = vunpack.c.l.b16 %v791
        %v1868 = vunpack.c.l.b16 %v792
        %v1869 = vunpack.c.l.b16 %v793
        %v1870 = vunpack.c.l.b16 %v794
        %v1871 = vunpack.c.l.b16 %v795
        %v1872 = vunpack.c.l.b16 %v796
        %v1873 = vunpack.c.l.b16 %v797
        %v1874 = vunpack.c.l.b16 %v798
        %v1875 = vunpack.c.l.b16 %v799
        %v1876 = vunpack.c.l.b16 %v800
        %v1877 = vunpack.c.l.b16 %v801
        %v1878 = vunpack.c.l.b16 %v802
        %v1879 = vunpack.c.l.b16 %v803
        %v1880 = vunpack.c.l.b16 %v804
        %v1881 = vunpack.c.l.b16 %v805
        %v1882 = vpack.c.b16 %v1835, %v1834
        %v1883 = vpack.c.b16 %v1837, %v1836
        %v1884 = vpack.c.b16 %v1839, %v1838
        %v1885 = vpack.c.b16 %v1841, %v1840
        %v1886 = vpack.c.b16 %v1843, %v1842
        %v1887 = vpack.c.b16 %v1845, %v1844
        %v1888 = vpack.c.b16 %v1847, %v1846
        %v1889 = vpack.c.b16 %v1849, %v1848
        %v1890 = vpack.c.b16 %v1851, %v1850
        %v1891 = vpack.c.b16 %v1853, %v1852
        %v1892 = vpack.c.b16 %v1855, %v1854
        %v1893 = vpack.c.b16 %v1857, %v1856
        %v1894 = vpack.c.b16 %v1859, %v1858
        %v1895 = vpack.c.b16 %v1861, %v1860
        %v1896 = vpack.c.b16 %v1863, %v1862
        %v1897 = vpack.c.b16 %v1865, %v1864
        %v1898 = vpack.c.b16 %v1867, %v1866
        %v1899 = vpack.c.b16 %v1869, %v1868
        %v1900 = vpack.c.b16 %v1871, %v1870
        %v1901 = vpack.c.b16 %v1873, %v1872
        %v1902 = vpack.c.b16 %v1875, %v1874
        %v1903 = vpack.c.b16 %v1877, %v1876
        %v1904 = vpack.c.b16 %v1879, %v1878
        %v1905 = vpack.c.b16 %v1881, %v1880
        %1930 = vmatprep.subr.bf16.mxu0 0
        %1931 = vmatpush1.bf16.msra.mxu0 %v1882
        %1932 = vmatprep.subr.bf16.mxu0 0
        %1933 = vmatpush1.bf16.msra.mxu0 %v1883
        %1934 = vmatprep.subr.bf16.mxu0 0
        %1935 = vmatpush1.bf16.msra.mxu0 %v1884
        %1936 = vmatprep.subr.bf16.mxu0 0
        %1937 = vmatpush1.bf16.msra.mxu0 %v1885
        %1938 = vmatprep.subr.bf16.mxu0 0
        %1939 = vmatpush1.bf16.msra.mxu0 %v1886
        %1940 = vmatprep.subr.bf16.mxu0 0
        %1941 = vmatpush1.bf16.msra.mxu0 %v1887
        %1942 = vmatprep.subr.bf16.mxu0 0
        %1943 = vmatpush1.bf16.msra.mxu0 %v1888
        %1944 = vmatprep.subr.bf16.mxu0 0
        %1945 = vmatpush1.bf16.msra.mxu0 %v1889
        %1946 = vmatprep.subr.bf16.mxu0 0
        %1947 = vmatpush1.bf16.msra.mxu0 %v1890
        %1948 = vmatprep.subr.bf16.mxu0 0
        %1949 = vmatpush1.bf16.msra.mxu0 %v1891
        %1950 = vmatprep.subr.bf16.mxu0 0
        %1951 = vmatpush1.bf16.msra.mxu0 %v1892
        %1952 = vmatprep.subr.bf16.mxu0 0
        %1953 = vmatpush1.bf16.msra.mxu0 %v1893
        %1954 = vmatprep.subr.bf16.mxu0 0
        %1955 = vmatpush1.bf16.msra.mxu0 %v1894
        %1956 = vmatprep.subr.bf16.mxu0 0
        %1957 = vmatpush1.bf16.msra.mxu0 %v1895
        %1958 = vmatprep.subr.bf16.mxu0 0
        %1959 = vmatpush1.bf16.msra.mxu0 %v1896
        %1960 = vmatprep.subr.bf16.mxu0 0
        %1961 = vmatpush1.bf16.msra.mxu0 %v1897
        %1962 = vmatprep.mubr.bf16.mxu0 %v496
        %1963 = vmatmul.mubr.bf16.gmra.mrb[0].mxu0 %v404
        %v1964 = vpop.f32.mrb[0].mxu0
        %v1965 = vadd.f32 %v1660, %v1964
        %v1966 = vpop.f32.mrb[0].mxu0
        %v1967 = vpop.f32.mrb[0].mxu0
        %v1968 = vadd.f32 %v1663, %v1967
        %v1969 = vpop.f32.mrb[0].mxu0
        %1970 = vmatprep.mubr.bf16.mxu0 %v508
        %1971 = vmatmul.mubr.bf16.gmra.mrb[0].mxu0 %v405
        %v1972 = vpop.f32.mrb[0].mxu0
        %v1973 = vadd.f32 %v1668, %v1972
        %v1974 = vpop.f32.mrb[0].mxu0
        %v1975 = vpop.f32.mrb[0].mxu0
        %v1976 = vadd.f32 %v1671, %v1975
        %v1977 = vpop.f32.mrb[0].mxu0
        %1978 = vmatprep.mubr.bf16.mxu0 %v520
        %1979 = vmatmul.mubr.bf16.gmra.mrb[0].mxu0 %v406
        %v1980 = vpop.f32.mrb[0].mxu0
        %v1981 = vadd.f32 %v1676, %v1980
        %v1982 = vpop.f32.mrb[0].mxu0
        %v1983 = vpop.f32.mrb[0].mxu0
        %v1984 = vadd.f32 %v1679, %v1983
        %v1985 = vpop.f32.mrb[0].mxu0
        %1986 = vmatprep.mubr.bf16.mxu0 %v532
        %1987 = vmatmul.mubr.bf16.gmra.mrb[0].mxu0 %v407
        %v1988 = vpop.f32.mrb[0].mxu0
        %v1989 = vadd.f32 %v1684, %v1988
        %v1990 = vpop.f32.mrb[0].mxu0
        %v1991 = vpop.f32.mrb[0].mxu0
        %v1992 = vadd.f32 %v1687, %v1991
        %v1993 = vpop.f32.mrb[0].mxu0
        %1994 = vmatprep.mubr.bf16.mxu0 %v544
        %1995 = vmatmul.mubr.bf16.gmra.mrb[0].mxu0 %v408
        %v1996 = vpop.f32.mrb[0].mxu0
        %v1997 = vadd.f32 %v1692, %v1996
        %v1998 = vpop.f32.mrb[0].mxu0
        %v1999 = vpop.f32.mrb[0].mxu0
        %v2000 = vadd.f32 %v1695, %v1999
        %v2001 = vpop.f32.mrb[0].mxu0
        %2002 = vmatprep.mubr.bf16.mxu0 %v556
        %2003 = vmatmul.mubr.bf16.gmra.mrb[0].mxu0 %v409
        %v2004 = vpop.f32.mrb[0].mxu0
        %v2005 = vadd.f32 %v1700, %v2004
        %v2006 = vpop.f32.mrb[0].mxu0
        %v2007 = vpop.f32.mrb[0].mxu0
        %v2008 = vadd.f32 %v1703, %v2007
        %v2009 = vpop.f32.mrb[0].mxu0
        %2010 = vmatprep.mubr.bf16.mxu0 %v568
        %2011 = vmatmul.mubr.bf16.gmra.mrb[0].mxu0 %v410
        %v2012 = vpop.f32.mrb[0].mxu0
        %v2013 = vadd.f32 %v1708, %v2012
        %v2014 = vpop.f32.mrb[0].mxu0
        %v2015 = vpop.f32.mrb[0].mxu0
        %v2016 = vadd.f32 %v1711, %v2015
        %v2017 = vpop.f32.mrb[0].mxu0
        %2018 = vmatprep.mubr.bf16.mxu0 %v580
        %2019 = vmatmul.mubr.bf16.gmra.mrb[0].mxu0 %v411
        %v2020 = vpop.f32.mrb[0].mxu0
        %v2021 = vadd.f32 %v1716, %v2020
        %v2022 = vpop.f32.mrb[0].mxu0
        %v2023 = vpop.f32.mrb[0].mxu0
        %v2024 = vadd.f32 %v1719, %v2023
        %v2025 = vpop.f32.mrb[0].mxu0
        %2026 = vmatprep.mubr.bf16.mxu0 %v592
        %2027 = vmatmul.mubr.bf16.gmra.mrb[0].mxu0 %v412
        %v2028 = vpop.f32.mrb[0].mxu0
        %v2029 = vadd.f32 %v1724, %v2028
        %v2030 = vpop.f32.mrb[0].mxu0
        %v2031 = vpop.f32.mrb[0].mxu0
        %v2032 = vadd.f32 %v1727, %v2031
        %v2033 = vpop.f32.mrb[0].mxu0
        %2034 = vmatprep.mubr.bf16.mxu0 %v604
        %2035 = vmatmul.mubr.bf16.gmra.mrb[0].mxu0 %v413
        %v2036 = vpop.f32.mrb[0].mxu0
        %v2037 = vadd.f32 %v1732, %v2036
        %v2038 = vpop.f32.mrb[0].mxu0
        %v2039 = vpop.f32.mrb[0].mxu0
        %v2040 = vadd.f32 %v1735, %v2039
        %v2041 = vpop.f32.mrb[0].mxu0
        %2042 = vmatprep.mubr.bf16.mxu0 %v616
        %2043 = vmatmul.mubr.bf16.gmra.mrb[0].mxu0 %v414
        %v2044 = vpop.f32.mrb[0].mxu0
        %v2045 = vadd.f32 %v1740, %v2044
        %v2046 = vpop.f32.mrb[0].mxu0
        %v2047 = vpop.f32.mrb[0].mxu0
        %v2048 = vadd.f32 %v1743, %v2047
        %v2049 = vpop.f32.mrb[0].mxu0
        %2050 = vmatprep.mubr.bf16.mxu0 %v628
        %2051 = vmatmul.mubr.bf16.gmra.mrb[0].mxu0 %v415
        %v2052 = vpop.f32.mrb[0].mxu0
        %v2053 = vadd.f32 %v1748, %v2052
        %v2054 = vpop.f32.mrb[0].mxu0
        %v2055 = vpop.f32.mrb[0].mxu0
        %v2056 = vadd.f32 %v1751, %v2055
        %v2057 = vpop.f32.mrb[0].mxu0
        %2058 = vmatprep.mubr.bf16.mxu0 %v640
        %2059 = vmatmul.mubr.bf16.gmra.mrb[0].mxu0 %v416
        %v2060 = vpop.f32.mrb[0].mxu0
        %v2061 = vadd.f32 %v1756, %v2060
        %v2062 = vpop.f32.mrb[0].mxu0
        %v2063 = vpop.f32.mrb[0].mxu0
        %v2064 = vadd.f32 %v1759, %v2063
        %v2065 = vpop.f32.mrb[0].mxu0
        %2066 = vmatprep.mubr.bf16.mxu0 %v652
        %2067 = vmatmul.mubr.bf16.gmra.mrb[0].mxu0 %v417
        %v2068 = vpop.f32.mrb[0].mxu0
        %v2069 = vadd.f32 %v1764, %v2068
        %v2070 = vpop.f32.mrb[0].mxu0
        %v2071 = vpop.f32.mrb[0].mxu0
        %v2072 = vadd.f32 %v1767, %v2071
        %v2073 = vpop.f32.mrb[0].mxu0
        %2074 = vmatprep.mubr.bf16.mxu0 %v664
        %2075 = vmatmul.mubr.bf16.gmra.mrb[0].mxu0 %v418
        %v2076 = vpop.f32.mrb[0].mxu0
        %v2077 = vadd.f32 %v1772, %v2076
        %v2078 = vpop.f32.mrb[0].mxu0
        %v2079 = vpop.f32.mrb[0].mxu0
        %v2080 = vadd.f32 %v1775, %v2079
        %v2081 = vpop.f32.mrb[0].mxu0
        %2082 = vmatprep.mubr.bf16.mxu0 %v676
        %2083 = vmatmul.mubr.bf16.gmra.mrb[0].mxu0 %v419
        %v2084 = vpop.f32.mrb[0].mxu0
        %v2085 = vadd.f32 %v1780, %v2084
        %v2086 = vpop.f32.mrb[0].mxu0
        %v2087 = vpop.f32.mrb[0].mxu0
        %v2088 = vadd.f32 %v1783, %v2087
        %v2089 = vpop.f32.mrb[0].mxu0
        %2090 = vdwg.mxu0
        %2091 = vmatprep.subr.bf16.mxu0 0
        %2092 = vmatpush1.bf16.msra.mxu0 %v1898
        %2093 = vmatprep.subr.bf16.mxu0 0
        %2094 = vmatpush1.bf16.msra.mxu0 %v1899
        %2095 = vmatprep.subr.bf16.mxu0 0
        %2096 = vmatpush1.bf16.msra.mxu0 %v1900
        %2097 = vmatprep.subr.bf16.mxu0 0
        %2098 = vmatpush1.bf16.msra.mxu0 %v1901
        %2099 = vmatprep.subr.bf16.mxu0 0
        %2100 = vmatpush1.bf16.msra.mxu0 %v1902
        %2101 = vmatprep.subr.bf16.mxu0 0
        %2102 = vmatpush1.bf16.msra.mxu0 %v1903
        %2103 = vmatprep.subr.bf16.mxu0 0
        %2104 = vmatpush1.bf16.msra.mxu0 %v1904
        %2105 = vmatprep.subr.bf16.mxu0 0
        %2106 = vmatpush1.bf16.msra.mxu0 %v1905
        %2107 = vmatprep.subr.bf16.mxu0 0
        %2108 = vmatpush1.bf16.msra.mxu0 0
        %2109 = vmatprep.subr.bf16.mxu0 0
        %2110 = vmatpush1.bf16.msra.mxu0 0
        %2111 = vmatprep.subr.bf16.mxu0 0
        %2112 = vmatpush1.bf16.msra.mxu0 0
        %2113 = vmatprep.subr.bf16.mxu0 0
        %2114 = vmatpush1.bf16.msra.mxu0 0
        %2115 = vmatprep.subr.bf16.mxu0 0
        %2116 = vmatpush1.bf16.msra.mxu0 0
        %2117 = vmatprep.subr.bf16.mxu0 0
        %2118 = vmatpush1.bf16.msra.mxu0 0
        %2119 = vmatprep.subr.bf16.mxu0 0
        %2120 = vmatpush1.bf16.msra.mxu0 0
        %2121 = vmatprep.subr.bf16.mxu0 0
        %2122 = vmatpush1.bf16.msra.mxu0 0
        %2123 = vmatprep.mubr.bf16.mxu0 0
        %2124 = vmatmul.mubr.bf16.gmra.mrb[0].mxu0 %v696
        %v2125 = vpop.f32.mrb[0].mxu0
        %v2126 = vadd.f32 %v1965, %v2125
        %v2127 = vpop.f32.mrb[0].mxu0
        %v2128 = vpop.f32.mrb[0].mxu0
        %v2129 = vadd.f32 %v1968, %v2128
        %v2130 = vpop.f32.mrb[0].mxu0
        %2131 = vmatprep.mubr.bf16.mxu0 0
        %2132 = vmatmul.mubr.bf16.gmra.mrb[0].mxu0 %v699
        %v2133 = vpop.f32.mrb[0].mxu0
        %v2134 = vadd.f32 %v1973, %v2133
        %v2135 = vpop.f32.mrb[0].mxu0
        %v2136 = vpop.f32.mrb[0].mxu0
        %v2137 = vadd.f32 %v1976, %v2136
        %v2138 = vpop.f32.mrb[0].mxu0
        %2139 = vmatprep.mubr.bf16.mxu0 0
        %2140 = vmatmul.mubr.bf16.gmra.mrb[0].mxu0 %v702
        %v2141 = vpop.f32.mrb[0].mxu0
        %v2142 = vadd.f32 %v1981, %v2141
        %v2143 = vpop.f32.mrb[0].mxu0
        %v2144 = vpop.f32.mrb[0].mxu0
        %v2145 = vadd.f32 %v1984, %v2144
        %v2146 = vpop.f32.mrb[0].mxu0
        %2147 = vmatprep.mubr.bf16.mxu0 0
        %2148 = vmatmul.mubr.bf16.gmra.mrb[0].mxu0 %v705
        %v2149 = vpop.f32.mrb[0].mxu0
        %v2150 = vadd.f32 %v1989, %v2149
        %v2151 = vpop.f32.mrb[0].mxu0
        %v2152 = vpop.f32.mrb[0].mxu0
        %v2153 = vadd.f32 %v1992, %v2152
        %v2154 = vpop.f32.mrb[0].mxu0
        %2155 = vmatprep.mubr.bf16.mxu0 0
        %2156 = vmatmul.mubr.bf16.gmra.mrb[0].mxu0 %v708
        %v2157 = vpop.f32.mrb[0].mxu0
        %v2158 = vadd.f32 %v1997, %v2157
        %v2159 = vpop.f32.mrb[0].mxu0
        %v2160 = vpop.f32.mrb[0].mxu0
        %v2161 = vadd.f32 %v2000, %v2160
        %v2162 = vpop.f32.mrb[0].mxu0
        %2163 = vmatprep.mubr.bf16.mxu0 0
        %2164 = vmatmul.mubr.bf16.gmra.mrb[0].mxu0 %v711
        %v2165 = vpop.f32.mrb[0].mxu0
        %v2166 = vadd.f32 %v2005, %v2165
        %v2167 = vpop.f32.mrb[0].mxu0
        %v2168 = vpop.f32.mrb[0].mxu0
        %v2169 = vadd.f32 %v2008, %v2168
        %v2170 = vpop.f32.mrb[0].mxu0
        %2171 = vmatprep.mubr.bf16.mxu0 0
        %2172 = vmatmul.mubr.bf16.gmra.mrb[0].mxu0 %v714
        %v2173 = vpop.f32.mrb[0].mxu0
        %v2174 = vadd.f32 %v2013, %v2173
        %v2175 = vpop.f32.mrb[0].mxu0
        %v2176 = vpop.f32.mrb[0].mxu0
        %v2177 = vadd.f32 %v2016, %v2176
        %v2178 = vpop.f32.mrb[0].mxu0
        %2179 = vmatprep.mubr.bf16.mxu0 0
        %2180 = vmatmul.mubr.bf16.gmra.mrb[0].mxu0 %v717
        %v2181 = vpop.f32.mrb[0].mxu0
        %v2182 = vadd.f32 %v2021, %v2181
        %v2183 = vpop.f32.mrb[0].mxu0
        %v2184 = vpop.f32.mrb[0].mxu0
        %v2185 = vadd.f32 %v2024, %v2184
        %v2186 = vpop.f32.mrb[0].mxu0
        %2187 = vmatprep.mubr.bf16.mxu0 0
        %2188 = vmatmul.mubr.bf16.gmra.mrb[0].mxu0 %v720
        %v2189 = vpop.f32.mrb[0].mxu0
        %v2190 = vadd.f32 %v2029, %v2189
        %v2191 = vpop.f32.mrb[0].mxu0
        %v2192 = vpop.f32.mrb[0].mxu0
        %v2193 = vadd.f32 %v2032, %v2192
        %v2194 = vpop.f32.mrb[0].mxu0
        %2195 = vmatprep.mubr.bf16.mxu0 0
        %2196 = vmatmul.mubr.bf16.gmra.mrb[0].mxu0 %v723
        %v2197 = vpop.f32.mrb[0].mxu0
        %v2198 = vadd.f32 %v2037, %v2197
        %v2199 = vpop.f32.mrb[0].mxu0
        %v2200 = vpop.f32.mrb[0].mxu0
        %v2201 = vadd.f32 %v2040, %v2200
        %v2202 = vpop.f32.mrb[0].mxu0
        %2203 = vmatprep.mubr.bf16.mxu0 0
        %2204 = vmatmul.mubr.bf16.gmra.mrb[0].mxu0 %v726
        %v2205 = vpop.f32.mrb[0].mxu0
        %v2206 = vadd.f32 %v2045, %v2205
        %v2207 = vpop.f32.mrb[0].mxu0
        %v2208 = vpop.f32.mrb[0].mxu0
        %v2209 = vadd.f32 %v2048, %v2208
        %v2210 = vpop.f32.mrb[0].mxu0
        %2211 = vmatprep.mubr.bf16.mxu0 0
        %2212 = vmatmul.mubr.bf16.gmra.mrb[0].mxu0 %v729
        %v2213 = vpop.f32.mrb[0].mxu0
        %v2214 = vadd.f32 %v2053, %v2213
        %v2215 = vpop.f32.mrb[0].mxu0
        %v2216 = vpop.f32.mrb[0].mxu0
        %v2217 = vadd.f32 %v2056, %v2216
        %v2218 = vpop.f32.mrb[0].mxu0
        %2219 = vmatprep.mubr.bf16.mxu0 0
        %2220 = vmatmul.mubr.bf16.gmra.mrb[0].mxu0 %v732
        %v2221 = vpop.f32.mrb[0].mxu0
        %v2222 = vadd.f32 %v2061, %v2221
        %v2223 = vpop.f32.mrb[0].mxu0
        %v2224 = vpop.f32.mrb[0].mxu0
        %v2225 = vadd.f32 %v2064, %v2224
        %v2226 = vpop.f32.mrb[0].mxu0
        %2227 = vmatprep.mubr.bf16.mxu0 0
        %2228 = vmatmul.mubr.bf16.gmra.mrb[0].mxu0 %v735
        %v2229 = vpop.f32.mrb[0].mxu0
        %v2230 = vadd.f32 %v2069, %v2229
        %v2231 = vpop.f32.mrb[0].mxu0
        %v2232 = vpop.f32.mrb[0].mxu0
        %v2233 = vadd.f32 %v2072, %v2232
        %v2234 = vpop.f32.mrb[0].mxu0
        %2235 = vmatprep.mubr.bf16.mxu0 0
        %2236 = vmatmul.mubr.bf16.gmra.mrb[0].mxu0 %v738
        %v2237 = vpop.f32.mrb[0].mxu0
        %v2238 = vadd.f32 %v2077, %v2237
        %v2239 = vpop.f32.mrb[0].mxu0
        %v2240 = vpop.f32.mrb[0].mxu0
        %v2241 = vadd.f32 %v2080, %v2240
        %v2242 = vpop.f32.mrb[0].mxu0
        %2243 = vmatprep.mubr.bf16.mxu0 0
        %2244 = vmatmul.mubr.bf16.gmra.mrb[0].mxu0 %v741
        %v2245 = vpop.f32.mrb[0].mxu0
        %v2246 = vadd.f32 %v2085, %v2245
        %v2247 = vpop.f32.mrb[0].mxu0
        %v2248 = vpop.f32.mrb[0].mxu0
        %v2249 = vadd.f32 %v2088, %v2248
        %v2250 = vpop.f32.mrb[0].mxu0
        %2251 = vdwg.mxu0
        %s2252 = scalar_lea.vmem %s254, 24 [#allocation2]
        %v2253 = vld [vmem:[%s2252] sm:$0xf]
        %v2254 = vld [vmem:[%s2252 + $0x4] sm:$0xf]
        %v2255 = vld [vmem:[%s2252 + $0x8] sm:$0x1]
        %v2256 = vld [vmem:[%s2252 + $0xc] sm:$0xf]
        %v2257 = vld [vmem:[%s2252 + $0x10] sm:$0xf]
        %v2258 = vld [vmem:[%s2252 + $0x14] sm:$0x1]
        %v2259 = vld [vmem:[%s2252 + $0x18] sm:$0xf]
        %v2260 = vld [vmem:[%s2252 + $0x1c] sm:$0xf]
        %v2261 = vld [vmem:[%s2252 + $0x20] sm:$0x1]
        %v2262 = vld [vmem:[%s2252 + $0x24] sm:$0xf]
        %v2263 = vld [vmem:[%s2252 + $0x28] sm:$0xf]
        %v2264 = vld [vmem:[%s2252 + $0x2c] sm:$0x1]
        %v2265 = vld [vmem:[%s2252 + $0x30] sm:$0xf]
        %v2266 = vld [vmem:[%s2252 + $0x34] sm:$0xf]
        %v2267 = vld [vmem:[%s2252 + $0x38] sm:$0x1]
        %v2268 = vld [vmem:[%s2252 + $0x3c] sm:$0xf]
        %v2269 = vld [vmem:[%s2252 + $0x40] sm:$0xf]
        %v2270 = vld [vmem:[%s2252 + $0x44] sm:$0x1]
        %v2271 = vld [vmem:[%s2252 + $0x48] sm:$0xf]
        %v2272 = vld [vmem:[%s2252 + $0x4c] sm:$0xf]
        %v2273 = vld [vmem:[%s2252 + $0x50] sm:$0x1]
        %v2274 = vld [vmem:[%s2252 + $0x54] sm:$0xf]
        %v2275 = vld [vmem:[%s2252 + $0x58] sm:$0xf]
        %v2276 = vld [vmem:[%s2252 + $0x5c] sm:$0x1]
        %v2277 = vld [vmem:[%s2252 + $0x60] sm:$0xf]
        %v2278 = vld [vmem:[%s2252 + $0x64] sm:$0xf]
        %v2279 = vld [vmem:[%s2252 + $0x68] sm:$0x1]
        %v2280 = vld [vmem:[%s2252 + $0x6c] sm:$0xf]
        %v2281 = vld [vmem:[%s2252 + $0x70] sm:$0xf]
        %v2282 = vld [vmem:[%s2252 + $0x74] sm:$0x1]
        %v2283 = vld [vmem:[%s2252 + $0x78] sm:$0xf]
        %v2284 = vld [vmem:[%s2252 + $0x7c] sm:$0xf]
        %v2285 = vld [vmem:[%s2252 + $0x80] sm:$0x1]
        %v2286 = vld [vmem:[%s2252 + $0x84] sm:$0xf]
        %v2287 = vld [vmem:[%s2252 + $0x88] sm:$0xf]
        %v2288 = vld [vmem:[%s2252 + $0x8c] sm:$0x1]
        %v2289 = vld [vmem:[%s2252 + $0x90] sm:$0xf]
        %v2290 = vld [vmem:[%s2252 + $0x94] sm:$0xf]
        %v2291 = vld [vmem:[%s2252 + $0x98] sm:$0x1]
        %v2292 = vld [vmem:[%s2252 + $0x9c] sm:$0xf]
        %v2293 = vld [vmem:[%s2252 + $0xa0] sm:$0xf]
        %v2294 = vld [vmem:[%s2252 + $0xa4] sm:$0x1]
        %v2295 = vld [vmem:[%s2252 + $0xa8] sm:$0xf]
        %v2296 = vld [vmem:[%s2252 + $0xac] sm:$0xf]
        %v2297 = vld [vmem:[%s2252 + $0xb0] sm:$0x1]
        %v2298 = vld [vmem:[%s2252 + $0xb4] sm:$0xf]
        %v2299 = vld [vmem:[%s2252 + $0xb8] sm:$0xf]
        %v2300 = vld [vmem:[%s2252 + $0xbc] sm:$0x1]
        %v2333 = vunpack.c.l.b16 %v2253
        %v2334 = vunpack.c.l.b16 %v2254
        %v2335 = vunpack.c.l.b16 %v2256
        %v2336 = vunpack.c.l.b16 %v2257
        %v2337 = vunpack.c.l.b16 %v2259
        %v2338 = vunpack.c.l.b16 %v2260
        %v2339 = vunpack.c.l.b16 %v2262
        %v2340 = vunpack.c.l.b16 %v2263
        %v2341 = vunpack.c.l.b16 %v2265
        %v2342 = vunpack.c.l.b16 %v2266
        %v2343 = vunpack.c.l.b16 %v2268
        %v2344 = vunpack.c.l.b16 %v2269
        %v2345 = vunpack.c.l.b16 %v2271
        %v2346 = vunpack.c.l.b16 %v2272
        %v2347 = vunpack.c.l.b16 %v2274
        %v2348 = vunpack.c.l.b16 %v2275
        %v2349 = vunpack.c.l.b16 %v2277
        %v2350 = vunpack.c.l.b16 %v2278
        %v2351 = vunpack.c.l.b16 %v2280
        %v2352 = vunpack.c.l.b16 %v2281
        %v2353 = vunpack.c.l.b16 %v2283
        %v2354 = vunpack.c.l.b16 %v2284
        %v2355 = vunpack.c.l.b16 %v2286
        %v2356 = vunpack.c.l.b16 %v2287
        %v2357 = vunpack.c.l.b16 %v2289
        %v2358 = vunpack.c.l.b16 %v2290
        %v2359 = vunpack.c.l.b16 %v2292
        %v2360 = vunpack.c.l.b16 %v2293
        %v2361 = vunpack.c.l.b16 %v2295
        %v2362 = vunpack.c.l.b16 %v2296
        %v2363 = vunpack.c.l.b16 %v2298
        %v2364 = vunpack.c.l.b16 %v2299
        %v2365 = vpack.c.b16 %v2334, %v2333
        %v2366 = vpack.c.b16 %v2336, %v2335
        %v2367 = vpack.c.b16 %v2338, %v2337
        %v2368 = vpack.c.b16 %v2340, %v2339
        %v2369 = vpack.c.b16 %v2342, %v2341
        %v2370 = vpack.c.b16 %v2344, %v2343
        %v2371 = vpack.c.b16 %v2346, %v2345
        %v2372 = vpack.c.b16 %v2348, %v2347
        %v2373 = vpack.c.b16 %v2350, %v2349
        %v2374 = vpack.c.b16 %v2352, %v2351
        %v2375 = vpack.c.b16 %v2354, %v2353
        %v2376 = vpack.c.b16 %v2356, %v2355
        %v2377 = vpack.c.b16 %v2358, %v2357
        %v2378 = vpack.c.b16 %v2360, %v2359
        %v2379 = vpack.c.b16 %v2362, %v2361
        %v2380 = vpack.c.b16 %v2364, %v2363
        %v2413 = vunpack.c.l.b16 %v2255
        %v2414 = vunpack.c.l.b16 %v2258
        %v2415 = vunpack.c.l.b16 %v2261
        %v2416 = vunpack.c.l.b16 %v2264
        %v2417 = vunpack.c.l.b16 %v2267
        %v2418 = vunpack.c.l.b16 %v2270
        %v2419 = vunpack.c.l.b16 %v2273
        %v2420 = vunpack.c.l.b16 %v2276
        %v2421 = vunpack.c.l.b16 %v2279
        %v2422 = vunpack.c.l.b16 %v2282
        %v2423 = vunpack.c.l.b16 %v2285
        %v2424 = vunpack.c.l.b16 %v2288
        %v2425 = vunpack.c.l.b16 %v2291
        %v2426 = vunpack.c.l.b16 %v2294
        %v2427 = vunpack.c.l.b16 %v2297
        %v2428 = vunpack.c.l.b16 %v2300
        %v2429 = vpack.c.b16 %v2413, %v2413
        %v2430 = vpack.c.b16 %v2414, %v2414
        %v2431 = vpack.c.b16 %v2415, %v2415
        %v2432 = vpack.c.b16 %v2416, %v2416
        %v2433 = vpack.c.b16 %v2417, %v2417
        %v2434 = vpack.c.b16 %v2418, %v2418
        %v2435 = vpack.c.b16 %v2419, %v2419
        %v2436 = vpack.c.b16 %v2420, %v2420
        %v2437 = vpack.c.b16 %v2421, %v2421
        %v2438 = vpack.c.b16 %v2422, %v2422
        %v2439 = vpack.c.b16 %v2423, %v2423
        %v2440 = vpack.c.b16 %v2424, %v2424
        %v2441 = vpack.c.b16 %v2425, %v2425
        %v2442 = vpack.c.b16 %v2426, %v2426
        %v2443 = vpack.c.b16 %v2427, %v2427
        %v2444 = vpack.c.b16 %v2428, %v2428
        %v2446 = vshrl.u32 %v2365, 16
        %v2448 = vshll.u32 %v2365, 16
        %v2450 = vrot.slane %v2448, 1
        %v2451 = vor.u32 %v2446, %v2450
        %v2453 = vshll.u32 %v2429, 16
        %v2455 = vrot.slane %v2453, 1
        %v2456 = vsel %vm484, %v2451, %v2455
        %v2458 = vshrl.u32 %v2366, 16
        %v2460 = vshll.u32 %v2366, 16
        %v2462 = vrot.slane %v2460, 1
        %v2463 = vor.u32 %v2458, %v2462
        %v2465 = vshll.u32 %v2430, 16
        %v2467 = vrot.slane %v2465, 1
        %v2468 = vsel %vm484, %v2463, %v2467
        %v2470 = vshrl.u32 %v2367, 16
        %v2472 = vshll.u32 %v2367, 16
        %v2474 = vrot.slane %v2472, 1
        %v2475 = vor.u32 %v2470, %v2474
        %v2477 = vshll.u32 %v2431, 16
        %v2479 = vrot.slane %v2477, 1
        %v2480 = vsel %vm484, %v2475, %v2479
        %v2482 = vshrl.u32 %v2368, 16
        %v2484 = vshll.u32 %v2368, 16
        %v2486 = vrot.slane %v2484, 1
        %v2487 = vor.u32 %v2482, %v2486
        %v2489 = vshll.u32 %v2432, 16
        %v2491 = vrot.slane %v2489, 1
        %v2492 = vsel %vm484, %v2487, %v2491
        %v2494 = vshrl.u32 %v2369, 16
        %v2496 = vshll.u32 %v2369, 16
        %v2498 = vrot.slane %v2496, 1
        %v2499 = vor.u32 %v2494, %v2498
        %v2501 = vshll.u32 %v2433, 16
        %v2503 = vrot.slane %v2501, 1
        %v2504 = vsel %vm484, %v2499, %v2503
        %v2506 = vshrl.u32 %v2370, 16
        %v2508 = vshll.u32 %v2370, 16
        %v2510 = vrot.slane %v2508, 1
        %v2511 = vor.u32 %v2506, %v2510
        %v2513 = vshll.u32 %v2434, 16
        %v2515 = vrot.slane %v2513, 1
        %v2516 = vsel %vm484, %v2511, %v2515
        %v2518 = vshrl.u32 %v2371, 16
        %v2520 = vshll.u32 %v2371, 16
        %v2522 = vrot.slane %v2520, 1
        %v2523 = vor.u32 %v2518, %v2522
        %v2525 = vshll.u32 %v2435, 16
        %v2527 = vrot.slane %v2525, 1
        %v2528 = vsel %vm484, %v2523, %v2527
        %v2530 = vshrl.u32 %v2372, 16
        %v2532 = vshll.u32 %v2372, 16
        %v2534 = vrot.slane %v2532, 1
        %v2535 = vor.u32 %v2530, %v2534
        %v2537 = vshll.u32 %v2436, 16
        %v2539 = vrot.slane %v2537, 1
        %v2540 = vsel %vm484, %v2535, %v2539
        %v2542 = vshrl.u32 %v2373, 16
        %v2544 = vshll.u32 %v2373, 16
        %v2546 = vrot.slane %v2544, 1
        %v2547 = vor.u32 %v2542, %v2546
        %v2549 = vshll.u32 %v2437, 16
        %v2551 = vrot.slane %v2549, 1
        %v2552 = vsel %vm484, %v2547, %v2551
        %v2554 = vshrl.u32 %v2374, 16
        %v2556 = vshll.u32 %v2374, 16
        %v2558 = vrot.slane %v2556, 1
        %v2559 = vor.u32 %v2554, %v2558
        %v2561 = vshll.u32 %v2438, 16
        %v2563 = vrot.slane %v2561, 1
        %v2564 = vsel %vm484, %v2559, %v2563
        %v2566 = vshrl.u32 %v2375, 16
        %v2568 = vshll.u32 %v2375, 16
        %v2570 = vrot.slane %v2568, 1
        %v2571 = vor.u32 %v2566, %v2570
        %v2573 = vshll.u32 %v2439, 16
        %v2575 = vrot.slane %v2573, 1
        %v2576 = vsel %vm484, %v2571, %v2575
        %v2578 = vshrl.u32 %v2376, 16
        %v2580 = vshll.u32 %v2376, 16
        %v2582 = vrot.slane %v2580, 1
        %v2583 = vor.u32 %v2578, %v2582
        %v2585 = vshll.u32 %v2440, 16
        %v2587 = vrot.slane %v2585, 1
        %v2588 = vsel %vm484, %v2583, %v2587
        %v2590 = vshrl.u32 %v2377, 16
        %v2592 = vshll.u32 %v2377, 16
        %v2594 = vrot.slane %v2592, 1
        %v2595 = vor.u32 %v2590, %v2594
        %v2597 = vshll.u32 %v2441, 16
        %v2599 = vrot.slane %v2597, 1
        %v2600 = vsel %vm484, %v2595, %v2599
        %v2602 = vshrl.u32 %v2378, 16
        %v2604 = vshll.u32 %v2378, 16
        %v2606 = vrot.slane %v2604, 1
        %v2607 = vor.u32 %v2602, %v2606
        %v2609 = vshll.u32 %v2442, 16
        %v2611 = vrot.slane %v2609, 1
        %v2612 = vsel %vm484, %v2607, %v2611
        %v2614 = vshrl.u32 %v2379, 16
        %v2616 = vshll.u32 %v2379, 16
        %v2618 = vrot.slane %v2616, 1
        %v2619 = vor.u32 %v2614, %v2618
        %v2621 = vshll.u32 %v2443, 16
        %v2623 = vrot.slane %v2621, 1
        %v2624 = vsel %vm484, %v2619, %v2623
        %v2626 = vshrl.u32 %v2380, 16
        %v2628 = vshll.u32 %v2380, 16
        %v2630 = vrot.slane %v2628, 1
        %v2631 = vor.u32 %v2626, %v2630
        %v2633 = vshll.u32 %v2444, 16
        %v2635 = vrot.slane %v2633, 1
        %v2636 = vsel %vm484, %v2631, %v2635
        %v2653 = vrot.slane %v2365, 1
        %v2654 = vrot.slane %v2429, 1
        %v2655 = vsel %vm693, %v2653, %v2654
        %v2656 = vrot.slane %v2366, 1
        %v2657 = vrot.slane %v2430, 1
        %v2658 = vsel %vm693, %v2656, %v2657
        %v2659 = vrot.slane %v2367, 1
        %v2660 = vrot.slane %v2431, 1
        %v2661 = vsel %vm693, %v2659, %v2660
        %v2662 = vrot.slane %v2368, 1
        %v2663 = vrot.slane %v2432, 1
        %v2664 = vsel %vm693, %v2662, %v2663
        %v2665 = vrot.slane %v2369, 1
        %v2666 = vrot.slane %v2433, 1
        %v2667 = vsel %vm693, %v2665, %v2666
        %v2668 = vrot.slane %v2370, 1
        %v2669 = vrot.slane %v2434, 1
        %v2670 = vsel %vm693, %v2668, %v2669
        %v2671 = vrot.slane %v2371, 1
        %v2672 = vrot.slane %v2435, 1
        %v2673 = vsel %vm693, %v2671, %v2672
        %v2674 = vrot.slane %v2372, 1
        %v2675 = vrot.slane %v2436, 1
        %v2676 = vsel %vm693, %v2674, %v2675
        %v2677 = vrot.slane %v2373, 1
        %v2678 = vrot.slane %v2437, 1
        %v2679 = vsel %vm693, %v2677, %v2678
        %v2680 = vrot.slane %v2374, 1
        %v2681 = vrot.slane %v2438, 1
        %v2682 = vsel %vm693, %v2680, %v2681
        %v2683 = vrot.slane %v2375, 1
        %v2684 = vrot.slane %v2439, 1
        %v2685 = vsel %vm693, %v2683, %v2684
        %v2686 = vrot.slane %v2376, 1
        %v2687 = vrot.slane %v2440, 1
        %v2688 = vsel %vm693, %v2686, %v2687
        %v2689 = vrot.slane %v2377, 1
        %v2690 = vrot.slane %v2441, 1
        %v2691 = vsel %vm693, %v2689, %v2690
        %v2692 = vrot.slane %v2378, 1
        %v2693 = vrot.slane %v2442, 1
        %v2694 = vsel %vm693, %v2692, %v2693
        %v2695 = vrot.slane %v2379, 1
        %v2696 = vrot.slane %v2443, 1
        %v2697 = vsel %vm693, %v2695, %v2696
        %v2698 = vrot.slane %v2380, 1
        %v2699 = vrot.slane %v2444, 1
        %v2700 = vsel %vm693, %v2698, %v2699
        %s2717 = scalar_lea.vmem [#allocation5], 384
        %v2718 = vld [vmem:[%s2717] sm:$0xf]
        %v2719 = vld [vmem:[%s2717 + $0x4] sm:$0xf]
        %v2720 = vld [vmem:[%s2717 + $0x8] sm:$0xf]
        %v2721 = vld [vmem:[%s2717 + $0xc] sm:$0xf]
        %v2722 = vld [vmem:[%s2717 + $0x10] sm:$0xf]
        %v2723 = vld [vmem:[%s2717 + $0x14] sm:$0xf]
        %v2724 = vld [vmem:[%s2717 + $0x18] sm:$0xf]
        %v2725 = vld [vmem:[%s2717 + $0x1c] sm:$0xf]
        %v2726 = vld [vmem:[%s2717 + $0x20] sm:$0xf]
        %v2727 = vld [vmem:[%s2717 + $0x24] sm:$0xf]
        %v2728 = vld [vmem:[%s2717 + $0x28] sm:$0xf]
        %v2729 = vld [vmem:[%s2717 + $0x2c] sm:$0xf]
        %v2730 = vld [vmem:[%s2717 + $0x30] sm:$0xf]
        %v2731 = vld [vmem:[%s2717 + $0x34] sm:$0xf]
        %v2732 = vld [vmem:[%s2717 + $0x38] sm:$0xf]
        %v2733 = vld [vmem:[%s2717 + $0x3c] sm:$0xf]
        %v2734 = vld [vmem:[%s2717 + $0x40] sm:$0xf]
        %v2735 = vld [vmem:[%s2717 + $0x44] sm:$0xf]
        %v2736 = vld [vmem:[%s2717 + $0x48] sm:$0xf]
        %v2737 = vld [vmem:[%s2717 + $0x4c] sm:$0xf]
        %v2738 = vld [vmem:[%s2717 + $0x50] sm:$0xf]
        %v2739 = vld [vmem:[%s2717 + $0x54] sm:$0xf]
        %v2740 = vld [vmem:[%s2717 + $0x58] sm:$0xf]
        %v2741 = vld [vmem:[%s2717 + $0x5c] sm:$0xf]
        %v2742 = vld [vmem:[%s2717 + $0x60] sm:$0xf]
        %v2743 = vld [vmem:[%s2717 + $0x64] sm:$0xf]
        %v2744 = vld [vmem:[%s2717 + $0x68] sm:$0xf]
        %v2745 = vld [vmem:[%s2717 + $0x6c] sm:$0xf]
        %v2746 = vld [vmem:[%s2717 + $0x70] sm:$0xf]
        %v2747 = vld [vmem:[%s2717 + $0x74] sm:$0xf]
        %v2748 = vld [vmem:[%s2717 + $0x78] sm:$0xf]
        %v2749 = vld [vmem:[%s2717 + $0x7c] sm:$0xf]
        %v2750 = vld [vmem:[%s2717 + $0x80] sm:$0xf]
        %v2751 = vld [vmem:[%s2717 + $0x84] sm:$0xf]
        %v2752 = vld [vmem:[%s2717 + $0x88] sm:$0xf]
        %v2753 = vld [vmem:[%s2717 + $0x8c] sm:$0xf]
        %v2754 = vld [vmem:[%s2717 + $0x90] sm:$0xf]
        %v2755 = vld [vmem:[%s2717 + $0x94] sm:$0xf]
        %v2756 = vld [vmem:[%s2717 + $0x98] sm:$0xf]
        %v2757 = vld [vmem:[%s2717 + $0x9c] sm:$0xf]
        %v2758 = vld [vmem:[%s2717 + $0xa0] sm:$0xf]
        %v2759 = vld [vmem:[%s2717 + $0xa4] sm:$0xf]
        %v2760 = vld [vmem:[%s2717 + $0xa8] sm:$0xf]
        %v2761 = vld [vmem:[%s2717 + $0xac] sm:$0xf]
        %v2762 = vld [vmem:[%s2717 + $0xb0] sm:$0xf]
        %v2763 = vld [vmem:[%s2717 + $0xb4] sm:$0xf]
        %v2764 = vld [vmem:[%s2717 + $0xb8] sm:$0xf]
        %v2765 = vld [vmem:[%s2717 + $0xbc] sm:$0xf]
        %v2814 = vunpack.c.l.b16 %v2718
        %v2815 = vunpack.c.l.b16 %v2719
        %v2816 = vunpack.c.l.b16 %v2720
        %v2817 = vunpack.c.l.b16 %v2721
        %v2818 = vunpack.c.l.b16 %v2722
        %v2819 = vunpack.c.l.b16 %v2723
        %v2820 = vunpack.c.l.b16 %v2724
        %v2821 = vunpack.c.l.b16 %v2725
        %v2822 = vunpack.c.l.b16 %v2726
        %v2823 = vunpack.c.l.b16 %v2727
        %v2824 = vunpack.c.l.b16 %v2728
        %v2825 = vunpack.c.l.b16 %v2729
        %v2826 = vunpack.c.l.b16 %v2730
        %v2827 = vunpack.c.l.b16 %v2731
        %v2828 = vunpack.c.l.b16 %v2732
        %v2829 = vunpack.c.l.b16 %v2733
        %v2830 = vunpack.c.l.b16 %v2734
        %v2831 = vunpack.c.l.b16 %v2735
        %v2832 = vunpack.c.l.b16 %v2736
        %v2833 = vunpack.c.l.b16 %v2737
        %v2834 = vunpack.c.l.b16 %v2738
        %v2835 = vunpack.c.l.b16 %v2739
        %v2836 = vunpack.c.l.b16 %v2740
        %v2837 = vunpack.c.l.b16 %v2741
        %v2838 = vunpack.c.l.b16 %v2742
        %v2839 = vunpack.c.l.b16 %v2743
        %v2840 = vunpack.c.l.b16 %v2744
        %v2841 = vunpack.c.l.b16 %v2745
        %v2842 = vunpack.c.l.b16 %v2746
        %v2843 = vunpack.c.l.b16 %v2747
        %v2844 = vunpack.c.l.b16 %v2748
        %v2845 = vunpack.c.l.b16 %v2749
        %v2846 = vunpack.c.l.b16 %v2750
        %v2847 = vunpack.c.l.b16 %v2751
        %v2848 = vunpack.c.l.b16 %v2752
        %v2849 = vunpack.c.l.b16 %v2753
        %v2850 = vunpack.c.l.b16 %v2754
        %v2851 = vunpack.c.l.b16 %v2755
        %v2852 = vunpack.c.l.b16 %v2756
        %v2853 = vunpack.c.l.b16 %v2757
        %v2854 = vunpack.c.l.b16 %v2758
        %v2855 = vunpack.c.l.b16 %v2759
        %v2856 = vunpack.c.l.b16 %v2760
        %v2857 = vunpack.c.l.b16 %v2761
        %v2858 = vunpack.c.l.b16 %v2762
        %v2859 = vunpack.c.l.b16 %v2763
        %v2860 = vunpack.c.l.b16 %v2764
        %v2861 = vunpack.c.l.b16 %v2765
        %v2862 = vpack.c.b16 %v2815, %v2814
        %v2863 = vpack.c.b16 %v2817, %v2816
        %v2864 = vpack.c.b16 %v2819, %v2818
        %v2865 = vpack.c.b16 %v2821, %v2820
        %v2866 = vpack.c.b16 %v2823, %v2822
        %v2867 = vpack.c.b16 %v2825, %v2824
        %v2868 = vpack.c.b16 %v2827, %v2826
        %v2869 = vpack.c.b16 %v2829, %v2828
        %v2870 = vpack.c.b16 %v2831, %v2830
        %v2871 = vpack.c.b16 %v2833, %v2832
        %v2872 = vpack.c.b16 %v2835, %v2834
        %v2873 = vpack.c.b16 %v2837, %v2836
        %v2874 = vpack.c.b16 %v2839, %v2838
        %v2875 = vpack.c.b16 %v2841, %v2840
        %v2876 = vpack.c.b16 %v2843, %v2842
        %v2877 = vpack.c.b16 %v2845, %v2844
        %v2878 = vpack.c.b16 %v2847, %v2846
        %v2879 = vpack.c.b16 %v2849, %v2848
        %v2880 = vpack.c.b16 %v2851, %v2850
        %v2881 = vpack.c.b16 %v2853, %v2852
        %v2882 = vpack.c.b16 %v2855, %v2854
        %v2883 = vpack.c.b16 %v2857, %v2856
        %v2884 = vpack.c.b16 %v2859, %v2858
        %v2885 = vpack.c.b16 %v2861, %v2860
        %2910 = vmatprep.subr.bf16.mxu0 0
        %2911 = vmatpush1.bf16.msra.mxu0 %v2862
        %2912 = vmatprep.subr.bf16.mxu0 0
        %2913 = vmatpush1.bf16.msra.mxu0 %v2863
        %2914 = vmatprep.subr.bf16.mxu0 0
        %2915 = vmatpush1.bf16.msra.mxu0 %v2864
        %2916 = vmatprep.subr.bf16.mxu0 0
        %2917 = vmatpush1.bf16.msra.mxu0 %v2865
        %2918 = vmatprep.subr.bf16.mxu0 0
        %2919 = vmatpush1.bf16.msra.mxu0 %v2866
        %2920 = vmatprep.subr.bf16.mxu0 0
        %2921 = vmatpush1.bf16.msra.mxu0 %v2867
        %2922 = vmatprep.subr.bf16.mxu0 0
        %2923 = vmatpush1.bf16.msra.mxu0 %v2868
        %2924 = vmatprep.subr.bf16.mxu0 0
        %2925 = vmatpush1.bf16.msra.mxu0 %v2869
        %2926 = vmatprep.subr.bf16.mxu0 0
        %2927 = vmatpush1.bf16.msra.mxu0 %v2870
        %2928 = vmatprep.subr.bf16.mxu0 0
        %2929 = vmatpush1.bf16.msra.mxu0 %v2871
        %2930 = vmatprep.subr.bf16.mxu0 0
        %2931 = vmatpush1.bf16.msra.mxu0 %v2872
        %2932 = vmatprep.subr.bf16.mxu0 0
        %2933 = vmatpush1.bf16.msra.mxu0 %v2873
        %2934 = vmatprep.subr.bf16.mxu0 0
        %2935 = vmatpush1.bf16.msra.mxu0 %v2874
        %2936 = vmatprep.subr.bf16.mxu0 0
        %2937 = vmatpush1.bf16.msra.mxu0 %v2875
        %2938 = vmatprep.subr.bf16.mxu0 0
        %2939 = vmatpush1.bf16.msra.mxu0 %v2876
        %2940 = vmatprep.subr.bf16.mxu0 0
        %2941 = vmatpush1.bf16.msra.mxu0 %v2877
        %2942 = vmatprep.mubr.bf16.mxu0 %v2456
        %2943 = vmatmul.mubr.bf16.gmra.mrb[0].mxu0 %v2365
        %v2944 = vpop.f32.mrb[0].mxu0
        %v2945 = vadd.f32 0.0, %v2944
        %v2946 = vpop.f32.mrb[0].mxu0
        %v2947 = vpop.f32.mrb[0].mxu0
        %v2948 = vadd.f32 0.0, %v2947
        %v2949 = vpop.f32.mrb[0].mxu0
        %2950 = vmatprep.mubr.bf16.mxu0 %v2468
        %2951 = vmatmul.mubr.bf16.gmra.mrb[0].mxu0 %v2366
        %v2952 = vpop.f32.mrb[0].mxu0
        %v2953 = vadd.f32 0.0, %v2952
        %v2954 = vpop.f32.mrb[0].mxu0
        %v2955 = vpop.f32.mrb[0].mxu0
        %v2956 = vadd.f32 0.0, %v2955
        %v2957 = vpop.f32.mrb[0].mxu0
        %2958 = vmatprep.mubr.bf16.mxu0 %v2480
        %2959 = vmatmul.mubr.bf16.gmra.mrb[0].mxu0 %v2367
        %v2960 = vpop.f32.mrb[0].mxu0
        %v2961 = vadd.f32 0.0, %v2960
        %v2962 = vpop.f32.mrb[0].mxu0
        %v2963 = vpop.f32.mrb[0].mxu0
        %v2964 = vadd.f32 0.0, %v2963
        %v2965 = vpop.f32.mrb[0].mxu0
        %2966 = vmatprep.mubr.bf16.mxu0 %v2492
        %2967 = vmatmul.mubr.bf16.gmra.mrb[0].mxu0 %v2368
        %v2968 = vpop.f32.mrb[0].mxu0
        %v2969 = vadd.f32 0.0, %v2968
        %v2970 = vpop.f32.mrb[0].mxu0
        %v2971 = vpop.f32.mrb[0].mxu0
        %v2972 = vadd.f32 0.0, %v2971
        %v2973 = vpop.f32.mrb[0].mxu0
        %2974 = vmatprep.mubr.bf16.mxu0 %v2504
        %2975 = vmatmul.mubr.bf16.gmra.mrb[0].mxu0 %v2369
        %v2976 = vpop.f32.mrb[0].mxu0
        %v2977 = vadd.f32 0.0, %v2976
        %v2978 = vpop.f32.mrb[0].mxu0
        %v2979 = vpop.f32.mrb[0].mxu0
        %v2980 = vadd.f32 0.0, %v2979
        %v2981 = vpop.f32.mrb[0].mxu0
        %2982 = vmatprep.mubr.bf16.mxu0 %v2516
        %2983 = vmatmul.mubr.bf16.gmra.mrb[0].mxu0 %v2370
        %v2984 = vpop.f32.mrb[0].mxu0
        %v2985 = vadd.f32 0.0, %v2984
        %v2986 = vpop.f32.mrb[0].mxu0
        %v2987 = vpop.f32.mrb[0].mxu0
        %v2988 = vadd.f32 0.0, %v2987
        %v2989 = vpop.f32.mrb[0].mxu0
        %2990 = vmatprep.mubr.bf16.mxu0 %v2528
        %2991 = vmatmul.mubr.bf16.gmra.mrb[0].mxu0 %v2371
        %v2992 = vpop.f32.mrb[0].mxu0
        %v2993 = vadd.f32 0.0, %v2992
        %v2994 = vpop.f32.mrb[0].mxu0
        %v2995 = vpop.f32.mrb[0].mxu0
        %v2996 = vadd.f32 0.0, %v2995
        %v2997 = vpop.f32.mrb[0].mxu0
        %2998 = vmatprep.mubr.bf16.mxu0 %v2540
        %2999 = vmatmul.mubr.bf16.gmra.mrb[0].mxu0 %v2372
        %v3000 = vpop.f32.mrb[0].mxu0
        %v3001 = vadd.f32 0.0, %v3000
        %v3002 = vpop.f32.mrb[0].mxu0
        %v3003 = vpop.f32.mrb[0].mxu0
        %v3004 = vadd.f32 0.0, %v3003
        %v3005 = vpop.f32.mrb[0].mxu0
        %3006 = vmatprep.mubr.bf16.mxu0 %v2552
        %3007 = vmatmul.mubr.bf16.gmra.mrb[0].mxu0 %v2373
        %v3008 = vpop.f32.mrb[0].mxu0
        %v3009 = vadd.f32 0.0, %v3008
        %v3010 = vpop.f32.mrb[0].mxu0
        %v3011 = vpop.f32.mrb[0].mxu0
        %v3012 = vadd.f32 0.0, %v3011
        %v3013 = vpop.f32.mrb[0].mxu0
        %3014 = vmatprep.mubr.bf16.mxu0 %v2564
        %3015 = vmatmul.mubr.bf16.gmra.mrb[0].mxu0 %v2374
        %v3016 = vpop.f32.mrb[0].mxu0
        %v3017 = vadd.f32 0.0, %v3016
        %v3018 = vpop.f32.mrb[0].mxu0
        %v3019 = vpop.f32.mrb[0].mxu0
        %v3020 = vadd.f32 0.0, %v3019
        %v3021 = vpop.f32.mrb[0].mxu0
        %3022 = vmatprep.mubr.bf16.mxu0 %v2576
        %3023 = vmatmul.mubr.bf16.gmra.mrb[0].mxu0 %v2375
        %v3024 = vpop.f32.mrb[0].mxu0
        %v3025 = vadd.f32 0.0, %v3024
        %v3026 = vpop.f32.mrb[0].mxu0
        %v3027 = vpop.f32.mrb[0].mxu0
        %v3028 = vadd.f32 0.0, %v3027
        %v3029 = vpop.f32.mrb[0].mxu0
        %3030 = vmatprep.mubr.bf16.mxu0 %v2588
        %3031 = vmatmul.mubr.bf16.gmra.mrb[0].mxu0 %v2376
        %v3032 = vpop.f32.mrb[0].mxu0
        %v3033 = vadd.f32 0.0, %v3032
        %v3034 = vpop.f32.mrb[0].mxu0
        %v3035 = vpop.f32.mrb[0].mxu0
        %v3036 = vadd.f32 0.0, %v3035
        %v3037 = vpop.f32.mrb[0].mxu0
        %3038 = vmatprep.mubr.bf16.mxu0 %v2600
        %3039 = vmatmul.mubr.bf16.gmra.mrb[0].mxu0 %v2377
        %v3040 = vpop.f32.mrb[0].mxu0
        %v3041 = vadd.f32 0.0, %v3040
        %v3042 = vpop.f32.mrb[0].mxu0
        %v3043 = vpop.f32.mrb[0].mxu0
        %v3044 = vadd.f32 0.0, %v3043
        %v3045 = vpop.f32.mrb[0].mxu0
        %3046 = vmatprep.mubr.bf16.mxu0 %v2612
        %3047 = vmatmul.mubr.bf16.gmra.mrb[0].mxu0 %v2378
        %v3048 = vpop.f32.mrb[0].mxu0
        %v3049 = vadd.f32 0.0, %v3048
        %v3050 = vpop.f32.mrb[0].mxu0
        %v3051 = vpop.f32.mrb[0].mxu0
        %v3052 = vadd.f32 0.0, %v3051
        %v3053 = vpop.f32.mrb[0].mxu0
        %3054 = vmatprep.mubr.bf16.mxu0 %v2624
        %3055 = vmatmul.mubr.bf16.gmra.mrb[0].mxu0 %v2379
        %v3056 = vpop.f32.mrb[0].mxu0
        %v3057 = vadd.f32 0.0, %v3056
        %v3058 = vpop.f32.mrb[0].mxu0
        %v3059 = vpop.f32.mrb[0].mxu0
        %v3060 = vadd.f32 0.0, %v3059
        %v3061 = vpop.f32.mrb[0].mxu0
        %3062 = vmatprep.mubr.bf16.mxu0 %v2636
        %3063 = vmatmul.mubr.bf16.gmra.mrb[0].mxu0 %v2380
        %v3064 = vpop.f32.mrb[0].mxu0
        %v3065 = vadd.f32 0.0, %v3064
        %v3066 = vpop.f32.mrb[0].mxu0
        %v3067 = vpop.f32.mrb[0].mxu0
        %v3068 = vadd.f32 0.0, %v3067
        %v3069 = vpop.f32.mrb[0].mxu0
        %3070 = vdwg.mxu0
        %3071 = vmatprep.subr.bf16.mxu0 0
        %3072 = vmatpush1.bf16.msra.mxu0 %v2878
        %3073 = vmatprep.subr.bf16.mxu0 0
        %3074 = vmatpush1.bf16.msra.mxu0 %v2879
        %3075 = vmatprep.subr.bf16.mxu0 0
        %3076 = vmatpush1.bf16.msra.mxu0 %v2880
        %3077 = vmatprep.subr.bf16.mxu0 0
        %3078 = vmatpush1.bf16.msra.mxu0 %v2881
        %3079 = vmatprep.subr.bf16.mxu0 0
        %3080 = vmatpush1.bf16.msra.mxu0 %v2882
        %3081 = vmatprep.subr.bf16.mxu0 0
        %3082 = vmatpush1.bf16.msra.mxu0 %v2883
        %3083 = vmatprep.subr.bf16.mxu0 0
        %3084 = vmatpush1.bf16.msra.mxu0 %v2884
        %3085 = vmatprep.subr.bf16.mxu0 0
        %3086 = vmatpush1.bf16.msra.mxu0 %v2885
        %3087 = vmatprep.subr.bf16.mxu0 0
        %3088 = vmatpush1.bf16.msra.mxu0 0
        %3089 = vmatprep.subr.bf16.mxu0 0
        %3090 = vmatpush1.bf16.msra.mxu0 0
        %3091 = vmatprep.subr.bf16.mxu0 0
        %3092 = vmatpush1.bf16.msra.mxu0 0
        %3093 = vmatprep.subr.bf16.mxu0 0
        %3094 = vmatpush1.bf16.msra.mxu0 0
        %3095 = vmatprep.subr.bf16.mxu0 0
        %3096 = vmatpush1.bf16.msra.mxu0 0
        %3097 = vmatprep.subr.bf16.mxu0 0
        %3098 = vmatpush1.bf16.msra.mxu0 0
        %3099 = vmatprep.subr.bf16.mxu0 0
        %3100 = vmatpush1.bf16.msra.mxu0 0
        %3101 = vmatprep.subr.bf16.mxu0 0
        %3102 = vmatpush1.bf16.msra.mxu0 0
        %3103 = vmatprep.mubr.bf16.mxu0 0
        %3104 = vmatmul.mubr.bf16.gmra.mrb[0].mxu0 %v2655
        %v3105 = vpop.f32.mrb[0].mxu0
        %v3106 = vadd.f32 %v2945, %v3105
        %v3107 = vpop.f32.mrb[0].mxu0
        %v3108 = vpop.f32.mrb[0].mxu0
        %v3109 = vadd.f32 %v2948, %v3108
        %v3110 = vpop.f32.mrb[0].mxu0
        %3111 = vmatprep.mubr.bf16.mxu0 0
        %3112 = vmatmul.mubr.bf16.gmra.mrb[0].mxu0 %v2658
        %v3113 = vpop.f32.mrb[0].mxu0
        %v3114 = vadd.f32 %v2953, %v3113
        %v3115 = vpop.f32.mrb[0].mxu0
        %v3116 = vpop.f32.mrb[0].mxu0
        %v3117 = vadd.f32 %v2956, %v3116
        %v3118 = vpop.f32.mrb[0].mxu0
        %3119 = vmatprep.mubr.bf16.mxu0 0
        %3120 = vmatmul.mubr.bf16.gmra.mrb[0].mxu0 %v2661
        %v3121 = vpop.f32.mrb[0].mxu0
        %v3122 = vadd.f32 %v2961, %v3121
        %v3123 = vpop.f32.mrb[0].mxu0
        %v3124 = vpop.f32.mrb[0].mxu0
        %v3125 = vadd.f32 %v2964, %v3124
        %v3126 = vpop.f32.mrb[0].mxu0
        %3127 = vmatprep.mubr.bf16.mxu0 0
        %3128 = vmatmul.mubr.bf16.gmra.mrb[0].mxu0 %v2664
        %v3129 = vpop.f32.mrb[0].mxu0
        %v3130 = vadd.f32 %v2969, %v3129
        %v3131 = vpop.f32.mrb[0].mxu0
        %v3132 = vpop.f32.mrb[0].mxu0
        %v3133 = vadd.f32 %v2972, %v3132
        %v3134 = vpop.f32.mrb[0].mxu0
        %3135 = vmatprep.mubr.bf16.mxu0 0
        %3136 = vmatmul.mubr.bf16.gmra.mrb[0].mxu0 %v2667
        %v3137 = vpop.f32.mrb[0].mxu0
        %v3138 = vadd.f32 %v2977, %v3137
        %v3139 = vpop.f32.mrb[0].mxu0
        %v3140 = vpop.f32.mrb[0].mxu0
        %v3141 = vadd.f32 %v2980, %v3140
        %v3142 = vpop.f32.mrb[0].mxu0
        %3143 = vmatprep.mubr.bf16.mxu0 0
        %3144 = vmatmul.mubr.bf16.gmra.mrb[0].mxu0 %v2670
        %v3145 = vpop.f32.mrb[0].mxu0
        %v3146 = vadd.f32 %v2985, %v3145
        %v3147 = vpop.f32.mrb[0].mxu0
        %v3148 = vpop.f32.mrb[0].mxu0
        %v3149 = vadd.f32 %v2988, %v3148
        %v3150 = vpop.f32.mrb[0].mxu0
        %3151 = vmatprep.mubr.bf16.mxu0 0
        %3152 = vmatmul.mubr.bf16.gmra.mrb[0].mxu0 %v2673
        %v3153 = vpop.f32.mrb[0].mxu0
        %v3154 = vadd.f32 %v2993, %v3153
        %v3155 = vpop.f32.mrb[0].mxu0
        %v3156 = vpop.f32.mrb[0].mxu0
        %v3157 = vadd.f32 %v2996, %v3156
        %v3158 = vpop.f32.mrb[0].mxu0
        %3159 = vmatprep.mubr.bf16.mxu0 0
        %3160 = vmatmul.mubr.bf16.gmra.mrb[0].mxu0 %v2676
        %v3161 = vpop.f32.mrb[0].mxu0
        %v3162 = vadd.f32 %v3001, %v3161
        %v3163 = vpop.f32.mrb[0].mxu0
        %v3164 = vpop.f32.mrb[0].mxu0
        %v3165 = vadd.f32 %v3004, %v3164
        %v3166 = vpop.f32.mrb[0].mxu0
        %3167 = vmatprep.mubr.bf16.mxu0 0
        %3168 = vmatmul.mubr.bf16.gmra.mrb[0].mxu0 %v2679
        %v3169 = vpop.f32.mrb[0].mxu0
        %v3170 = vadd.f32 %v3009, %v3169
        %v3171 = vpop.f32.mrb[0].mxu0
        %v3172 = vpop.f32.mrb[0].mxu0
        %v3173 = vadd.f32 %v3012, %v3172
        %v3174 = vpop.f32.mrb[0].mxu0
        %3175 = vmatprep.mubr.bf16.mxu0 0
        %3176 = vmatmul.mubr.bf16.gmra.mrb[0].mxu0 %v2682
        %v3177 = vpop.f32.mrb[0].mxu0
        %v3178 = vadd.f32 %v3017, %v3177
        %v3179 = vpop.f32.mrb[0].mxu0
        %v3180 = vpop.f32.mrb[0].mxu0
        %v3181 = vadd.f32 %v3020, %v3180
        %v3182 = vpop.f32.mrb[0].mxu0
        %3183 = vmatprep.mubr.bf16.mxu0 0
        %3184 = vmatmul.mubr.bf16.gmra.mrb[0].mxu0 %v2685
        %v3185 = vpop.f32.mrb[0].mxu0
        %v3186 = vadd.f32 %v3025, %v3185
        %v3187 = vpop.f32.mrb[0].mxu0
        %v3188 = vpop.f32.mrb[0].mxu0
        %v3189 = vadd.f32 %v3028, %v3188
        %v3190 = vpop.f32.mrb[0].mxu0
        %3191 = vmatprep.mubr.bf16.mxu0 0
        %3192 = vmatmul.mubr.bf16.gmra.mrb[0].mxu0 %v2688
        %v3193 = vpop.f32.mrb[0].mxu0
        %v3194 = vadd.f32 %v3033, %v3193
        %v3195 = vpop.f32.mrb[0].mxu0
        %v3196 = vpop.f32.mrb[0].mxu0
        %v3197 = vadd.f32 %v3036, %v3196
        %v3198 = vpop.f32.mrb[0].mxu0
        %3199 = vmatprep.mubr.bf16.mxu0 0
        %3200 = vmatmul.mubr.bf16.gmra.mrb[0].mxu0 %v2691
        %v3201 = vpop.f32.mrb[0].mxu0
        %v3202 = vadd.f32 %v3041, %v3201
        %v3203 = vpop.f32.mrb[0].mxu0
        %v3204 = vpop.f32.mrb[0].mxu0
        %v3205 = vadd.f32 %v3044, %v3204
        %v3206 = vpop.f32.mrb[0].mxu0
        %3207 = vmatprep.mubr.bf16.mxu0 0
        %3208 = vmatmul.mubr.bf16.gmra.mrb[0].mxu0 %v2694
        %v3209 = vpop.f32.mrb[0].mxu0
        %v3210 = vadd.f32 %v3049, %v3209
        %v3211 = vpop.f32.mrb[0].mxu0
        %v3212 = vpop.f32.mrb[0].mxu0
        %v3213 = vadd.f32 %v3052, %v3212
        %v3214 = vpop.f32.mrb[0].mxu0
        %3215 = vmatprep.mubr.bf16.mxu0 0
        %3216 = vmatmul.mubr.bf16.gmra.mrb[0].mxu0 %v2697
        %v3217 = vpop.f32.mrb[0].mxu0
        %v3218 = vadd.f32 %v3057, %v3217
        %v3219 = vpop.f32.mrb[0].mxu0
        %v3220 = vpop.f32.mrb[0].mxu0
        %v3221 = vadd.f32 %v3060, %v3220
        %v3222 = vpop.f32.mrb[0].mxu0
        %3223 = vmatprep.mubr.bf16.mxu0 0
        %3224 = vmatmul.mubr.bf16.gmra.mrb[0].mxu0 %v2700
        %v3225 = vpop.f32.mrb[0].mxu0
        %v3226 = vadd.f32 %v3065, %v3225
        %v3227 = vpop.f32.mrb[0].mxu0
        %v3228 = vpop.f32.mrb[0].mxu0
        %v3229 = vadd.f32 %v3068, %v3228
        %v3230 = vpop.f32.mrb[0].mxu0
        %3231 = vdwg.mxu0
        %v3232 = vadd.f32 %v2126, %v3106
        %v3233 = vadd.f32 %v2129, %v3109
        %v3234 = vadd.f32 %v2134, %v3114
        %v3235 = vadd.f32 %v2137, %v3117
        %v3236 = vadd.f32 %v2142, %v3122
        %v3237 = vadd.f32 %v2145, %v3125
        %v3238 = vadd.f32 %v2150, %v3130
        %v3239 = vadd.f32 %v2153, %v3133
        %v3240 = vadd.f32 %v2158, %v3138
        %v3241 = vadd.f32 %v2161, %v3141
        %v3242 = vadd.f32 %v2166, %v3146
        %v3243 = vadd.f32 %v2169, %v3149
        %v3244 = vadd.f32 %v2174, %v3154
        %v3245 = vadd.f32 %v2177, %v3157
        %v3246 = vadd.f32 %v2182, %v3162
        %v3247 = vadd.f32 %v2185, %v3165
        %v3248 = vadd.f32 %v2190, %v3170
        %v3249 = vadd.f32 %v2193, %v3173
        %v3250 = vadd.f32 %v2198, %v3178
        %v3251 = vadd.f32 %v2201, %v3181
        %v3252 = vadd.f32 %v2206, %v3186
        %v3253 = vadd.f32 %v2209, %v3189
        %v3254 = vadd.f32 %v2214, %v3194
        %v3255 = vadd.f32 %v2217, %v3197
        %v3256 = vadd.f32 %v2222, %v3202
        %v3257 = vadd.f32 %v2225, %v3205
        %v3258 = vadd.f32 %v2230, %v3210
        %v3259 = vadd.f32 %v2233, %v3213
        %v3260 = vadd.f32 %v2238, %v3218
        %v3261 = vadd.f32 %v2241, %v3221
        %v3262 = vadd.f32 %v2246, %v3226
        %v3263 = vadd.f32 %v2249, %v3229
        %v3264 = vld [vmem:[#allocation7] sm:$0x1]
        %v3266 = vlaneseq
        %v3267 = vshrl.u32 %v3266, 7
        %v3268 = vsub.s32 0, %v3267
        %v3269 = vrot.slane %v3264, %v3268
        %v3271 = vmul.f32 %v3232, %v3269
        %v3272 = vmul.f32 %v3233, %v3269
        %v3273 = vmul.f32 %v3234, %v3269
        %v3274 = vmul.f32 %v3235, %v3269
        %v3275 = vmul.f32 %v3236, %v3269
        %v3276 = vmul.f32 %v3237, %v3269
        %v3277 = vmul.f32 %v3238, %v3269
        %v3278 = vmul.f32 %v3239, %v3269
        %v3279 = vmul.f32 %v3240, %v3269
        %v3280 = vmul.f32 %v3241, %v3269
        %v3281 = vmul.f32 %v3242, %v3269
        %v3282 = vmul.f32 %v3243, %v3269
        %v3283 = vmul.f32 %v3244, %v3269
        %v3284 = vmul.f32 %v3245, %v3269
        %v3285 = vmul.f32 %v3246, %v3269
        %v3286 = vmul.f32 %v3247, %v3269
        %v3287 = vmul.f32 %v3248, %v3269
        %v3288 = vmul.f32 %v3249, %v3269
        %v3289 = vmul.f32 %v3250, %v3269
        %v3290 = vmul.f32 %v3251, %v3269
        %v3291 = vmul.f32 %v3252, %v3269
        %v3292 = vmul.f32 %v3253, %v3269
        %v3293 = vmul.f32 %v3254, %v3269
        %v3294 = vmul.f32 %v3255, %v3269
        %v3295 = vmul.f32 %v3256, %v3269
        %v3296 = vmul.f32 %v3257, %v3269
        %v3297 = vmul.f32 %v3258, %v3269
        %v3298 = vmul.f32 %v3259, %v3269
        %v3299 = vmul.f32 %v3260, %v3269
        %v3300 = vmul.f32 %v3261, %v3269
        %v3301 = vmul.f32 %v3262, %v3269
        %v3302 = vmul.f32 %v3263, %v3269
        %v3303 = vld [vmem:[#allocation8] sm:$0x1]
        %v3305 = vlaneseq
        %v3306 = vshrl.u32 %v3305, 7
        %v3307 = vsub.s32 0, %v3306
        %v3308 = vrot.slane %v3303, %v3307
        %v3310 = vadd.f32 %v3271, %v3308
        %v3311 = vadd.f32 %v3272, %v3308
        %v3312 = vadd.f32 %v3273, %v3308
        %v3313 = vadd.f32 %v3274, %v3308
        %v3314 = vadd.f32 %v3275, %v3308
        %v3315 = vadd.f32 %v3276, %v3308
        %v3316 = vadd.f32 %v3277, %v3308
        %v3317 = vadd.f32 %v3278, %v3308
        %v3318 = vadd.f32 %v3279, %v3308
        %v3319 = vadd.f32 %v3280, %v3308
        %v3320 = vadd.f32 %v3281, %v3308
        %v3321 = vadd.f32 %v3282, %v3308
        %v3322 = vadd.f32 %v3283, %v3308
        %v3323 = vadd.f32 %v3284, %v3308
        %v3324 = vadd.f32 %v3285, %v3308
        %v3325 = vadd.f32 %v3286, %v3308
        %v3326 = vadd.f32 %v3287, %v3308
        %v3327 = vadd.f32 %v3288, %v3308
        %v3328 = vadd.f32 %v3289, %v3308
        %v3329 = vadd.f32 %v3290, %v3308
        %v3330 = vadd.f32 %v3291, %v3308
        %v3331 = vadd.f32 %v3292, %v3308
        %v3332 = vadd.f32 %v3293, %v3308
        %v3333 = vadd.f32 %v3294, %v3308
        %v3334 = vadd.f32 %v3295, %v3308
        %v3335 = vadd.f32 %v3296, %v3308
        %v3336 = vadd.f32 %v3297, %v3308
        %v3337 = vadd.f32 %v3298, %v3308
        %v3338 = vadd.f32 %v3299, %v3308
        %v3339 = vadd.f32 %v3300, %v3308
        %v3340 = vadd.f32 %v3301, %v3308
        %v3341 = vadd.f32 %v3302, %v3308
        %v3342 = vmax.f32 %v3310, 0.0
        %v3343 = vmax.f32 %v3311, 0.0
        %v3344 = vmax.f32 %v3312, 0.0
        %v3345 = vmax.f32 %v3313, 0.0
        %v3346 = vmax.f32 %v3314, 0.0
        %v3347 = vmax.f32 %v3315, 0.0
        %v3348 = vmax.f32 %v3316, 0.0
        %v3349 = vmax.f32 %v3317, 0.0
        %v3350 = vmax.f32 %v3318, 0.0
        %v3351 = vmax.f32 %v3319, 0.0
        %v3352 = vmax.f32 %v3320, 0.0
        %v3353 = vmax.f32 %v3321, 0.0
        %v3354 = vmax.f32 %v3322, 0.0
        %v3355 = vmax.f32 %v3323, 0.0
        %v3356 = vmax.f32 %v3324, 0.0
        %v3357 = vmax.f32 %v3325, 0.0
        %v3358 = vmax.f32 %v3326, 0.0
        %v3359 = vmax.f32 %v3327, 0.0
        %v3360 = vmax.f32 %v3328, 0.0
        %v3361 = vmax.f32 %v3329, 0.0
        %v3362 = vmax.f32 %v3330, 0.0
        %v3363 = vmax.f32 %v3331, 0.0
        %v3364 = vmax.f32 %v3332, 0.0
        %v3365 = vmax.f32 %v3333, 0.0
        %v3366 = vmax.f32 %v3334, 0.0
        %v3367 = vmax.f32 %v3335, 0.0
        %v3368 = vmax.f32 %v3336, 0.0
        %v3369 = vmax.f32 %v3337, 0.0
        %v3370 = vmax.f32 %v3338, 0.0
        %v3371 = vmax.f32 %v3339, 0.0
        %v3372 = vmax.f32 %v3340, 0.0
        %v3373 = vmax.f32 %v3341, 0.0
        %v3374 = vpack.c.bf16 %v3343, %v3342
        %v3375 = vpack.c.bf16 %v3345, %v3344
        %v3376 = vpack.c.bf16 %v3347, %v3346
        %v3377 = vpack.c.bf16 %v3349, %v3348
        %v3378 = vpack.c.bf16 %v3351, %v3350
        %v3379 = vpack.c.bf16 %v3353, %v3352
        %v3380 = vpack.c.bf16 %v3355, %v3354
        %v3381 = vpack.c.bf16 %v3357, %v3356
        %v3382 = vpack.c.bf16 %v3359, %v3358
        %v3383 = vpack.c.bf16 %v3361, %v3360
        %v3384 = vpack.c.bf16 %v3363, %v3362
        %v3385 = vpack.c.bf16 %v3365, %v3364
        %v3386 = vpack.c.bf16 %v3367, %v3366
        %v3387 = vpack.c.bf16 %v3369, %v3368
        %v3388 = vpack.c.bf16 %v3371, %v3370
        %v3389 = vpack.c.bf16 %v3373, %v3372
        %v3406 = vunpack.c.l.b16 %v3374
        %v3407 = vunpack.c.h.b16 %v3374
        %v3408 = vunpack.c.l.b16 %v3375
        %v3409 = vunpack.c.h.b16 %v3375
        %v3410 = vunpack.c.l.b16 %v3376
        %v3411 = vunpack.c.h.b16 %v3376
        %v3412 = vunpack.c.l.b16 %v3377
        %v3413 = vunpack.c.h.b16 %v3377
        %v3414 = vunpack.c.l.b16 %v3378
        %v3415 = vunpack.c.h.b16 %v3378
        %v3416 = vunpack.c.l.b16 %v3379
        %v3417 = vunpack.c.h.b16 %v3379
        %v3418 = vunpack.c.l.b16 %v3380
        %v3419 = vunpack.c.h.b16 %v3380
        %v3420 = vunpack.c.l.b16 %v3381
        %v3421 = vunpack.c.h.b16 %v3381
        %v3422 = vunpack.c.l.b16 %v3382
        %v3423 = vunpack.c.h.b16 %v3382
        %v3424 = vunpack.c.l.b16 %v3383
        %v3425 = vunpack.c.h.b16 %v3383
        %v3426 = vunpack.c.l.b16 %v3384
        %v3427 = vunpack.c.h.b16 %v3384
        %v3428 = vunpack.c.l.b16 %v3385
        %v3429 = vunpack.c.h.b16 %v3385
        %v3430 = vunpack.c.l.b16 %v3386
        %v3431 = vunpack.c.h.b16 %v3386
        %v3432 = vunpack.c.l.b16 %v3387
        %v3433 = vunpack.c.h.b16 %v3387
        %v3434 = vunpack.c.l.b16 %v3388
        %v3435 = vunpack.c.h.b16 %v3388
        %v3436 = vunpack.c.l.b16 %v3389
        %v3437 = vunpack.c.h.b16 %v3389
        %v3438 = vpack.c.b16 %v3406, %v3406
        %v3439 = vpack.c.b16 %v3407, %v3407
        %v3440 = vpack.c.b16 %v3408, %v3408
        %v3441 = vpack.c.b16 %v3409, %v3409
        %v3442 = vpack.c.b16 %v3410, %v3410
        %v3443 = vpack.c.b16 %v3411, %v3411
        %v3444 = vpack.c.b16 %v3412, %v3412
        %v3445 = vpack.c.b16 %v3413, %v3413
        %v3446 = vpack.c.b16 %v3414, %v3414
        %v3447 = vpack.c.b16 %v3415, %v3415
        %v3448 = vpack.c.b16 %v3416, %v3416
        %v3449 = vpack.c.b16 %v3417, %v3417
        %v3450 = vpack.c.b16 %v3418, %v3418
        %v3451 = vpack.c.b16 %v3419, %v3419
        %v3452 = vpack.c.b16 %v3420, %v3420
        %v3453 = vpack.c.b16 %v3421, %v3421
        %v3454 = vpack.c.b16 %v3422, %v3422
        %v3455 = vpack.c.b16 %v3423, %v3423
        %v3456 = vpack.c.b16 %v3424, %v3424
        %v3457 = vpack.c.b16 %v3425, %v3425
        %v3458 = vpack.c.b16 %v3426, %v3426
        %v3459 = vpack.c.b16 %v3427, %v3427
        %v3460 = vpack.c.b16 %v3428, %v3428
        %v3461 = vpack.c.b16 %v3429, %v3429
        %v3462 = vpack.c.b16 %v3430, %v3430
        %v3463 = vpack.c.b16 %v3431, %v3431
        %v3464 = vpack.c.b16 %v3432, %v3432
        %v3465 = vpack.c.b16 %v3433, %v3433
        %v3466 = vpack.c.b16 %v3434, %v3434
        %v3467 = vpack.c.b16 %v3435, %v3435
        %v3468 = vpack.c.b16 %v3436, %v3436
        %v3469 = vpack.c.b16 %v3437, %v3437
        %3502 = vst [vmem:[%s290] sm:$0xf] %v3438
        %3503 = vst [vmem:[%s290 + $0x4] sm:$0xf] %v3439
        %3504 = vst [vmem:[%s290 + $0x8] sm:$0xf] %v3440
        %3505 = vst [vmem:[%s290 + $0xc] sm:$0xf] %v3441
        %3506 = vst [vmem:[%s290 + $0x10] sm:$0xf] %v3442
        %3507 = vst [vmem:[%s290 + $0x14] sm:$0xf] %v3443
        %3508 = vst [vmem:[%s290 + $0x18] sm:$0xf] %v3444
        %3509 = vst [vmem:[%s290 + $0x1c] sm:$0xf] %v3445
        %3510 = vst [vmem:[%s290 + $0x20] sm:$0xf] %v3446
        %3511 = vst [vmem:[%s290 + $0x24] sm:$0xf] %v3447
        %3512 = vst [vmem:[%s290 + $0x28] sm:$0xf] %v3448
        %3513 = vst [vmem:[%s290 + $0x2c] sm:$0xf] %v3449
        %3514 = vst [vmem:[%s290 + $0x30] sm:$0xf] %v3450
        %3515 = vst [vmem:[%s290 + $0x34] sm:$0xf] %v3451
        %3516 = vst [vmem:[%s290 + $0x38] sm:$0xf] %v3452
        %3517 = vst [vmem:[%s290 + $0x3c] sm:$0xf] %v3453
        %3518 = vst [vmem:[%s290 + $0x40] sm:$0xf] %v3454
        %3519 = vst [vmem:[%s290 + $0x44] sm:$0xf] %v3455
        %3520 = vst [vmem:[%s290 + $0x48] sm:$0xf] %v3456
        %3521 = vst [vmem:[%s290 + $0x4c] sm:$0xf] %v3457
        %3522 = vst [vmem:[%s290 + $0x50] sm:$0xf] %v3458
        %3523 = vst [vmem:[%s290 + $0x54] sm:$0xf] %v3459
        %3524 = vst [vmem:[%s290 + $0x58] sm:$0xf] %v3460
        %3525 = vst [vmem:[%s290 + $0x5c] sm:$0xf] %v3461
        %3526 = vst [vmem:[%s290 + $0x60] sm:$0xf] %v3462
        %3527 = vst [vmem:[%s290 + $0x64] sm:$0xf] %v3463
        %3528 = vst [vmem:[%s290 + $0x68] sm:$0xf] %v3464
        %3529 = vst [vmem:[%s290 + $0x6c] sm:$0xf] %v3465
        %3530 = vst [vmem:[%s290 + $0x70] sm:$0xf] %v3466
        %3531 = vst [vmem:[%s290 + $0x74] sm:$0xf] %v3467
        %3532 = vst [vmem:[%s290 + $0x78] sm:$0xf] %v3468
        %3533 = vst [vmem:[%s290 + $0x7c] sm:$0xf] %v3469
        %s3534 = sand.u32 %s149, 1
        %s3535 = scalar_lea.sflag [#allocation4], %s3534
        %s3536 = sand.u32 %s149, 1
        %s3537 = smul.addr %s3536, 128
        %s3538 = scalar_lea.vmem [#allocation10], %s3537
        // Predicated region
        $region53: #{bottleneck_forward.4} parent=35 // pred_check
          %p3539 = pneg %p159
        $region54: #{bottleneck_forward.4} parent=35 // pred_check_branch
          %3541 = sbr.rel (%p3539) target = $region56
        $region55: #{bottleneck_forward.4} parent=35 // pred_region
          %s3543 = ssub.s32 2048, 2048
          %3544 = vsyncadd %s3535, %s3543
          %s3545 = smul.addr %s27, 32
          %s3546 = sadd.s32 %s28, %s3545
          %s3547 = smul.addr %s3546, 64
          %s3548 = scalar_lea.hbm %s4, %s3547
          %s3549 = sshll.u32 %s3538, 4
          %s3550 = int_to_ptr.vmem [resolvable:$true] %s3549
          %3555 = dma.vmem_to_hbm [thread:$0]  %s3550, 2048, %s3548, %s3535, 64, 64, 4
        $region56: #{bottleneck_forward.4} parent=35 // pred_fallthru
          _
      $region36: #{bottleneck_forward.4} parent=5 // pred_fallthru
        _
      %p3556 = scmp.le.s32.totalorder 2, %s18
      // Predicated region
      $region57: #{bottleneck_forward.4} parent=5 // pred_check
        %p3557 = pneg %p3556
      $region58: #{bottleneck_forward.4} parent=5 // pred_check_branch
        %3559 = sbr.rel (%p3557) target = $region60
      $region59: #{bottleneck_forward.4} parent=5 // pred_region
        %s3560 = ssub.s32 %s18, 2
        // Predicated region
        $region61: #{bottleneck_forward.4} parent=59 // pred_check
          %p3561 = pneg %p165
        $region62: #{bottleneck_forward.4} parent=59 // pred_check_branch
          %3563 = sbr.rel (%p3561) target = $region64
        $region63: #{bottleneck_forward.4} parent=59 // pred_region
          %s3564 = sand.u32 %s150, 1
          %s3565 = scalar_lea.sflag [#allocation4], %s3564
          %s3566 = sand.u32 %s150, 1
          %s3567 = smul.addr %s3566, 128
          %s3568 = scalar_lea.vmem [#allocation10], %s3567
          %3569 = dma.done %s3565, 2048
        $region64: #{bottleneck_forward.4} parent=59 // pred_fallthru
          _
      $region60: #{bottleneck_forward.4} parent=5 // pred_fallthru
        _
    $region6: #{bottleneck_forward.4} parent=1 // loop_footer
      %s22 = sadd.s32 1, %s18
    $region7: #{bottleneck_forward.4} parent=1 // loop_footer_branch
      %17 = sbr.rel target = $region3
    $region8: #{bottleneck_forward.4} parent=1 // loop_exit
      _
    %3570 = vsyncpa [#allocation3], 1
    %s3571 = scalar_lea.sflag [#allocation3], 1
    %3572 = vsyncpa %s3571, 1
    %3573 = vsyncpa [#allocation6], 1
    %3574 = vsyncpa [#allocation9], 1
    %3575 = vsyncpa [#allocation4], 1
    %s3576 = scalar_lea.sflag [#allocation4], 1
    %3577 = vsyncpa %s3576, 1

</llo_original>
